<compile_context>
chip_gen: v7x
topology: tpu7x:2x2x1
jax: 0.10.0
libtpu: 0.0.40
codegen_flags: <defaults>
</compile_context>

<pallas_src>
import functools

import jax
import jax.numpy as jnp
from jax.experimental import pallas as pl
from jax.experimental.pallas import tpu as pltpu


# ------------------------------- kernel ------------------------------------ #

def _model_kernel(x_ref, pro_w_ref, pro_b_ref,
                  ln1_g_ref, ln1_b_ref, qkv_w_ref, ao_w_ref, ao_b_ref,
                  ln2_g_ref, ln2_b_ref, ff1_w_ref, ff1_b_ref,
                  ff2_w_ref, ff2_b_ref, out_w_ref, out_b_ref,
                  o_ref, *, depth, heads, dim_head, scale):
    """Whole MyModel forward for ONE batch element (grid iterates over batch)."""
    f32 = jnp.float32
    inner = heads * dim_head

    def mm(a, b):                       # a @ b, f32 accumulation (MXU)
        return jnp.dot(a, b, preferred_element_type=f32)

    def mm_t(a, b):                     # a @ b.T without materializing b.T
        return jax.lax.dot_general(a, b, (((1,), (1,)), ((), ())),
                                   preferred_element_type=f32)

    def layernorm(v, g, b):             # f32 VPU math; eps matches nn.LayerNorm
        mean = jnp.mean(v, axis=-1, keepdims=True)
        var = jnp.mean(jnp.square(v - mean), axis=-1, keepdims=True)
        return (v - mean) * jax.lax.rsqrt(var + 1e-5) * g + b

    def erf(z):
        # Abramowitz & Stegun 7.1.26 polynomial (max abs error ~1.5e-7).
        # Uses only abs/div/exp/where -> guaranteed Mosaic lowering; exp goes to EUP.
        t = 1.0 / (1.0 + 0.3275911 * jnp.abs(z))
        poly = ((((1.061405429 * t - 1.453152027) * t + 1.421413741) * t
                 - 0.284496736) * t + 0.254829592) * t
        e = 1.0 - poly * jnp.exp(-z * z)
        return jnp.where(z >= 0.0, e, -e)

    # ---- pro_linear ---------------------------------------------------------
    x = x_ref[0].astype(f32)                            # (N, Fin)
    h = mm(x, pro_w_ref[...]) + pro_b_ref[...]          # (N, dim)

    # ---- transformer layers (static unroll over depth) ----------------------
    for d in range(depth):
        # PreNorm + multi-head self-attention + out-projection + residual
        xn = layernorm(h, ln1_g_ref[d:d + 1, :], ln1_b_ref[d:d + 1, :])
        qkv = mm(xn, qkv_w_ref[d])                      # (N, 3*inner), bias=False
        ow = ao_w_ref[d]                                # (inner, dim)

        acc = None
        for hh in range(heads):                         # heads live in the lane dim
            lo = hh * dim_head
            qh = qkv[:, lo:lo + dim_head]
            kh = qkv[:, inner + lo:inner + lo + dim_head]
            vh = qkv[:, 2 * inner + lo:2 * inner + lo + dim_head]
            s = mm_t(qh, kh) * scale                    # (N, N)
            s = s - jnp.max(s, axis=-1, keepdims=True)  # stable softmax
            p = jnp.exp(s)
            p = p / jnp.sum(p, axis=-1, keepdims=True)
            oh = mm(p, vh)                              # (N, dim_head)
            # fold this head's slice of the output projection directly:
            #   concat_h(o_h) @ W_out == sum_h o_h @ W_out[h*Dh:(h+1)*Dh]
            contrib = mm(oh, ow[lo:lo + dim_head, :])   # (N, dim)
            acc = contrib if acc is None else acc + contrib
        h = h + acc + ao_b_ref[d:d + 1, :]              # fused bias + residual

        # PreNorm + FeedForward (Linear -> GELU -> Linear) + residual
        xn2 = layernorm(h, ln2_g_ref[d:d + 1, :], ln2_b_ref[d:d + 1, :])
        f = mm(xn2, ff1_w_ref[d]) + ff1_b_ref[d:d + 1, :]
        f = 0.5 * f * (1.0 + erf(f * 0.7071067811865475))      # exact GELU
        h = h + mm(f, ff2_w_ref[d]) + ff2_b_ref[d:d + 1, :]     # fused residual

    # ---- mean over sequence + out_linear ------------------------------------
    hm = jnp.mean(h, axis=0, keepdims=True)             # (1, dim)
    o = mm(hm, out_w_ref[...]) + out_b_ref[...]         # (1, 2)
    o_ref[0] = o.astype(o_ref.dtype)


# ------------------------------- wrapper ----------------------------------- #

def mymodel_forward(x, params, *, heads, dim_head):
    B, N, Fin = x.shape
    dim = params["pro_w"].shape[1]
    mlp_dim = params["ff1_w"].shape[-1]
    depth = params["qkv_w"].shape[0]
    inner = heads * dim_head
    scale = dim_head ** -0.5

    kern = functools.partial(_model_kernel, depth=depth, heads=heads,
                             dim_head=dim_head, scale=scale)

    def resident(shape):   # full array, same block every grid step -> stays in VMEM
        return pl.BlockSpec(shape, lambda *args, _n=len(shape): (0,) * _n)

    out = pl.pallas_call(
        kern,
        out_shape=jax.ShapeDtypeStruct((B, 1, 2), jnp.float32),
        grid=(B,),
        in_specs=[
            pl.BlockSpec((1, N, Fin), lambda b: (b, 0, 0)),    # per-batch input slab
            resident((Fin, dim)), resident((1, dim)),          # pro_linear
            resident((depth, dim)), resident((depth, dim)),    # ln1 g/b
            resident((depth, dim, 3 * inner)),                 # qkv (no bias)
            resident((depth, inner, dim)), resident((depth, dim)),  # attn out proj
            resident((depth, dim)), resident((depth, dim)),    # ln2 g/b
            resident((depth, dim, mlp_dim)), resident((depth, mlp_dim)),  # ff1
            resident((depth, mlp_dim, dim)), resident((depth, dim)),      # ff2
            resident((dim, 2)), resident((1, 2)),              # out_linear
        ],
        out_specs=pl.BlockSpec((1, 1, 2), lambda b: (b, 0, 0)),
        compiler_params=pltpu.CompilerParams(
            # batch axis shards across the 2 TensorCores on v7x
            dimension_semantics=("parallel",)),
    )(x,
      params["pro_w"], params["pro_b"].reshape(1, dim),
      params["ln1_g"], params["ln1_b"], params["qkv_w"],
      params["attn_out_w"], params["attn_out_b"],
      params["ln2_g"], params["ln2_b"],
      params["ff1_w"], params["ff1_b"], params["ff2_w"], params["ff2_b"],
      params["out_w"], params["out_b"].reshape(1, 2))
    return out.reshape(B, 2)


# ----------------------------- parameters ---------------------------------- #

def init_params(key, input_dim, dim, mlp_dim, depth, heads, dim_head):
    inner = heads * dim_head
    ks = jax.random.split(key, 6)

    def dense(k, shape):
        return jax.random.normal(k, shape, jnp.float32) * 0.02

    return {
        "pro_w": dense(ks[0], (input_dim, dim)),
        "pro_b": jnp.zeros((dim,), jnp.float32),
        "ln1_g": jnp.ones((depth, dim), jnp.float32),
        "ln1_b": jnp.zeros((depth, dim), jnp.float32),
        "qkv_w": dense(ks[1], (depth, dim, 3 * inner)),        # bias=False
        "attn_out_w": dense(ks[2], (depth, inner, dim)),
        "attn_out_b": jnp.zeros((depth, dim), jnp.float32),
        "ln2_g": jnp.ones((depth, dim), jnp.float32),
        "ln2_b": jnp.zeros((depth, dim), jnp.float32),
        "ff1_w": dense(ks[3], (depth, dim, mlp_dim)),
        "ff1_b": jnp.zeros((depth, mlp_dim), jnp.float32),
        "ff2_w": dense(ks[4], (depth, mlp_dim, dim)),
        "ff2_b": jnp.zeros((depth, dim), jnp.float32),
        "out_w": dense(ks[5], (dim, 2)),
        "out_b": jnp.zeros((2,), jnp.float32),
    }


# --------------------------------- main ------------------------------------ #

if __name__ == "__main__":
    # small config consistent with the module's constructor
    input_dim, dim, mlp_dim, depth = 10, 32, 64, 2
    heads, dim_head = 4, 16
    B, N = 2, 8

    key = jax.random.PRNGKey(0)
    pkey, xkey = jax.random.split(key)
    params = init_params(pkey, input_dim, dim, mlp_dim, depth, heads, dim_head)
    x = jax.random.normal(xkey, (B, N, input_dim), jnp.float32)

    fwd = jax.jit(functools.partial(mymodel_forward, heads=heads, dim_head=dim_head))
    out = fwd(x, params)
    jax.block_until_ready(out)
    assert out.shape == (B, 2) and out.dtype == jnp.float32
    print("KERNEL_OK")
</pallas_src>

<mosaic_0001>
module attributes {stable_mosaic.version = 11 : i64} {
  func.func @_model_kernel(%arg0: i32, %arg1: memref<1x8x10xf32, #tpu.memory_space<vmem>>, %arg2: memref<10x32xf32, #tpu.memory_space<vmem>>, %arg3: memref<1x32xf32, #tpu.memory_space<vmem>>, %arg4: memref<2x32xf32, #tpu.memory_space<vmem>>, %arg5: memref<2x32xf32, #tpu.memory_space<vmem>>, %arg6: memref<2x32x192xf32, #tpu.memory_space<vmem>>, %arg7: memref<2x64x32xf32, #tpu.memory_space<vmem>>, %arg8: memref<2x32xf32, #tpu.memory_space<vmem>>, %arg9: memref<2x32xf32, #tpu.memory_space<vmem>>, %arg10: memref<2x32xf32, #tpu.memory_space<vmem>>, %arg11: memref<2x32x64xf32, #tpu.memory_space<vmem>>, %arg12: memref<2x64xf32, #tpu.memory_space<vmem>>, %arg13: memref<2x64x32xf32, #tpu.memory_space<vmem>>, %arg14: memref<2x32xf32, #tpu.memory_space<vmem>>, %arg15: memref<32x2xf32, #tpu.memory_space<vmem>>, %arg16: memref<1x2xf32, #tpu.memory_space<vmem>>, %arg17: memref<1x1x2xf32, #tpu.memory_space<vmem>>) attributes {dimension_semantics = [#tpu.dimension_semantics<parallel>], iteration_bounds = array<i64: 2>, scalar_prefetch = 0 : i64, scratch_operands = 0 : i64, tpu.core_type = #tpu.core_type<tc>, window_params = [{transform_indices = @transform_0, window_bounds = array<i64: 1, 8, 10>}, {pipeline_mode = #tpu.pipeline_mode<synchronous>, transform_indices = @transform_1, window_bounds = array<i64: 10, 32>}, {pipeline_mode = #tpu.pipeline_mode<synchronous>, transform_indices = @transform_2, window_bounds = array<i64: 1, 32>}, {pipeline_mode = #tpu.pipeline_mode<synchronous>, transform_indices = @transform_3, window_bounds = array<i64: 2, 32>}, {pipeline_mode = #tpu.pipeline_mode<synchronous>, transform_indices = @transform_4, window_bounds = array<i64: 2, 32>}, {pipeline_mode = #tpu.pipeline_mode<synchronous>, transform_indices = @transform_5, window_bounds = array<i64: 2, 32, 192>}, {pipeline_mode = #tpu.pipeline_mode<synchronous>, transform_indices = @transform_6, window_bounds = array<i64: 2, 64, 32>}, {pipeline_mode = #tpu.pipeline_mode<synchronous>, transform_indices = @transform_7, window_bounds = array<i64: 2, 32>}, {pipeline_mode = #tpu.pipeline_mode<synchronous>, transform_indices = @transform_8, window_bounds = array<i64: 2, 32>}, {pipeline_mode = #tpu.pipeline_mode<synchronous>, transform_indices = @transform_9, window_bounds = array<i64: 2, 32>}, {pipeline_mode = #tpu.pipeline_mode<synchronous>, transform_indices = @transform_10, window_bounds = array<i64: 2, 32, 64>}, {pipeline_mode = #tpu.pipeline_mode<synchronous>, transform_indices = @transform_11, window_bounds = array<i64: 2, 64>}, {pipeline_mode = #tpu.pipeline_mode<synchronous>, transform_indices = @transform_12, window_bounds = array<i64: 2, 64, 32>}, {pipeline_mode = #tpu.pipeline_mode<synchronous>, transform_indices = @transform_13, window_bounds = array<i64: 2, 32>}, {pipeline_mode = #tpu.pipeline_mode<synchronous>, transform_indices = @transform_14, window_bounds = array<i64: 32, 2>}, {pipeline_mode = #tpu.pipeline_mode<synchronous>, transform_indices = @transform_15, window_bounds = array<i64: 1, 2>}, {transform_indices = @transform_16, window_bounds = array<i64: 1, 1, 2>}]} {
    %c0 = arith.constant 0 : index
    %c0_0 = arith.constant 0 : index
    %c0_1 = arith.constant 0 : index
    %0 = vector.load %arg1[%c0, %c0_0, %c0_1] : memref<1x8x10xf32, #tpu.memory_space<vmem>>, vector<1x8x10xf32>
    %1 = vector.shape_cast %0 : vector<1x8x10xf32> to vector<8x10xf32>
    %c0_2 = arith.constant 0 : index
    %c0_3 = arith.constant 0 : index
    %2 = vector.load %arg2[%c0_2, %c0_3] : memref<10x32xf32, #tpu.memory_space<vmem>>, vector<10x32xf32>
    %cst = arith.constant dense<0.000000e+00> : vector<8x32xf32>
    %3 = tpu.matmul %1, %2, %cst {dimension_numbers = #tpu.dot_dimension_numbers<[1], [0], [0], [1], [0, 0, 1, 1], [], []>} : vector<8x10xf32>, vector<10x32xf32>, vector<8x32xf32> -> vector<8x32xf32>
    %c0_4 = arith.constant 0 : index
    %c0_5 = arith.constant 0 : index
    %4 = vector.load %arg3[%c0_4, %c0_5] : memref<1x32xf32, #tpu.memory_space<vmem>>, vector<1x32xf32>
    %5 = vector.broadcast %4 : vector<1x32xf32> to vector<8x32xf32>
    %6 = arith.addf %3, %5 : vector<8x32xf32>
    %c0_6 = arith.constant 0 : index
    %c0_7 = arith.constant 0 : index
    %7 = vector.load %arg4[%c0_6, %c0_7] : memref<2x32xf32, #tpu.memory_space<vmem>>, vector<1x32xf32>
    %c0_8 = arith.constant 0 : index
    %c0_9 = arith.constant 0 : index
    %8 = vector.load %arg5[%c0_8, %c0_9] : memref<2x32xf32, #tpu.memory_space<vmem>>, vector<1x32xf32>
    %cst_10 = arith.constant dense<0.000000e+00> : vector<8xf32>
    %9 = vector.multi_reduction <add>, %6, %cst_10 [1] : vector<8x32xf32> to vector<8xf32>
    %10 = vector.shape_cast %9 : vector<8xf32> to vector<8x1xf32>
    %cst_11 = arith.constant 3.200000e+01 : f32
    %11 = vector.broadcast %cst_11 : f32 to vector<8x1xf32>
    %12 = arith.divf %10, %11 : vector<8x1xf32>
    %13 = vector.broadcast %12 : vector<8x1xf32> to vector<8x32xf32>
    %14 = arith.subf %6, %13 : vector<8x32xf32>
    %15 = arith.mulf %14, %14 : vector<8x32xf32>
    %cst_12 = arith.constant dense<0.000000e+00> : vector<8xf32>
    %16 = vector.multi_reduction <add>, %15, %cst_12 [1] : vector<8x32xf32> to vector<8xf32>
    %17 = vector.shape_cast %16 : vector<8xf32> to vector<8x1xf32>
    %cst_13 = arith.constant 3.200000e+01 : f32
    %18 = vector.broadcast %cst_13 : f32 to vector<8x1xf32>
    %19 = arith.divf %17, %18 : vector<8x1xf32>
    %20 = vector.broadcast %12 : vector<8x1xf32> to vector<8x32xf32>
    %21 = arith.subf %6, %20 : vector<8x32xf32>
    %cst_14 = arith.constant 9.99999974E-6 : f32
    %22 = vector.broadcast %cst_14 : f32 to vector<8x1xf32>
    %23 = arith.addf %19, %22 : vector<8x1xf32>
    %24 = math.rsqrt %23 : vector<8x1xf32>
    %25 = vector.broadcast %24 : vector<8x1xf32> to vector<8x32xf32>
    %26 = arith.mulf %21, %25 : vector<8x32xf32>
    %27 = vector.broadcast %7 : vector<1x32xf32> to vector<8x32xf32>
    %28 = arith.mulf %26, %27 : vector<8x32xf32>
    %29 = vector.broadcast %8 : vector<1x32xf32> to vector<8x32xf32>
    %30 = arith.addf %28, %29 : vector<8x32xf32>
    %c0_15 = arith.constant 0 : index
    %c0_16 = arith.constant 0 : index
    %c0_17 = arith.constant 0 : index
    %31 = vector.load %arg6[%c0_15, %c0_16, %c0_17] : memref<2x32x192xf32, #tpu.memory_space<vmem>>, vector<1x32x192xf32>
    %32 = vector.shape_cast %31 : vector<1x32x192xf32> to vector<32x192xf32>
    %cst_18 = arith.constant dense<0.000000e+00> : vector<8x192xf32>
    %33 = tpu.matmul %30, %32, %cst_18 {dimension_numbers = #tpu.dot_dimension_numbers<[1], [0], [0], [1], [0, 0, 1, 1], [], []>} : vector<8x32xf32>, vector<32x192xf32>, vector<8x192xf32> -> vector<8x192xf32>
    %c0_19 = arith.constant 0 : index
    %c0_20 = arith.constant 0 : index
    %c0_21 = arith.constant 0 : index
    %34 = vector.load %arg7[%c0_19, %c0_20, %c0_21] : memref<2x64x32xf32, #tpu.memory_space<vmem>>, vector<1x64x32xf32>
    %35 = vector.shape_cast %34 : vector<1x64x32xf32> to vector<64x32xf32>
    %36 = vector.extract_strided_slice %33 {offsets = [0, 0], sizes = [8, 16], strides = [1, 1]} : vector<8x192xf32> to vector<8x16xf32>
    %37 = vector.extract_strided_slice %33 {offsets = [0, 64], sizes = [8, 16], strides = [1, 1]} : vector<8x192xf32> to vector<8x16xf32>
    %38 = vector.extract_strided_slice %33 {offsets = [0, 128], sizes = [8, 16], strides = [1, 1]} : vector<8x192xf32> to vector<8x16xf32>
    %cst_22 = arith.constant dense<0.000000e+00> : vector<8x8xf32>
    %39 = tpu.matmul %36, %37, %cst_22 {dimension_numbers = #tpu.dot_dimension_numbers<[1], [1], [0], [0], [0, 0, 1, 0], [], []>} : vector<8x16xf32>, vector<8x16xf32>, vector<8x8xf32> -> vector<8x8xf32>
    %cst_23 = arith.constant 2.500000e-01 : f32
    %40 = vector.broadcast %cst_23 : f32 to vector<8x8xf32>
    %41 = arith.mulf %39, %40 : vector<8x8xf32>
    %cst_24 = arith.constant dense<0xFF800000> : vector<8xf32>
    %42 = vector.multi_reduction <maximumf>, %41, %cst_24 [1] : vector<8x8xf32> to vector<8xf32>
    %43 = vector.shape_cast %42 : vector<8xf32> to vector<8x1xf32>
    %44 = vector.broadcast %43 : vector<8x1xf32> to vector<8x8xf32>
    %45 = arith.subf %41, %44 : vector<8x8xf32>
    %46 = math.exp %45 : vector<8x8xf32>
    %cst_25 = arith.constant dense<0.000000e+00> : vector<8xf32>
    %47 = vector.multi_reduction <add>, %46, %cst_25 [1] : vector<8x8xf32> to vector<8xf32>
    %48 = vector.shape_cast %47 : vector<8xf32> to vector<8x1xf32>
    %49 = vector.broadcast %48 : vector<8x1xf32> to vector<8x8xf32>
    %50 = arith.divf %46, %49 : vector<8x8xf32>
    %cst_26 = arith.constant dense<0.000000e+00> : vector<8x16xf32>
    %51 = tpu.matmul %50, %38, %cst_26 {dimension_numbers = #tpu.dot_dimension_numbers<[1], [0], [0], [1], [0, 0, 1, 1], [], []>} : vector<8x8xf32>, vector<8x16xf32>, vector<8x16xf32> -> vector<8x16xf32>
    %52 = vector.extract_strided_slice %35 {offsets = [0, 0], sizes = [16, 32], strides = [1, 1]} : vector<64x32xf32> to vector<16x32xf32>
    %cst_27 = arith.constant dense<0.000000e+00> : vector<8x32xf32>
    %53 = tpu.matmul %51, %52, %cst_27 {dimension_numbers = #tpu.dot_dimension_numbers<[1], [0], [0], [1], [0, 0, 1, 1], [], []>} : vector<8x16xf32>, vector<16x32xf32>, vector<8x32xf32> -> vector<8x32xf32>
    %54 = vector.extract_strided_slice %33 {offsets = [0, 16], sizes = [8, 16], strides = [1, 1]} : vector<8x192xf32> to vector<8x16xf32>
    %55 = vector.extract_strided_slice %33 {offsets = [0, 80], sizes = [8, 16], strides = [1, 1]} : vector<8x192xf32> to vector<8x16xf32>
    %56 = vector.extract_strided_slice %33 {offsets = [0, 144], sizes = [8, 16], strides = [1, 1]} : vector<8x192xf32> to vector<8x16xf32>
    %cst_28 = arith.constant dense<0.000000e+00> : vector<8x8xf32>
    %57 = tpu.matmul %54, %55, %cst_28 {dimension_numbers = #tpu.dot_dimension_numbers<[1], [1], [0], [0], [0, 0, 1, 0], [], []>} : vector<8x16xf32>, vector<8x16xf32>, vector<8x8xf32> -> vector<8x8xf32>
    %cst_29 = arith.constant 2.500000e-01 : f32
    %58 = vector.broadcast %cst_29 : f32 to vector<8x8xf32>
    %59 = arith.mulf %57, %58 : vector<8x8xf32>
    %cst_30 = arith.constant dense<0xFF800000> : vector<8xf32>
    %60 = vector.multi_reduction <maximumf>, %59, %cst_30 [1] : vector<8x8xf32> to vector<8xf32>
    %61 = vector.shape_cast %60 : vector<8xf32> to vector<8x1xf32>
    %62 = vector.broadcast %61 : vector<8x1xf32> to vector<8x8xf32>
    %63 = arith.subf %59, %62 : vector<8x8xf32>
    %64 = math.exp %63 : vector<8x8xf32>
    %cst_31 = arith.constant dense<0.000000e+00> : vector<8xf32>
    %65 = vector.multi_reduction <add>, %64, %cst_31 [1] : vector<8x8xf32> to vector<8xf32>
    %66 = vector.shape_cast %65 : vector<8xf32> to vector<8x1xf32>
    %67 = vector.broadcast %66 : vector<8x1xf32> to vector<8x8xf32>
    %68 = arith.divf %64, %67 : vector<8x8xf32>
    %cst_32 = arith.constant dense<0.000000e+00> : vector<8x16xf32>
    %69 = tpu.matmul %68, %56, %cst_32 {dimension_numbers = #tpu.dot_dimension_numbers<[1], [0], [0], [1], [0, 0, 1, 1], [], []>} : vector<8x8xf32>, vector<8x16xf32>, vector<8x16xf32> -> vector<8x16xf32>
    %70 = vector.extract_strided_slice %35 {offsets = [16, 0], sizes = [16, 32], strides = [1, 1]} : vector<64x32xf32> to vector<16x32xf32>
    %cst_33 = arith.constant dense<0.000000e+00> : vector<8x32xf32>
    %71 = tpu.matmul %69, %70, %cst_33 {dimension_numbers = #tpu.dot_dimension_numbers<[1], [0], [0], [1], [0, 0, 1, 1], [], []>} : vector<8x16xf32>, vector<16x32xf32>, vector<8x32xf32> -> vector<8x32xf32>
    %72 = arith.addf %53, %71 : vector<8x32xf32>
    %73 = vector.extract_strided_slice %33 {offsets = [0, 32], sizes = [8, 16], strides = [1, 1]} : vector<8x192xf32> to vector<8x16xf32>
    %74 = vector.extract_strided_slice %33 {offsets = [0, 96], sizes = [8, 16], strides = [1, 1]} : vector<8x192xf32> to vector<8x16xf32>
    %75 = vector.extract_strided_slice %33 {offsets = [0, 160], sizes = [8, 16], strides = [1, 1]} : vector<8x192xf32> to vector<8x16xf32>
    %cst_34 = arith.constant dense<0.000000e+00> : vector<8x8xf32>
    %76 = tpu.matmul %73, %74, %cst_34 {dimension_numbers = #tpu.dot_dimension_numbers<[1], [1], [0], [0], [0, 0, 1, 0], [], []>} : vector<8x16xf32>, vector<8x16xf32>, vector<8x8xf32> -> vector<8x8xf32>
    %cst_35 = arith.constant 2.500000e-01 : f32
    %77 = vector.broadcast %cst_35 : f32 to vector<8x8xf32>
    %78 = arith.mulf %76, %77 : vector<8x8xf32>
    %cst_36 = arith.constant dense<0xFF800000> : vector<8xf32>
    %79 = vector.multi_reduction <maximumf>, %78, %cst_36 [1] : vector<8x8xf32> to vector<8xf32>
    %80 = vector.shape_cast %79 : vector<8xf32> to vector<8x1xf32>
    %81 = vector.broadcast %80 : vector<8x1xf32> to vector<8x8xf32>
    %82 = arith.subf %78, %81 : vector<8x8xf32>
    %83 = math.exp %82 : vector<8x8xf32>
    %cst_37 = arith.constant dense<0.000000e+00> : vector<8xf32>
    %84 = vector.multi_reduction <add>, %83, %cst_37 [1] : vector<8x8xf32> to vector<8xf32>
    %85 = vector.shape_cast %84 : vector<8xf32> to vector<8x1xf32>
    %86 = vector.broadcast %85 : vector<8x1xf32> to vector<8x8xf32>
    %87 = arith.divf %83, %86 : vector<8x8xf32>
    %cst_38 = arith.constant dense<0.000000e+00> : vector<8x16xf32>
    %88 = tpu.matmul %87, %75, %cst_38 {dimension_numbers = #tpu.dot_dimension_numbers<[1], [0], [0], [1], [0, 0, 1, 1], [], []>} : vector<8x8xf32>, vector<8x16xf32>, vector<8x16xf32> -> vector<8x16xf32>
    %89 = vector.extract_strided_slice %35 {offsets = [32, 0], sizes = [16, 32], strides = [1, 1]} : vector<64x32xf32> to vector<16x32xf32>
    %cst_39 = arith.constant dense<0.000000e+00> : vector<8x32xf32>
    %90 = tpu.matmul %88, %89, %cst_39 {dimension_numbers = #tpu.dot_dimension_numbers<[1], [0], [0], [1], [0, 0, 1, 1], [], []>} : vector<8x16xf32>, vector<16x32xf32>, vector<8x32xf32> -> vector<8x32xf32>
    %91 = arith.addf %72, %90 : vector<8x32xf32>
    %92 = vector.extract_strided_slice %33 {offsets = [0, 48], sizes = [8, 16], strides = [1, 1]} : vector<8x192xf32> to vector<8x16xf32>
    %93 = vector.extract_strided_slice %33 {offsets = [0, 112], sizes = [8, 16], strides = [1, 1]} : vector<8x192xf32> to vector<8x16xf32>
    %94 = vector.extract_strided_slice %33 {offsets = [0, 176], sizes = [8, 16], strides = [1, 1]} : vector<8x192xf32> to vector<8x16xf32>
    %cst_40 = arith.constant dense<0.000000e+00> : vector<8x8xf32>
    %95 = tpu.matmul %92, %93, %cst_40 {dimension_numbers = #tpu.dot_dimension_numbers<[1], [1], [0], [0], [0, 0, 1, 0], [], []>} : vector<8x16xf32>, vector<8x16xf32>, vector<8x8xf32> -> vector<8x8xf32>
    %cst_41 = arith.constant 2.500000e-01 : f32
    %96 = vector.broadcast %cst_41 : f32 to vector<8x8xf32>
    %97 = arith.mulf %95, %96 : vector<8x8xf32>
    %cst_42 = arith.constant dense<0xFF800000> : vector<8xf32>
    %98 = vector.multi_reduction <maximumf>, %97, %cst_42 [1] : vector<8x8xf32> to vector<8xf32>
    %99 = vector.shape_cast %98 : vector<8xf32> to vector<8x1xf32>
    %100 = vector.broadcast %99 : vector<8x1xf32> to vector<8x8xf32>
    %101 = arith.subf %97, %100 : vector<8x8xf32>
    %102 = math.exp %101 : vector<8x8xf32>
    %cst_43 = arith.constant dense<0.000000e+00> : vector<8xf32>
    %103 = vector.multi_reduction <add>, %102, %cst_43 [1] : vector<8x8xf32> to vector<8xf32>
    %104 = vector.shape_cast %103 : vector<8xf32> to vector<8x1xf32>
    %105 = vector.broadcast %104 : vector<8x1xf32> to vector<8x8xf32>
    %106 = arith.divf %102, %105 : vector<8x8xf32>
    %cst_44 = arith.constant dense<0.000000e+00> : vector<8x16xf32>
    %107 = tpu.matmul %106, %94, %cst_44 {dimension_numbers = #tpu.dot_dimension_numbers<[1], [0], [0], [1], [0, 0, 1, 1], [], []>} : vector<8x8xf32>, vector<8x16xf32>, vector<8x16xf32> -> vector<8x16xf32>
    %108 = vector.extract_strided_slice %35 {offsets = [48, 0], sizes = [16, 32], strides = [1, 1]} : vector<64x32xf32> to vector<16x32xf32>
    %cst_45 = arith.constant dense<0.000000e+00> : vector<8x32xf32>
    %109 = tpu.matmul %107, %108, %cst_45 {dimension_numbers = #tpu.dot_dimension_numbers<[1], [0], [0], [1], [0, 0, 1, 1], [], []>} : vector<8x16xf32>, vector<16x32xf32>, vector<8x32xf32> -> vector<8x32xf32>
    %110 = arith.addf %91, %109 : vector<8x32xf32>
    %111 = arith.addf %6, %110 : vector<8x32xf32>
    %c0_46 = arith.constant 0 : index
    %c0_47 = arith.constant 0 : index
    %112 = vector.load %arg8[%c0_46, %c0_47] : memref<2x32xf32, #tpu.memory_space<vmem>>, vector<1x32xf32>
    %113 = vector.broadcast %112 : vector<1x32xf32> to vector<8x32xf32>
    %114 = arith.addf %111, %113 : vector<8x32xf32>
    %c0_48 = arith.constant 0 : index
    %c0_49 = arith.constant 0 : index
    %115 = vector.load %arg9[%c0_48, %c0_49] : memref<2x32xf32, #tpu.memory_space<vmem>>, vector<1x32xf32>
    %c0_50 = arith.constant 0 : index
    %c0_51 = arith.constant 0 : index
    %116 = vector.load %arg10[%c0_50, %c0_51] : memref<2x32xf32, #tpu.memory_space<vmem>>, vector<1x32xf32>
    %cst_52 = arith.constant dense<0.000000e+00> : vector<8xf32>
    %117 = vector.multi_reduction <add>, %114, %cst_52 [1] : vector<8x32xf32> to vector<8xf32>
    %118 = vector.shape_cast %117 : vector<8xf32> to vector<8x1xf32>
    %cst_53 = arith.constant 3.200000e+01 : f32
    %119 = vector.broadcast %cst_53 : f32 to vector<8x1xf32>
    %120 = arith.divf %118, %119 : vector<8x1xf32>
    %121 = vector.broadcast %120 : vector<8x1xf32> to vector<8x32xf32>
    %122 = arith.subf %114, %121 : vector<8x32xf32>
    %123 = arith.mulf %122, %122 : vector<8x32xf32>
    %cst_54 = arith.constant dense<0.000000e+00> : vector<8xf32>
    %124 = vector.multi_reduction <add>, %123, %cst_54 [1] : vector<8x32xf32> to vector<8xf32>
    %125 = vector.shape_cast %124 : vector<8xf32> to vector<8x1xf32>
    %cst_55 = arith.constant 3.200000e+01 : f32
    %126 = vector.broadcast %cst_55 : f32 to vector<8x1xf32>
    %127 = arith.divf %125, %126 : vector<8x1xf32>
    %128 = vector.broadcast %120 : vector<8x1xf32> to vector<8x32xf32>
    %129 = arith.subf %114, %128 : vector<8x32xf32>
    %cst_56 = arith.constant 9.99999974E-6 : f32
    %130 = vector.broadcast %cst_56 : f32 to vector<8x1xf32>
    %131 = arith.addf %127, %130 : vector<8x1xf32>
    %132 = math.rsqrt %131 : vector<8x1xf32>
    %133 = vector.broadcast %132 : vector<8x1xf32> to vector<8x32xf32>
    %134 = arith.mulf %129, %133 : vector<8x32xf32>
    %135 = vector.broadcast %115 : vector<1x32xf32> to vector<8x32xf32>
    %136 = arith.mulf %134, %135 : vector<8x32xf32>
    %137 = vector.broadcast %116 : vector<1x32xf32> to vector<8x32xf32>
    %138 = arith.addf %136, %137 : vector<8x32xf32>
    %c0_57 = arith.constant 0 : index
    %c0_58 = arith.constant 0 : index
    %c0_59 = arith.constant 0 : index
    %139 = vector.load %arg11[%c0_57, %c0_58, %c0_59] : memref<2x32x64xf32, #tpu.memory_space<vmem>>, vector<1x32x64xf32>
    %140 = vector.shape_cast %139 : vector<1x32x64xf32> to vector<32x64xf32>
    %cst_60 = arith.constant dense<0.000000e+00> : vector<8x64xf32>
    %141 = tpu.matmul %138, %140, %cst_60 {dimension_numbers = #tpu.dot_dimension_numbers<[1], [0], [0], [1], [0, 0, 1, 1], [], []>} : vector<8x32xf32>, vector<32x64xf32>, vector<8x64xf32> -> vector<8x64xf32>
    %c0_61 = arith.constant 0 : index
    %c0_62 = arith.constant 0 : index
    %142 = vector.load %arg12[%c0_61, %c0_62] : memref<2x64xf32, #tpu.memory_space<vmem>>, vector<1x64xf32>
    %143 = vector.broadcast %142 : vector<1x64xf32> to vector<8x64xf32>
    %144 = arith.addf %141, %143 : vector<8x64xf32>
    %cst_63 = arith.constant 5.000000e-01 : f32
    %145 = vector.broadcast %cst_63 : f32 to vector<8x64xf32>
    %146 = arith.mulf %145, %144 : vector<8x64xf32>
    %cst_64 = arith.constant 0.707106769 : f32
    %147 = vector.broadcast %cst_64 : f32 to vector<8x64xf32>
    %148 = arith.mulf %144, %147 : vector<8x64xf32>
    %149 = math.absf %148 : vector<8x64xf32>
    %cst_65 = arith.constant 0.327591091 : f32
    %150 = vector.broadcast %cst_65 : f32 to vector<8x64xf32>
    %151 = arith.mulf %150, %149 : vector<8x64xf32>
    %cst_66 = arith.constant 1.000000e+00 : f32
    %152 = vector.broadcast %cst_66 : f32 to vector<8x64xf32>
    %153 = arith.addf %152, %151 : vector<8x64xf32>
    %cst_67 = arith.constant 1.000000e+00 : f32
    %154 = vector.broadcast %cst_67 : f32 to vector<8x64xf32>
    %155 = arith.divf %154, %153 : vector<8x64xf32>
    %cst_68 = arith.constant 1.06140542 : f32
    %156 = vector.broadcast %cst_68 : f32 to vector<8x64xf32>
    %157 = arith.mulf %156, %155 : vector<8x64xf32>
    %cst_69 = arith.constant 1.45315206 : f32
    %158 = vector.broadcast %cst_69 : f32 to vector<8x64xf32>
    %159 = arith.subf %157, %158 : vector<8x64xf32>
    %160 = arith.mulf %159, %155 : vector<8x64xf32>
    %cst_70 = arith.constant 1.42141378 : f32
    %161 = vector.broadcast %cst_70 : f32 to vector<8x64xf32>
    %162 = arith.addf %160, %161 : vector<8x64xf32>
    %163 = arith.mulf %162, %155 : vector<8x64xf32>
    %cst_71 = arith.constant 0.284496725 : f32
    %164 = vector.broadcast %cst_71 : f32 to vector<8x64xf32>
    %165 = arith.subf %163, %164 : vector<8x64xf32>
    %166 = arith.mulf %165, %155 : vector<8x64xf32>
    %cst_72 = arith.constant 0.254829586 : f32
    %167 = vector.broadcast %cst_72 : f32 to vector<8x64xf32>
    %168 = arith.addf %166, %167 : vector<8x64xf32>
    %169 = arith.mulf %168, %155 : vector<8x64xf32>
    %cst_73 = arith.constant 0.000000e+00 : f32
    %170 = vector.broadcast %cst_73 : f32 to vector<8x64xf32>
    %171 = arith.subf %170, %148 : vector<8x64xf32>
    %172 = arith.mulf %171, %148 : vector<8x64xf32>
    %173 = math.exp %172 : vector<8x64xf32>
    %174 = arith.mulf %169, %173 : vector<8x64xf32>
    %cst_74 = arith.constant 1.000000e+00 : f32
    %175 = vector.broadcast %cst_74 : f32 to vector<8x64xf32>
    %176 = arith.subf %175, %174 : vector<8x64xf32>
    %cst_75 = arith.constant 0.000000e+00 : f32
    %177 = vector.broadcast %cst_75 : f32 to vector<8x64xf32>
    %178 = arith.cmpf oge, %148, %177 : vector<8x64xf32>
    %cst_76 = arith.constant 0.000000e+00 : f32
    %179 = vector.broadcast %cst_76 : f32 to vector<8x64xf32>
    %180 = arith.subf %179, %176 : vector<8x64xf32>
    %181 = arith.select %178, %176, %180 : vector<8x64xi1>, vector<8x64xf32>
    %cst_77 = arith.constant 1.000000e+00 : f32
    %182 = vector.broadcast %cst_77 : f32 to vector<8x64xf32>
    %183 = arith.addf %182, %181 : vector<8x64xf32>
    %184 = arith.mulf %146, %183 : vector<8x64xf32>
    %c0_78 = arith.constant 0 : index
    %c0_79 = arith.constant 0 : index
    %c0_80 = arith.constant 0 : index
    %185 = vector.load %arg13[%c0_78, %c0_79, %c0_80] : memref<2x64x32xf32, #tpu.memory_space<vmem>>, vector<1x64x32xf32>
    %186 = vector.shape_cast %185 : vector<1x64x32xf32> to vector<64x32xf32>
    %cst_81 = arith.constant dense<0.000000e+00> : vector<8x32xf32>
    %187 = tpu.matmul %184, %186, %cst_81 {dimension_numbers = #tpu.dot_dimension_numbers<[1], [0], [0], [1], [0, 0, 1, 1], [], []>} : vector<8x64xf32>, vector<64x32xf32>, vector<8x32xf32> -> vector<8x32xf32>
    %188 = arith.addf %114, %187 : vector<8x32xf32>
    %c0_82 = arith.constant 0 : index
    %c0_83 = arith.constant 0 : index
    %189 = vector.load %arg14[%c0_82, %c0_83] : memref<2x32xf32, #tpu.memory_space<vmem>>, vector<1x32xf32>
    %190 = vector.broadcast %189 : vector<1x32xf32> to vector<8x32xf32>
    %191 = arith.addf %188, %190 : vector<8x32xf32>
    %c1 = arith.constant 1 : index
    %c0_84 = arith.constant 0 : index
    %192 = vector.load %arg4[%c1, %c0_84] : memref<2x32xf32, #tpu.memory_space<vmem>>, vector<1x32xf32>
    %c1_85 = arith.constant 1 : index
    %c0_86 = arith.constant 0 : index
    %193 = vector.load %arg5[%c1_85, %c0_86] : memref<2x32xf32, #tpu.memory_space<vmem>>, vector<1x32xf32>
    %cst_87 = arith.constant dense<0.000000e+00> : vector<8xf32>
    %194 = vector.multi_reduction <add>, %191, %cst_87 [1] : vector<8x32xf32> to vector<8xf32>
    %195 = vector.shape_cast %194 : vector<8xf32> to vector<8x1xf32>
    %cst_88 = arith.constant 3.200000e+01 : f32
    %196 = vector.broadcast %cst_88 : f32 to vector<8x1xf32>
    %197 = arith.divf %195, %196 : vector<8x1xf32>
    %198 = vector.broadcast %197 : vector<8x1xf32> to vector<8x32xf32>
    %199 = arith.subf %191, %198 : vector<8x32xf32>
    %200 = arith.mulf %199, %199 : vector<8x32xf32>
    %cst_89 = arith.constant dense<0.000000e+00> : vector<8xf32>
    %201 = vector.multi_reduction <add>, %200, %cst_89 [1] : vector<8x32xf32> to vector<8xf32>
    %202 = vector.shape_cast %201 : vector<8xf32> to vector<8x1xf32>
    %cst_90 = arith.constant 3.200000e+01 : f32
    %203 = vector.broadcast %cst_90 : f32 to vector<8x1xf32>
    %204 = arith.divf %202, %203 : vector<8x1xf32>
    %205 = vector.broadcast %197 : vector<8x1xf32> to vector<8x32xf32>
    %206 = arith.subf %191, %205 : vector<8x32xf32>
    %cst_91 = arith.constant 9.99999974E-6 : f32
    %207 = vector.broadcast %cst_91 : f32 to vector<8x1xf32>
    %208 = arith.addf %204, %207 : vector<8x1xf32>
    %209 = math.rsqrt %208 : vector<8x1xf32>
    %210 = vector.broadcast %209 : vector<8x1xf32> to vector<8x32xf32>
    %211 = arith.mulf %206, %210 : vector<8x32xf32>
    %212 = vector.broadcast %192 : vector<1x32xf32> to vector<8x32xf32>
    %213 = arith.mulf %211, %212 : vector<8x32xf32>
    %214 = vector.broadcast %193 : vector<1x32xf32> to vector<8x32xf32>
    %215 = arith.addf %213, %214 : vector<8x32xf32>
    %c1_92 = arith.constant 1 : index
    %c0_93 = arith.constant 0 : index
    %c0_94 = arith.constant 0 : index
    %216 = vector.load %arg6[%c1_92, %c0_93, %c0_94] : memref<2x32x192xf32, #tpu.memory_space<vmem>>, vector<1x32x192xf32>
    %217 = vector.shape_cast %216 : vector<1x32x192xf32> to vector<32x192xf32>
    %cst_95 = arith.constant dense<0.000000e+00> : vector<8x192xf32>
    %218 = tpu.matmul %215, %217, %cst_95 {dimension_numbers = #tpu.dot_dimension_numbers<[1], [0], [0], [1], [0, 0, 1, 1], [], []>} : vector<8x32xf32>, vector<32x192xf32>, vector<8x192xf32> -> vector<8x192xf32>
    %c1_96 = arith.constant 1 : index
    %c0_97 = arith.constant 0 : index
    %c0_98 = arith.constant 0 : index
    %219 = vector.load %arg7[%c1_96, %c0_97, %c0_98] : memref<2x64x32xf32, #tpu.memory_space<vmem>>, vector<1x64x32xf32>
    %220 = vector.shape_cast %219 : vector<1x64x32xf32> to vector<64x32xf32>
    %221 = vector.extract_strided_slice %218 {offsets = [0, 0], sizes = [8, 16], strides = [1, 1]} : vector<8x192xf32> to vector<8x16xf32>
    %222 = vector.extract_strided_slice %218 {offsets = [0, 64], sizes = [8, 16], strides = [1, 1]} : vector<8x192xf32> to vector<8x16xf32>
    %223 = vector.extract_strided_slice %218 {offsets = [0, 128], sizes = [8, 16], strides = [1, 1]} : vector<8x192xf32> to vector<8x16xf32>
    %cst_99 = arith.constant dense<0.000000e+00> : vector<8x8xf32>
    %224 = tpu.matmul %221, %222, %cst_99 {dimension_numbers = #tpu.dot_dimension_numbers<[1], [1], [0], [0], [0, 0, 1, 0], [], []>} : vector<8x16xf32>, vector<8x16xf32>, vector<8x8xf32> -> vector<8x8xf32>
    %cst_100 = arith.constant 2.500000e-01 : f32
    %225 = vector.broadcast %cst_100 : f32 to vector<8x8xf32>
    %226 = arith.mulf %224, %225 : vector<8x8xf32>
    %cst_101 = arith.constant dense<0xFF800000> : vector<8xf32>
    %227 = vector.multi_reduction <maximumf>, %226, %cst_101 [1] : vector<8x8xf32> to vector<8xf32>
    %228 = vector.shape_cast %227 : vector<8xf32> to vector<8x1xf32>
    %229 = vector.broadcast %228 : vector<8x1xf32> to vector<8x8xf32>
    %230 = arith.subf %226, %229 : vector<8x8xf32>
    %231 = math.exp %230 : vector<8x8xf32>
    %cst_102 = arith.constant dense<0.000000e+00> : vector<8xf32>
    %232 = vector.multi_reduction <add>, %231, %cst_102 [1] : vector<8x8xf32> to vector<8xf32>
    %233 = vector.shape_cast %232 : vector<8xf32> to vector<8x1xf32>
    %234 = vector.broadcast %233 : vector<8x1xf32> to vector<8x8xf32>
    %235 = arith.divf %231, %234 : vector<8x8xf32>
    %cst_103 = arith.constant dense<0.000000e+00> : vector<8x16xf32>
    %236 = tpu.matmul %235, %223, %cst_103 {dimension_numbers = #tpu.dot_dimension_numbers<[1], [0], [0], [1], [0, 0, 1, 1], [], []>} : vector<8x8xf32>, vector<8x16xf32>, vector<8x16xf32> -> vector<8x16xf32>
    %237 = vector.extract_strided_slice %220 {offsets = [0, 0], sizes = [16, 32], strides = [1, 1]} : vector<64x32xf32> to vector<16x32xf32>
    %cst_104 = arith.constant dense<0.000000e+00> : vector<8x32xf32>
    %238 = tpu.matmul %236, %237, %cst_104 {dimension_numbers = #tpu.dot_dimension_numbers<[1], [0], [0], [1], [0, 0, 1, 1], [], []>} : vector<8x16xf32>, vector<16x32xf32>, vector<8x32xf32> -> vector<8x32xf32>
    %239 = vector.extract_strided_slice %218 {offsets = [0, 16], sizes = [8, 16], strides = [1, 1]} : vector<8x192xf32> to vector<8x16xf32>
    %240 = vector.extract_strided_slice %218 {offsets = [0, 80], sizes = [8, 16], strides = [1, 1]} : vector<8x192xf32> to vector<8x16xf32>
    %241 = vector.extract_strided_slice %218 {offsets = [0, 144], sizes = [8, 16], strides = [1, 1]} : vector<8x192xf32> to vector<8x16xf32>
    %cst_105 = arith.constant dense<0.000000e+00> : vector<8x8xf32>
    %242 = tpu.matmul %239, %240, %cst_105 {dimension_numbers = #tpu.dot_dimension_numbers<[1], [1], [0], [0], [0, 0, 1, 0], [], []>} : vector<8x16xf32>, vector<8x16xf32>, vector<8x8xf32> -> vector<8x8xf32>
    %cst_106 = arith.constant 2.500000e-01 : f32
    %243 = vector.broadcast %cst_106 : f32 to vector<8x8xf32>
    %244 = arith.mulf %242, %243 : vector<8x8xf32>
    %cst_107 = arith.constant dense<0xFF800000> : vector<8xf32>
    %245 = vector.multi_reduction <maximumf>, %244, %cst_107 [1] : vector<8x8xf32> to vector<8xf32>
    %246 = vector.shape_cast %245 : vector<8xf32> to vector<8x1xf32>
    %247 = vector.broadcast %246 : vector<8x1xf32> to vector<8x8xf32>
    %248 = arith.subf %244, %247 : vector<8x8xf32>
    %249 = math.exp %248 : vector<8x8xf32>
    %cst_108 = arith.constant dense<0.000000e+00> : vector<8xf32>
    %250 = vector.multi_reduction <add>, %249, %cst_108 [1] : vector<8x8xf32> to vector<8xf32>
    %251 = vector.shape_cast %250 : vector<8xf32> to vector<8x1xf32>
    %252 = vector.broadcast %251 : vector<8x1xf32> to vector<8x8xf32>
    %253 = arith.divf %249, %252 : vector<8x8xf32>
    %cst_109 = arith.constant dense<0.000000e+00> : vector<8x16xf32>
    %254 = tpu.matmul %253, %241, %cst_109 {dimension_numbers = #tpu.dot_dimension_numbers<[1], [0], [0], [1], [0, 0, 1, 1], [], []>} : vector<8x8xf32>, vector<8x16xf32>, vector<8x16xf32> -> vector<8x16xf32>
    %255 = vector.extract_strided_slice %220 {offsets = [16, 0], sizes = [16, 32], strides = [1, 1]} : vector<64x32xf32> to vector<16x32xf32>
    %cst_110 = arith.constant dense<0.000000e+00> : vector<8x32xf32>
    %256 = tpu.matmul %254, %255, %cst_110 {dimension_numbers = #tpu.dot_dimension_numbers<[1], [0], [0], [1], [0, 0, 1, 1], [], []>} : vector<8x16xf32>, vector<16x32xf32>, vector<8x32xf32> -> vector<8x32xf32>
    %257 = arith.addf %238, %256 : vector<8x32xf32>
    %258 = vector.extract_strided_slice %218 {offsets = [0, 32], sizes = [8, 16], strides = [1, 1]} : vector<8x192xf32> to vector<8x16xf32>
    %259 = vector.extract_strided_slice %218 {offsets = [0, 96], sizes = [8, 16], strides = [1, 1]} : vector<8x192xf32> to vector<8x16xf32>
    %260 = vector.extract_strided_slice %218 {offsets = [0, 160], sizes = [8, 16], strides = [1, 1]} : vector<8x192xf32> to vector<8x16xf32>
    %cst_111 = arith.constant dense<0.000000e+00> : vector<8x8xf32>
    %261 = tpu.matmul %258, %259, %cst_111 {dimension_numbers = #tpu.dot_dimension_numbers<[1], [1], [0], [0], [0, 0, 1, 0], [], []>} : vector<8x16xf32>, vector<8x16xf32>, vector<8x8xf32> -> vector<8x8xf32>
    %cst_112 = arith.constant 2.500000e-01 : f32
    %262 = vector.broadcast %cst_112 : f32 to vector<8x8xf32>
    %263 = arith.mulf %261, %262 : vector<8x8xf32>
    %cst_113 = arith.constant dense<0xFF800000> : vector<8xf32>
    %264 = vector.multi_reduction <maximumf>, %263, %cst_113 [1] : vector<8x8xf32> to vector<8xf32>
    %265 = vector.shape_cast %264 : vector<8xf32> to vector<8x1xf32>
    %266 = vector.broadcast %265 : vector<8x1xf32> to vector<8x8xf32>
    %267 = arith.subf %263, %266 : vector<8x8xf32>
    %268 = math.exp %267 : vector<8x8xf32>
    %cst_114 = arith.constant dense<0.000000e+00> : vector<8xf32>
    %269 = vector.multi_reduction <add>, %268, %cst_114 [1] : vector<8x8xf32> to vector<8xf32>
    %270 = vector.shape_cast %269 : vector<8xf32> to vector<8x1xf32>
    %271 = vector.broadcast %270 : vector<8x1xf32> to vector<8x8xf32>
    %272 = arith.divf %268, %271 : vector<8x8xf32>
    %cst_115 = arith.constant dense<0.000000e+00> : vector<8x16xf32>
    %273 = tpu.matmul %272, %260, %cst_115 {dimension_numbers = #tpu.dot_dimension_numbers<[1], [0], [0], [1], [0, 0, 1, 1], [], []>} : vector<8x8xf32>, vector<8x16xf32>, vector<8x16xf32> -> vector<8x16xf32>
    %274 = vector.extract_strided_slice %220 {offsets = [32, 0], sizes = [16, 32], strides = [1, 1]} : vector<64x32xf32> to vector<16x32xf32>
    %cst_116 = arith.constant dense<0.000000e+00> : vector<8x32xf32>
    %275 = tpu.matmul %273, %274, %cst_116 {dimension_numbers = #tpu.dot_dimension_numbers<[1], [0], [0], [1], [0, 0, 1, 1], [], []>} : vector<8x16xf32>, vector<16x32xf32>, vector<8x32xf32> -> vector<8x32xf32>
    %276 = arith.addf %257, %275 : vector<8x32xf32>
    %277 = vector.extract_strided_slice %218 {offsets = [0, 48], sizes = [8, 16], strides = [1, 1]} : vector<8x192xf32> to vector<8x16xf32>
    %278 = vector.extract_strided_slice %218 {offsets = [0, 112], sizes = [8, 16], strides = [1, 1]} : vector<8x192xf32> to vector<8x16xf32>
    %279 = vector.extract_strided_slice %218 {offsets = [0, 176], sizes = [8, 16], strides = [1, 1]} : vector<8x192xf32> to vector<8x16xf32>
    %cst_117 = arith.constant dense<0.000000e+00> : vector<8x8xf32>
    %280 = tpu.matmul %277, %278, %cst_117 {dimension_numbers = #tpu.dot_dimension_numbers<[1], [1], [0], [0], [0, 0, 1, 0], [], []>} : vector<8x16xf32>, vector<8x16xf32>, vector<8x8xf32> -> vector<8x8xf32>
    %cst_118 = arith.constant 2.500000e-01 : f32
    %281 = vector.broadcast %cst_118 : f32 to vector<8x8xf32>
    %282 = arith.mulf %280, %281 : vector<8x8xf32>
    %cst_119 = arith.constant dense<0xFF800000> : vector<8xf32>
    %283 = vector.multi_reduction <maximumf>, %282, %cst_119 [1] : vector<8x8xf32> to vector<8xf32>
    %284 = vector.shape_cast %283 : vector<8xf32> to vector<8x1xf32>
    %285 = vector.broadcast %284 : vector<8x1xf32> to vector<8x8xf32>
    %286 = arith.subf %282, %285 : vector<8x8xf32>
    %287 = math.exp %286 : vector<8x8xf32>
    %cst_120 = arith.constant dense<0.000000e+00> : vector<8xf32>
    %288 = vector.multi_reduction <add>, %287, %cst_120 [1] : vector<8x8xf32> to vector<8xf32>
    %289 = vector.shape_cast %288 : vector<8xf32> to vector<8x1xf32>
    %290 = vector.broadcast %289 : vector<8x1xf32> to vector<8x8xf32>
    %291 = arith.divf %287, %290 : vector<8x8xf32>
    %cst_121 = arith.constant dense<0.000000e+00> : vector<8x16xf32>
    %292 = tpu.matmul %291, %279, %cst_121 {dimension_numbers = #tpu.dot_dimension_numbers<[1], [0], [0], [1], [0, 0, 1, 1], [], []>} : vector<8x8xf32>, vector<8x16xf32>, vector<8x16xf32> -> vector<8x16xf32>
    %293 = vector.extract_strided_slice %220 {offsets = [48, 0], sizes = [16, 32], strides = [1, 1]} : vector<64x32xf32> to vector<16x32xf32>
    %cst_122 = arith.constant dense<0.000000e+00> : vector<8x32xf32>
    %294 = tpu.matmul %292, %293, %cst_122 {dimension_numbers = #tpu.dot_dimension_numbers<[1], [0], [0], [1], [0, 0, 1, 1], [], []>} : vector<8x16xf32>, vector<16x32xf32>, vector<8x32xf32> -> vector<8x32xf32>
    %295 = arith.addf %276, %294 : vector<8x32xf32>
    %296 = arith.addf %191, %295 : vector<8x32xf32>
    %c1_123 = arith.constant 1 : index
    %c0_124 = arith.constant 0 : index
    %297 = vector.load %arg8[%c1_123, %c0_124] : memref<2x32xf32, #tpu.memory_space<vmem>>, vector<1x32xf32>
    %298 = vector.broadcast %297 : vector<1x32xf32> to vector<8x32xf32>
    %299 = arith.addf %296, %298 : vector<8x32xf32>
    %c1_125 = arith.constant 1 : index
    %c0_126 = arith.constant 0 : index
    %300 = vector.load %arg9[%c1_125, %c0_126] : memref<2x32xf32, #tpu.memory_space<vmem>>, vector<1x32xf32>
    %c1_127 = arith.constant 1 : index
    %c0_128 = arith.constant 0 : index
    %301 = vector.load %arg10[%c1_127, %c0_128] : memref<2x32xf32, #tpu.memory_space<vmem>>, vector<1x32xf32>
    %cst_129 = arith.constant dense<0.000000e+00> : vector<8xf32>
    %302 = vector.multi_reduction <add>, %299, %cst_129 [1] : vector<8x32xf32> to vector<8xf32>
    %303 = vector.shape_cast %302 : vector<8xf32> to vector<8x1xf32>
    %cst_130 = arith.constant 3.200000e+01 : f32
    %304 = vector.broadcast %cst_130 : f32 to vector<8x1xf32>
    %305 = arith.divf %303, %304 : vector<8x1xf32>
    %306 = vector.broadcast %305 : vector<8x1xf32> to vector<8x32xf32>
    %307 = arith.subf %299, %306 : vector<8x32xf32>
    %308 = arith.mulf %307, %307 : vector<8x32xf32>
    %cst_131 = arith.constant dense<0.000000e+00> : vector<8xf32>
    %309 = vector.multi_reduction <add>, %308, %cst_131 [1] : vector<8x32xf32> to vector<8xf32>
    %310 = vector.shape_cast %309 : vector<8xf32> to vector<8x1xf32>
    %cst_132 = arith.constant 3.200000e+01 : f32
    %311 = vector.broadcast %cst_132 : f32 to vector<8x1xf32>
    %312 = arith.divf %310, %311 : vector<8x1xf32>
    %313 = vector.broadcast %305 : vector<8x1xf32> to vector<8x32xf32>
    %314 = arith.subf %299, %313 : vector<8x32xf32>
    %cst_133 = arith.constant 9.99999974E-6 : f32
    %315 = vector.broadcast %cst_133 : f32 to vector<8x1xf32>
    %316 = arith.addf %312, %315 : vector<8x1xf32>
    %317 = math.rsqrt %316 : vector<8x1xf32>
    %318 = vector.broadcast %317 : vector<8x1xf32> to vector<8x32xf32>
    %319 = arith.mulf %314, %318 : vector<8x32xf32>
    %320 = vector.broadcast %300 : vector<1x32xf32> to vector<8x32xf32>
    %321 = arith.mulf %319, %320 : vector<8x32xf32>
    %322 = vector.broadcast %301 : vector<1x32xf32> to vector<8x32xf32>
    %323 = arith.addf %321, %322 : vector<8x32xf32>
    %c1_134 = arith.constant 1 : index
    %c0_135 = arith.constant 0 : index
    %c0_136 = arith.constant 0 : index
    %324 = vector.load %arg11[%c1_134, %c0_135, %c0_136] : memref<2x32x64xf32, #tpu.memory_space<vmem>>, vector<1x32x64xf32>
    %325 = vector.shape_cast %324 : vector<1x32x64xf32> to vector<32x64xf32>
    %cst_137 = arith.constant dense<0.000000e+00> : vector<8x64xf32>
    %326 = tpu.matmul %323, %325, %cst_137 {dimension_numbers = #tpu.dot_dimension_numbers<[1], [0], [0], [1], [0, 0, 1, 1], [], []>} : vector<8x32xf32>, vector<32x64xf32>, vector<8x64xf32> -> vector<8x64xf32>
    %c1_138 = arith.constant 1 : index
    %c0_139 = arith.constant 0 : index
    %327 = vector.load %arg12[%c1_138, %c0_139] : memref<2x64xf32, #tpu.memory_space<vmem>>, vector<1x64xf32>
    %328 = vector.broadcast %327 : vector<1x64xf32> to vector<8x64xf32>
    %329 = arith.addf %326, %328 : vector<8x64xf32>
    %cst_140 = arith.constant 5.000000e-01 : f32
    %330 = vector.broadcast %cst_140 : f32 to vector<8x64xf32>
    %331 = arith.mulf %330, %329 : vector<8x64xf32>
    %cst_141 = arith.constant 0.707106769 : f32
    %332 = vector.broadcast %cst_141 : f32 to vector<8x64xf32>
    %333 = arith.mulf %329, %332 : vector<8x64xf32>
    %334 = math.absf %333 : vector<8x64xf32>
    %cst_142 = arith.constant 0.327591091 : f32
    %335 = vector.broadcast %cst_142 : f32 to vector<8x64xf32>
    %336 = arith.mulf %335, %334 : vector<8x64xf32>
    %cst_143 = arith.constant 1.000000e+00 : f32
    %337 = vector.broadcast %cst_143 : f32 to vector<8x64xf32>
    %338 = arith.addf %337, %336 : vector<8x64xf32>
    %cst_144 = arith.constant 1.000000e+00 : f32
    %339 = vector.broadcast %cst_144 : f32 to vector<8x64xf32>
    %340 = arith.divf %339, %338 : vector<8x64xf32>
    %cst_145 = arith.constant 1.06140542 : f32
    %341 = vector.broadcast %cst_145 : f32 to vector<8x64xf32>
    %342 = arith.mulf %341, %340 : vector<8x64xf32>
    %cst_146 = arith.constant 1.45315206 : f32
    %343 = vector.broadcast %cst_146 : f32 to vector<8x64xf32>
    %344 = arith.subf %342, %343 : vector<8x64xf32>
    %345 = arith.mulf %344, %340 : vector<8x64xf32>
    %cst_147 = arith.constant 1.42141378 : f32
    %346 = vector.broadcast %cst_147 : f32 to vector<8x64xf32>
    %347 = arith.addf %345, %346 : vector<8x64xf32>
    %348 = arith.mulf %347, %340 : vector<8x64xf32>
    %cst_148 = arith.constant 0.284496725 : f32
    %349 = vector.broadcast %cst_148 : f32 to vector<8x64xf32>
    %350 = arith.subf %348, %349 : vector<8x64xf32>
    %351 = arith.mulf %350, %340 : vector<8x64xf32>
    %cst_149 = arith.constant 0.254829586 : f32
    %352 = vector.broadcast %cst_149 : f32 to vector<8x64xf32>
    %353 = arith.addf %351, %352 : vector<8x64xf32>
    %354 = arith.mulf %353, %340 : vector<8x64xf32>
    %cst_150 = arith.constant 0.000000e+00 : f32
    %355 = vector.broadcast %cst_150 : f32 to vector<8x64xf32>
    %356 = arith.subf %355, %333 : vector<8x64xf32>
    %357 = arith.mulf %356, %333 : vector<8x64xf32>
    %358 = math.exp %357 : vector<8x64xf32>
    %359 = arith.mulf %354, %358 : vector<8x64xf32>
    %cst_151 = arith.constant 1.000000e+00 : f32
    %360 = vector.broadcast %cst_151 : f32 to vector<8x64xf32>
    %361 = arith.subf %360, %359 : vector<8x64xf32>
    %cst_152 = arith.constant 0.000000e+00 : f32
    %362 = vector.broadcast %cst_152 : f32 to vector<8x64xf32>
    %363 = arith.cmpf oge, %333, %362 : vector<8x64xf32>
    %cst_153 = arith.constant 0.000000e+00 : f32
    %364 = vector.broadcast %cst_153 : f32 to vector<8x64xf32>
    %365 = arith.subf %364, %361 : vector<8x64xf32>
    %366 = arith.select %363, %361, %365 : vector<8x64xi1>, vector<8x64xf32>
    %cst_154 = arith.constant 1.000000e+00 : f32
    %367 = vector.broadcast %cst_154 : f32 to vector<8x64xf32>
    %368 = arith.addf %367, %366 : vector<8x64xf32>
    %369 = arith.mulf %331, %368 : vector<8x64xf32>
    %c1_155 = arith.constant 1 : index
    %c0_156 = arith.constant 0 : index
    %c0_157 = arith.constant 0 : index
    %370 = vector.load %arg13[%c1_155, %c0_156, %c0_157] : memref<2x64x32xf32, #tpu.memory_space<vmem>>, vector<1x64x32xf32>
    %371 = vector.shape_cast %370 : vector<1x64x32xf32> to vector<64x32xf32>
    %cst_158 = arith.constant dense<0.000000e+00> : vector<8x32xf32>
    %372 = tpu.matmul %369, %371, %cst_158 {dimension_numbers = #tpu.dot_dimension_numbers<[1], [0], [0], [1], [0, 0, 1, 1], [], []>} : vector<8x64xf32>, vector<64x32xf32>, vector<8x32xf32> -> vector<8x32xf32>
    %373 = arith.addf %299, %372 : vector<8x32xf32>
    %c1_159 = arith.constant 1 : index
    %c0_160 = arith.constant 0 : index
    %374 = vector.load %arg14[%c1_159, %c0_160] : memref<2x32xf32, #tpu.memory_space<vmem>>, vector<1x32xf32>
    %375 = vector.broadcast %374 : vector<1x32xf32> to vector<8x32xf32>
    %376 = arith.addf %373, %375 : vector<8x32xf32>
    %cst_161 = arith.constant dense<0.000000e+00> : vector<32xf32>
    %377 = vector.multi_reduction <add>, %376, %cst_161 [0] : vector<8x32xf32> to vector<32xf32>
    %378 = vector.shape_cast %377 : vector<32xf32> to vector<1x32xf32>
    %cst_162 = arith.constant 8.000000e+00 : f32
    %379 = vector.broadcast %cst_162 : f32 to vector<1x32xf32>
    %380 = arith.divf %378, %379 : vector<1x32xf32>
    %c0_163 = arith.constant 0 : index
    %c0_164 = arith.constant 0 : index
    %381 = vector.load %arg15[%c0_163, %c0_164] : memref<32x2xf32, #tpu.memory_space<vmem>>, vector<32x2xf32>
    %cst_165 = arith.constant dense<0.000000e+00> : vector<1x2xf32>
    %382 = tpu.matmul %380, %381, %cst_165 {dimension_numbers = #tpu.dot_dimension_numbers<[1], [0], [0], [1], [0, 0, 1, 1], [], []>} : vector<1x32xf32>, vector<32x2xf32>, vector<1x2xf32> -> vector<1x2xf32>
    %c0_166 = arith.constant 0 : index
    %c0_167 = arith.constant 0 : index
    %383 = vector.load %arg16[%c0_166, %c0_167] : memref<1x2xf32, #tpu.memory_space<vmem>>, vector<1x2xf32>
    %384 = arith.addf %382, %383 : vector<1x2xf32>
    %c0_168 = arith.constant 0 : index
    %c0_169 = arith.constant 0 : index
    %c0_170 = arith.constant 0 : index
    %385 = vector.load %arg17[%c0_168, %c0_169, %c0_170] : memref<1x1x2xf32, #tpu.memory_space<vmem>>, vector<1x1x2xf32>
    %386 = vector.shape_cast %385 : vector<1x1x2xf32> to vector<1x2xf32>
    %387 = vector.shape_cast %384 : vector<1x2xf32> to vector<1x1x2xf32>
    tpu.vector_store %arg17[%c0_168, %c0_169, %c0_170], %387 {strides = array<i32>} : memref<1x1x2xf32, #tpu.memory_space<vmem>>, vector<1x1x2xf32>,
    return
  }
  func.func @transform_0(%arg0: i32) -> (i32, i32, i32) {
    %c0_i32 = arith.constant 0 : i32
    %c0_i32_0 = arith.constant 0 : i32
    %c0_i32_1 = arith.constant 0 : i32
    return %arg0, %c0_i32, %c0_i32_0 : i32, i32, i32
  }
  func.func @transform_1(%arg0: i32) -> (i32, i32) {
    %c0_i32 = arith.constant 0 : i32
    %c0_i32_0 = arith.constant 0 : i32
    %c0_i32_1 = arith.constant 0 : i32
    return %c0_i32, %c0_i32_0 : i32, i32
  }
  func.func @transform_2(%arg0: i32) -> (i32, i32) {
    %c0_i32 = arith.constant 0 : i32
    %c0_i32_0 = arith.constant 0 : i32
    %c0_i32_1 = arith.constant 0 : i32
    return %c0_i32, %c0_i32_0 : i32, i32
  }
  func.func @transform_3(%arg0: i32) -> (i32, i32) {
    %c0_i32 = arith.constant 0 : i32
    %c0_i32_0 = arith.constant 0 : i32
    %c0_i32_1 = arith.constant 0 : i32
    return %c0_i32, %c0_i32_0 : i32, i32
  }
  func.func @transform_4(%arg0: i32) -> (i32, i32) {
    %c0_i32 = arith.constant 0 : i32
    %c0_i32_0 = arith.constant 0 : i32
    %c0_i32_1 = arith.constant 0 : i32
    return %c0_i32, %c0_i32_0 : i32, i32
  }
  func.func @transform_5(%arg0: i32) -> (i32, i32, i32) {
    %c0_i32 = arith.constant 0 : i32
    %c0_i32_0 = arith.constant 0 : i32
    %c0_i32_1 = arith.constant 0 : i32
    %c0_i32_2 = arith.constant 0 : i32
    return %c0_i32, %c0_i32_0, %c0_i32_1 : i32, i32, i32
  }
  func.func @transform_6(%arg0: i32) -> (i32, i32, i32) {
    %c0_i32 = arith.constant 0 : i32
    %c0_i32_0 = arith.constant 0 : i32
    %c0_i32_1 = arith.constant 0 : i32
    %c0_i32_2 = arith.constant 0 : i32
    return %c0_i32, %c0_i32_0, %c0_i32_1 : i32, i32, i32
  }
  func.func @transform_7(%arg0: i32) -> (i32, i32) {
    %c0_i32 = arith.constant 0 : i32
    %c0_i32_0 = arith.constant 0 : i32
    %c0_i32_1 = arith.constant 0 : i32
    return %c0_i32, %c0_i32_0 : i32, i32
  }
  func.func @transform_8(%arg0: i32) -> (i32, i32) {
    %c0_i32 = arith.constant 0 : i32
    %c0_i32_0 = arith.constant 0 : i32
    %c0_i32_1 = arith.constant 0 : i32
    return %c0_i32, %c0_i32_0 : i32, i32
  }
  func.func @transform_9(%arg0: i32) -> (i32, i32) {
    %c0_i32 = arith.constant 0 : i32
    %c0_i32_0 = arith.constant 0 : i32
    %c0_i32_1 = arith.constant 0 : i32
    return %c0_i32, %c0_i32_0 : i32, i32
  }
  func.func @transform_10(%arg0: i32) -> (i32, i32, i32) {
    %c0_i32 = arith.constant 0 : i32
    %c0_i32_0 = arith.constant 0 : i32
    %c0_i32_1 = arith.constant 0 : i32
    %c0_i32_2 = arith.constant 0 : i32
    return %c0_i32, %c0_i32_0, %c0_i32_1 : i32, i32, i32
  }
  func.func @transform_11(%arg0: i32) -> (i32, i32) {
    %c0_i32 = arith.constant 0 : i32
    %c0_i32_0 = arith.constant 0 : i32
    %c0_i32_1 = arith.constant 0 : i32
    return %c0_i32, %c0_i32_0 : i32, i32
  }
  func.func @transform_12(%arg0: i32) -> (i32, i32, i32) {
    %c0_i32 = arith.constant 0 : i32
    %c0_i32_0 = arith.constant 0 : i32
    %c0_i32_1 = arith.constant 0 : i32
    %c0_i32_2 = arith.constant 0 : i32
    return %c0_i32, %c0_i32_0, %c0_i32_1 : i32, i32, i32
  }
  func.func @transform_13(%arg0: i32) -> (i32, i32) {
    %c0_i32 = arith.constant 0 : i32
    %c0_i32_0 = arith.constant 0 : i32
    %c0_i32_1 = arith.constant 0 : i32
    return %c0_i32, %c0_i32_0 : i32, i32
  }
  func.func @transform_14(%arg0: i32) -> (i32, i32) {
    %c0_i32 = arith.constant 0 : i32
    %c0_i32_0 = arith.constant 0 : i32
    %c0_i32_1 = arith.constant 0 : i32
    return %c0_i32, %c0_i32_0 : i32, i32
  }
  func.func @transform_15(%arg0: i32) -> (i32, i32) {
    %c0_i32 = arith.constant 0 : i32
    %c0_i32_0 = arith.constant 0 : i32
    %c0_i32_1 = arith.constant 0 : i32
    return %c0_i32, %c0_i32_0 : i32, i32
  }
  func.func @transform_16(%arg0: i32) -> (i32, i32, i32) {
    %c0_i32 = arith.constant 0 : i32
    %c0_i32_0 = arith.constant 0 : i32
    %c0_i32_1 = arith.constant 0 : i32
    return %arg0, %c0_i32, %c0_i32_0 : i32, i32, i32
  }
}

</mosaic_0001>

<llo_original>
// kernel: mymodel_forward.1
$region0: #{mymodel_forward.1}
  #allocation0 [shape = 'u32[]', space=smem, size = 0x4, offset = 0x4, fixed_abs, tag = 'smem constant byte address 0x4 - core index']
  #allocation1 [shape = 'u32[144,128]{1,0:T(1,128)}', space=vmem, size = 0x12000, scoped, tag = 'internal scratch']
  %s0 = inlined_call_operand.vmem [shape: f32[2,8,10], index: 0, kind: input, shape index: {}]
  %s1 = inlined_call_operand.vmem [shape: f32[10,32], index: 1, kind: input, shape index: {}]
  %s2 = inlined_call_operand.vmem [shape: f32[1,32], index: 2, kind: input, shape index: {}]
  %s3 = inlined_call_operand.vmem [shape: f32[2,32], index: 3, kind: input, shape index: {}]
  %s4 = inlined_call_operand.vmem [shape: f32[2,32], index: 4, kind: input, shape index: {}]
  %s5 = inlined_call_operand.vmem [shape: f32[2,32,192], index: 5, kind: input, shape index: {}]
  %s6 = inlined_call_operand.vmem [shape: f32[2,64,32], index: 6, kind: input, shape index: {}]
  %s7 = inlined_call_operand.vmem [shape: f32[2,32], index: 7, kind: input, shape index: {}]
  %s8 = inlined_call_operand.vmem [shape: f32[2,32], index: 8, kind: input, shape index: {}]
  %s9 = inlined_call_operand.vmem [shape: f32[2,32], index: 9, kind: input, shape index: {}]
  %s10 = inlined_call_operand.vmem [shape: f32[2,32,64], index: 10, kind: input, shape index: {}]
  %s11 = inlined_call_operand.vmem [shape: f32[2,64], index: 11, kind: input, shape index: {}]
  %s12 = inlined_call_operand.vmem [shape: f32[2,64,32], index: 12, kind: input, shape index: {}]
  %s13 = inlined_call_operand.vmem [shape: f32[2,32], index: 13, kind: input, shape index: {}]
  %s14 = inlined_call_operand.vmem [shape: f32[32,2], index: 14, kind: input, shape index: {}]
  %s15 = inlined_call_operand.vmem [shape: f32[1,2], index: 15, kind: input, shape index: {}]
  %s16 = inlined_call_operand.hbm [shape: f32[2,1,2], index: 16, kind: output, shape index: {}]
  %s17 = sld [smem:[#allocation0]]
  $region97: #{mymodel_forward.1} parent=0
    _
  %s19 = ssub.s32 1, %s17
  %s20 = scalar_select 0, %s19, %s17
  $region1: #{mymodel_forward.1} parent=0
    #allocation2 [shape = 'u8[1024]{0}', space=vmem, size = 0x400, scoped, tag = 'output window, operand 0']
    #allocation3 [shape = 's32[2]{0}', space=sflag, size = 0x8, scoped, tag = 'scoped memory for mymodel_forward.1']
    %21 = vsyncpa [#allocation3], 0
    %s22 = scalar_lea.sflag [#allocation3], 1
    %23 = vsyncpa %s22, 0
    loop: start=0, step=1, limit=4
    $region2: #{mymodel_forward.1} parent=1 // loop_pre_header
      _
    $region3: #{mymodel_forward.1} parent=1 // loop_header
      %s25 = sphi 0, %s29
      %p26 = scmp.ge.s32.totalorder %s25, 4
      %s35 = sphi 0, %s37
      %s38 = sphi 0, %s35
      %s39 = sphi 0, %s38
      %s55 = sphi 0, %s39
      %s59 = sphi 0, %s59
      %s61 = sphi 0, %s59
      %s62 = sphi 0, %s61
      %s76 = sphi 0, %s62
      %s80 = sphi 0, %s80
      %s82 = sphi 0, %s80
      %s83 = sphi 0, %s82
      %s97 = sphi 0, %s83
      %s101 = sphi 0, %s101
      %s103 = sphi 0, %s101
      %s104 = sphi 0, %s103
      %s118 = sphi 0, %s104
      %s122 = sphi 0, %s122
      %s124 = sphi 0, %s122
      %s125 = sphi 0, %s124
      %s139 = sphi 0, %s125
      %s143 = sphi 0, %s143
      %s145 = sphi 0, %s143
      %s146 = sphi 0, %s145
      %s160 = sphi 0, %s146
      %s164 = sphi 0, %s164
      %s166 = sphi 0, %s164
      %s167 = sphi 0, %s166
      %s181 = sphi 0, %s167
      %s185 = sphi 0, %s185
      %s187 = sphi 0, %s185
      %s188 = sphi 0, %s187
      %s202 = sphi 0, %s188
      %s206 = sphi 0, %s206
      %s208 = sphi 0, %s206
      %s209 = sphi 0, %s208
      %s223 = sphi 0, %s209
      %s227 = sphi 0, %s227
      %s229 = sphi 0, %s227
      %s230 = sphi 0, %s229
      %s244 = sphi 0, %s230
      %s248 = sphi 0, %s248
      %s250 = sphi 0, %s248
      %s251 = sphi 0, %s250
      %s265 = sphi 0, %s251
      %s269 = sphi 0, %s269
      %s271 = sphi 0, %s269
      %s272 = sphi 0, %s271
      %s286 = sphi 0, %s272
      %s290 = sphi 0, %s290
      %s292 = sphi 0, %s290
      %s293 = sphi 0, %s292
      %s307 = sphi 0, %s293
      %s311 = sphi 0, %s311
      %s313 = sphi 0, %s311
      %s314 = sphi 0, %s313
      %s328 = sphi 0, %s314
      %s332 = sphi 0, %s332
      %s334 = sphi 0, %s332
      %s335 = sphi 0, %s334
      %s349 = sphi 0, %s335
      %s353 = sphi 0, %s353
      %s355 = sphi 0, %s353
      %s356 = sphi 0, %s355
      %s370 = sphi 0, %s356
      %s376 = sphi 0, %s378
      %s379 = sphi 0, %s376
      %s380 = sphi 0, %s379
      %s396 = sphi 0, %s380
    $region4: #{mymodel_forward.1} parent=1 // loop_header_branch
      %28 = sbr.rel (%p26) target = $region8
    $region5: #{mymodel_forward.1} parent=1 // loop_body
      %s30 = ssub.s32 %s25, 1
      %s31 = ssub.s32 %s25, 2
      %s32 = sadd.s32 %s25, 1
      %s33 = ssub.s32 %s25, %s32
      %p34 = scmp.eq.s32.totalorder %s33, 0
      %s36 = sadd.s32 %s35, 1
      %s37 = scalar_select %p34, %s35, %s36
      %p40 = pneg %p34
      %p41 = scmp.eq.s32.totalorder %s25, 1
      %p42 = por %p40, %p41
      %p43 = scmp.ne.s32.totalorder %s35, %s38
      %p44 = scmp.eq.s32.totalorder %s25, 0
      %p45 = por %p43, %p44
      %p46 = scmp.ne.s32.totalorder %s35, %s38
      %p47 = scmp.eq.s32.totalorder %s30, 1
      %p48 = por %p46, %p47
      %p49 = scmp.ne.s32.totalorder %s38, %s39
      %p50 = scmp.eq.s32.totalorder %s30, 0
      %p51 = por %p49, %p50
      %p52 = scmp.ne.s32.totalorder %s38, %s39
      %p53 = scmp.eq.s32.totalorder %s31, 1
      %p54 = por %p52, %p53
      %p56 = scmp.ne.s32.totalorder %s39, %s55
      %p57 = scmp.eq.s32.totalorder %s31, 0
      %p58 = por %p56, %p57
      %s60 = sadd.s32 %s59, 1
      %p63 = scmp.eq.s32.totalorder %s25, 1
      %p64 = scmp.ne.s32.totalorder %s59, %s61
      %p65 = scmp.eq.s32.totalorder %s25, 0
      %p66 = por %p64, %p65
      %p67 = scmp.ne.s32.totalorder %s59, %s61
      %p68 = scmp.eq.s32.totalorder %s30, 1
      %p69 = por %p67, %p68
      %p70 = scmp.ne.s32.totalorder %s61, %s62
      %p71 = scmp.eq.s32.totalorder %s30, 0
      %p72 = por %p70, %p71
      %p73 = scmp.ne.s32.totalorder %s61, %s62
      %p74 = scmp.eq.s32.totalorder %s31, 1
      %p75 = por %p73, %p74
      %p77 = scmp.ne.s32.totalorder %s62, %s76
      %p78 = scmp.eq.s32.totalorder %s31, 0
      %p79 = por %p77, %p78
      %s81 = sadd.s32 %s80, 1
      %p84 = scmp.eq.s32.totalorder %s25, 1
      %p85 = scmp.ne.s32.totalorder %s80, %s82
      %p86 = scmp.eq.s32.totalorder %s25, 0
      %p87 = por %p85, %p86
      %p88 = scmp.ne.s32.totalorder %s80, %s82
      %p89 = scmp.eq.s32.totalorder %s30, 1
      %p90 = por %p88, %p89
      %p91 = scmp.ne.s32.totalorder %s82, %s83
      %p92 = scmp.eq.s32.totalorder %s30, 0
      %p93 = por %p91, %p92
      %p94 = scmp.ne.s32.totalorder %s82, %s83
      %p95 = scmp.eq.s32.totalorder %s31, 1
      %p96 = por %p94, %p95
      %p98 = scmp.ne.s32.totalorder %s83, %s97
      %p99 = scmp.eq.s32.totalorder %s31, 0
      %p100 = por %p98, %p99
      %s102 = sadd.s32 %s101, 1
      %p105 = scmp.eq.s32.totalorder %s25, 1
      %p106 = scmp.ne.s32.totalorder %s101, %s103
      %p107 = scmp.eq.s32.totalorder %s25, 0
      %p108 = por %p106, %p107
      %p109 = scmp.ne.s32.totalorder %s101, %s103
      %p110 = scmp.eq.s32.totalorder %s30, 1
      %p111 = por %p109, %p110
      %p112 = scmp.ne.s32.totalorder %s103, %s104
      %p113 = scmp.eq.s32.totalorder %s30, 0
      %p114 = por %p112, %p113
      %p115 = scmp.ne.s32.totalorder %s103, %s104
      %p116 = scmp.eq.s32.totalorder %s31, 1
      %p117 = por %p115, %p116
      %p119 = scmp.ne.s32.totalorder %s104, %s118
      %p120 = scmp.eq.s32.totalorder %s31, 0
      %p121 = por %p119, %p120
      %s123 = sadd.s32 %s122, 1
      %p126 = scmp.eq.s32.totalorder %s25, 1
      %p127 = scmp.ne.s32.totalorder %s122, %s124
      %p128 = scmp.eq.s32.totalorder %s25, 0
      %p129 = por %p127, %p128
      %p130 = scmp.ne.s32.totalorder %s122, %s124
      %p131 = scmp.eq.s32.totalorder %s30, 1
      %p132 = por %p130, %p131
      %p133 = scmp.ne.s32.totalorder %s124, %s125
      %p134 = scmp.eq.s32.totalorder %s30, 0
      %p135 = por %p133, %p134
      %p136 = scmp.ne.s32.totalorder %s124, %s125
      %p137 = scmp.eq.s32.totalorder %s31, 1
      %p138 = por %p136, %p137
      %p140 = scmp.ne.s32.totalorder %s125, %s139
      %p141 = scmp.eq.s32.totalorder %s31, 0
      %p142 = por %p140, %p141
      %s144 = sadd.s32 %s143, 1
      %p147 = scmp.eq.s32.totalorder %s25, 1
      %p148 = scmp.ne.s32.totalorder %s143, %s145
      %p149 = scmp.eq.s32.totalorder %s25, 0
      %p150 = por %p148, %p149
      %p151 = scmp.ne.s32.totalorder %s143, %s145
      %p152 = scmp.eq.s32.totalorder %s30, 1
      %p153 = por %p151, %p152
      %p154 = scmp.ne.s32.totalorder %s145, %s146
      %p155 = scmp.eq.s32.totalorder %s30, 0
      %p156 = por %p154, %p155
      %p157 = scmp.ne.s32.totalorder %s145, %s146
      %p158 = scmp.eq.s32.totalorder %s31, 1
      %p159 = por %p157, %p158
      %p161 = scmp.ne.s32.totalorder %s146, %s160
      %p162 = scmp.eq.s32.totalorder %s31, 0
      %p163 = por %p161, %p162
      %s165 = sadd.s32 %s164, 1
      %p168 = scmp.eq.s32.totalorder %s25, 1
      %p169 = scmp.ne.s32.totalorder %s164, %s166
      %p170 = scmp.eq.s32.totalorder %s25, 0
      %p171 = por %p169, %p170
      %p172 = scmp.ne.s32.totalorder %s164, %s166
      %p173 = scmp.eq.s32.totalorder %s30, 1
      %p174 = por %p172, %p173
      %p175 = scmp.ne.s32.totalorder %s166, %s167
      %p176 = scmp.eq.s32.totalorder %s30, 0
      %p177 = por %p175, %p176
      %p178 = scmp.ne.s32.totalorder %s166, %s167
      %p179 = scmp.eq.s32.totalorder %s31, 1
      %p180 = por %p178, %p179
      %p182 = scmp.ne.s32.totalorder %s167, %s181
      %p183 = scmp.eq.s32.totalorder %s31, 0
      %p184 = por %p182, %p183
      %s186 = sadd.s32 %s185, 1
      %p189 = scmp.eq.s32.totalorder %s25, 1
      %p190 = scmp.ne.s32.totalorder %s185, %s187
      %p191 = scmp.eq.s32.totalorder %s25, 0
      %p192 = por %p190, %p191
      %p193 = scmp.ne.s32.totalorder %s185, %s187
      %p194 = scmp.eq.s32.totalorder %s30, 1
      %p195 = por %p193, %p194
      %p196 = scmp.ne.s32.totalorder %s187, %s188
      %p197 = scmp.eq.s32.totalorder %s30, 0
      %p198 = por %p196, %p197
      %p199 = scmp.ne.s32.totalorder %s187, %s188
      %p200 = scmp.eq.s32.totalorder %s31, 1
      %p201 = por %p199, %p200
      %p203 = scmp.ne.s32.totalorder %s188, %s202
      %p204 = scmp.eq.s32.totalorder %s31, 0
      %p205 = por %p203, %p204
      %s207 = sadd.s32 %s206, 1
      %p210 = scmp.eq.s32.totalorder %s25, 1
      %p211 = scmp.ne.s32.totalorder %s206, %s208
      %p212 = scmp.eq.s32.totalorder %s25, 0
      %p213 = por %p211, %p212
      %p214 = scmp.ne.s32.totalorder %s206, %s208
      %p215 = scmp.eq.s32.totalorder %s30, 1
      %p216 = por %p214, %p215
      %p217 = scmp.ne.s32.totalorder %s208, %s209
      %p218 = scmp.eq.s32.totalorder %s30, 0
      %p219 = por %p217, %p218
      %p220 = scmp.ne.s32.totalorder %s208, %s209
      %p221 = scmp.eq.s32.totalorder %s31, 1
      %p222 = por %p220, %p221
      %p224 = scmp.ne.s32.totalorder %s209, %s223
      %p225 = scmp.eq.s32.totalorder %s31, 0
      %p226 = por %p224, %p225
      %s228 = sadd.s32 %s227, 1
      %p231 = scmp.eq.s32.totalorder %s25, 1
      %p232 = scmp.ne.s32.totalorder %s227, %s229
      %p233 = scmp.eq.s32.totalorder %s25, 0
      %p234 = por %p232, %p233
      %p235 = scmp.ne.s32.totalorder %s227, %s229
      %p236 = scmp.eq.s32.totalorder %s30, 1
      %p237 = por %p235, %p236
      %p238 = scmp.ne.s32.totalorder %s229, %s230
      %p239 = scmp.eq.s32.totalorder %s30, 0
      %p240 = por %p238, %p239
      %p241 = scmp.ne.s32.totalorder %s229, %s230
      %p242 = scmp.eq.s32.totalorder %s31, 1
      %p243 = por %p241, %p242
      %p245 = scmp.ne.s32.totalorder %s230, %s244
      %p246 = scmp.eq.s32.totalorder %s31, 0
      %p247 = por %p245, %p246
      %s249 = sadd.s32 %s248, 1
      %p252 = scmp.eq.s32.totalorder %s25, 1
      %p253 = scmp.ne.s32.totalorder %s248, %s250
      %p254 = scmp.eq.s32.totalorder %s25, 0
      %p255 = por %p253, %p254
      %p256 = scmp.ne.s32.totalorder %s248, %s250
      %p257 = scmp.eq.s32.totalorder %s30, 1
      %p258 = por %p256, %p257
      %p259 = scmp.ne.s32.totalorder %s250, %s251
      %p260 = scmp.eq.s32.totalorder %s30, 0
      %p261 = por %p259, %p260
      %p262 = scmp.ne.s32.totalorder %s250, %s251
      %p263 = scmp.eq.s32.totalorder %s31, 1
      %p264 = por %p262, %p263
      %p266 = scmp.ne.s32.totalorder %s251, %s265
      %p267 = scmp.eq.s32.totalorder %s31, 0
      %p268 = por %p266, %p267
      %s270 = sadd.s32 %s269, 1
      %p273 = scmp.eq.s32.totalorder %s25, 1
      %p274 = scmp.ne.s32.totalorder %s269, %s271
      %p275 = scmp.eq.s32.totalorder %s25, 0
      %p276 = por %p274, %p275
      %p277 = scmp.ne.s32.totalorder %s269, %s271
      %p278 = scmp.eq.s32.totalorder %s30, 1
      %p279 = por %p277, %p278
      %p280 = scmp.ne.s32.totalorder %s271, %s272
      %p281 = scmp.eq.s32.totalorder %s30, 0
      %p282 = por %p280, %p281
      %p283 = scmp.ne.s32.totalorder %s271, %s272
      %p284 = scmp.eq.s32.totalorder %s31, 1
      %p285 = por %p283, %p284
      %p287 = scmp.ne.s32.totalorder %s272, %s286
      %p288 = scmp.eq.s32.totalorder %s31, 0
      %p289 = por %p287, %p288
      %s291 = sadd.s32 %s290, 1
      %p294 = scmp.eq.s32.totalorder %s25, 1
      %p295 = scmp.ne.s32.totalorder %s290, %s292
      %p296 = scmp.eq.s32.totalorder %s25, 0
      %p297 = por %p295, %p296
      %p298 = scmp.ne.s32.totalorder %s290, %s292
      %p299 = scmp.eq.s32.totalorder %s30, 1
      %p300 = por %p298, %p299
      %p301 = scmp.ne.s32.totalorder %s292, %s293
      %p302 = scmp.eq.s32.totalorder %s30, 0
      %p303 = por %p301, %p302
      %p304 = scmp.ne.s32.totalorder %s292, %s293
      %p305 = scmp.eq.s32.totalorder %s31, 1
      %p306 = por %p304, %p305
      %p308 = scmp.ne.s32.totalorder %s293, %s307
      %p309 = scmp.eq.s32.totalorder %s31, 0
      %p310 = por %p308, %p309
      %s312 = sadd.s32 %s311, 1
      %p315 = scmp.eq.s32.totalorder %s25, 1
      %p316 = scmp.ne.s32.totalorder %s311, %s313
      %p317 = scmp.eq.s32.totalorder %s25, 0
      %p318 = por %p316, %p317
      %p319 = scmp.ne.s32.totalorder %s311, %s313
      %p320 = scmp.eq.s32.totalorder %s30, 1
      %p321 = por %p319, %p320
      %p322 = scmp.ne.s32.totalorder %s313, %s314
      %p323 = scmp.eq.s32.totalorder %s30, 0
      %p324 = por %p322, %p323
      %p325 = scmp.ne.s32.totalorder %s313, %s314
      %p326 = scmp.eq.s32.totalorder %s31, 1
      %p327 = por %p325, %p326
      %p329 = scmp.ne.s32.totalorder %s314, %s328
      %p330 = scmp.eq.s32.totalorder %s31, 0
      %p331 = por %p329, %p330
      %s333 = sadd.s32 %s332, 1
      %p336 = scmp.eq.s32.totalorder %s25, 1
      %p337 = scmp.ne.s32.totalorder %s332, %s334
      %p338 = scmp.eq.s32.totalorder %s25, 0
      %p339 = por %p337, %p338
      %p340 = scmp.ne.s32.totalorder %s332, %s334
      %p341 = scmp.eq.s32.totalorder %s30, 1
      %p342 = por %p340, %p341
      %p343 = scmp.ne.s32.totalorder %s334, %s335
      %p344 = scmp.eq.s32.totalorder %s30, 0
      %p345 = por %p343, %p344
      %p346 = scmp.ne.s32.totalorder %s334, %s335
      %p347 = scmp.eq.s32.totalorder %s31, 1
      %p348 = por %p346, %p347
      %p350 = scmp.ne.s32.totalorder %s335, %s349
      %p351 = scmp.eq.s32.totalorder %s31, 0
      %p352 = por %p350, %p351
      %s354 = sadd.s32 %s353, 1
      %p357 = scmp.eq.s32.totalorder %s25, 1
      %p358 = scmp.ne.s32.totalorder %s353, %s355
      %p359 = scmp.eq.s32.totalorder %s25, 0
      %p360 = por %p358, %p359
      %p361 = scmp.ne.s32.totalorder %s353, %s355
      %p362 = scmp.eq.s32.totalorder %s30, 1
      %p363 = por %p361, %p362
      %p364 = scmp.ne.s32.totalorder %s355, %s356
      %p365 = scmp.eq.s32.totalorder %s30, 0
      %p366 = por %p364, %p365
      %p367 = scmp.ne.s32.totalorder %s355, %s356
      %p368 = scmp.eq.s32.totalorder %s31, 1
      %p369 = por %p367, %p368
      %p371 = scmp.ne.s32.totalorder %s356, %s370
      %p372 = scmp.eq.s32.totalorder %s31, 0
      %p373 = por %p371, %p372
      %s374 = ssub.s32 %s25, %s32
      %p375 = scmp.eq.s32.totalorder %s374, 0
      %s377 = sadd.s32 %s376, 1
      %s378 = scalar_select %p375, %s376, %s377
      %p381 = pneg %p375
      %p382 = scmp.eq.s32.totalorder %s25, 1
      %p383 = por %p381, %p382
      %p384 = scmp.ne.s32.totalorder %s376, %s379
      %p385 = scmp.eq.s32.totalorder %s25, 0
      %p386 = por %p384, %p385
      %p387 = scmp.ne.s32.totalorder %s376, %s379
      %p388 = scmp.eq.s32.totalorder %s30, 1
      %p389 = por %p387, %p388
      %p390 = scmp.ne.s32.totalorder %s379, %s380
      %p391 = scmp.eq.s32.totalorder %s30, 0
      %p392 = por %p390, %p391
      %p393 = scmp.ne.s32.totalorder %s379, %s380
      %p394 = scmp.eq.s32.totalorder %s31, 1
      %p395 = por %p393, %p394
      %p397 = scmp.ne.s32.totalorder %s380, %s396
      %p398 = scmp.eq.s32.totalorder %s31, 0
      %p399 = por %p397, %p398
      %p400 = scmp.le.s32.totalorder 1, %s25
      %p401 = scmp.lt.s32.totalorder %s25, 3
      %p402 = pnand %p400, %p401
      %p403 = pneg %p402
      // Predicated region
      $region9: #{mymodel_forward.1} parent=5 // pred_check
        _
      $region10: #{mymodel_forward.1} parent=5 // pred_check_branch
        %405 = sbr.rel (%p402) target = $region12
      $region11: #{mymodel_forward.1} parent=5 // pred_region
        %s406 = ssub.s32 %s25, 1
        // Predicated region
        $region13: #{mymodel_forward.1} parent=11 // pred_check
          %p407 = pneg %p72
        $region14: #{mymodel_forward.1} parent=11 // pred_check_branch
          %409 = sbr.rel (%p407) target = $region16
        $region15: #{mymodel_forward.1} parent=11 // pred_region
          _
        $region16: #{mymodel_forward.1} parent=11 // pred_fallthru
          _
        // Predicated region
        $region17: #{mymodel_forward.1} parent=11 // pred_check
          %p410 = pneg %p93
        $region18: #{mymodel_forward.1} parent=11 // pred_check_branch
          %412 = sbr.rel (%p410) target = $region20
        $region19: #{mymodel_forward.1} parent=11 // pred_region
          _
        $region20: #{mymodel_forward.1} parent=11 // pred_fallthru
          _
        // Predicated region
        $region21: #{mymodel_forward.1} parent=11 // pred_check
          %p413 = pneg %p114
        $region22: #{mymodel_forward.1} parent=11 // pred_check_branch
          %415 = sbr.rel (%p413) target = $region24
        $region23: #{mymodel_forward.1} parent=11 // pred_region
          _
        $region24: #{mymodel_forward.1} parent=11 // pred_fallthru
          _
        // Predicated region
        $region25: #{mymodel_forward.1} parent=11 // pred_check
          %p416 = pneg %p135
        $region26: #{mymodel_forward.1} parent=11 // pred_check_branch
          %418 = sbr.rel (%p416) target = $region28
        $region27: #{mymodel_forward.1} parent=11 // pred_region
          _
        $region28: #{mymodel_forward.1} parent=11 // pred_fallthru
          _
        // Predicated region
        $region29: #{mymodel_forward.1} parent=11 // pred_check
          %p419 = pneg %p156
        $region30: #{mymodel_forward.1} parent=11 // pred_check_branch
          %421 = sbr.rel (%p419) target = $region32
        $region31: #{mymodel_forward.1} parent=11 // pred_region
          _
        $region32: #{mymodel_forward.1} parent=11 // pred_fallthru
          _
        // Predicated region
        $region33: #{mymodel_forward.1} parent=11 // pred_check
          %p422 = pneg %p177
        $region34: #{mymodel_forward.1} parent=11 // pred_check_branch
          %424 = sbr.rel (%p422) target = $region36
        $region35: #{mymodel_forward.1} parent=11 // pred_region
          _
        $region36: #{mymodel_forward.1} parent=11 // pred_fallthru
          _
        // Predicated region
        $region37: #{mymodel_forward.1} parent=11 // pred_check
          %p425 = pneg %p198
        $region38: #{mymodel_forward.1} parent=11 // pred_check_branch
          %427 = sbr.rel (%p425) target = $region40
        $region39: #{mymodel_forward.1} parent=11 // pred_region
          _
        $region40: #{mymodel_forward.1} parent=11 // pred_fallthru
          _
        // Predicated region
        $region41: #{mymodel_forward.1} parent=11 // pred_check
          %p428 = pneg %p219
        $region42: #{mymodel_forward.1} parent=11 // pred_check_branch
          %430 = sbr.rel (%p428) target = $region44
        $region43: #{mymodel_forward.1} parent=11 // pred_region
          _
        $region44: #{mymodel_forward.1} parent=11 // pred_fallthru
          _
        // Predicated region
        $region45: #{mymodel_forward.1} parent=11 // pred_check
          %p431 = pneg %p240
        $region46: #{mymodel_forward.1} parent=11 // pred_check_branch
          %433 = sbr.rel (%p431) target = $region48
        $region47: #{mymodel_forward.1} parent=11 // pred_region
          _
        $region48: #{mymodel_forward.1} parent=11 // pred_fallthru
          _
        // Predicated region
        $region49: #{mymodel_forward.1} parent=11 // pred_check
          %p434 = pneg %p261
        $region50: #{mymodel_forward.1} parent=11 // pred_check_branch
          %436 = sbr.rel (%p434) target = $region52
        $region51: #{mymodel_forward.1} parent=11 // pred_region
          _
        $region52: #{mymodel_forward.1} parent=11 // pred_fallthru
          _
        // Predicated region
        $region53: #{mymodel_forward.1} parent=11 // pred_check
          %p437 = pneg %p282
        $region54: #{mymodel_forward.1} parent=11 // pred_check_branch
          %439 = sbr.rel (%p437) target = $region56
        $region55: #{mymodel_forward.1} parent=11 // pred_region
          _
        $region56: #{mymodel_forward.1} parent=11 // pred_fallthru
          _
        // Predicated region
        $region57: #{mymodel_forward.1} parent=11 // pred_check
          %p440 = pneg %p303
        $region58: #{mymodel_forward.1} parent=11 // pred_check_branch
          %442 = sbr.rel (%p440) target = $region60
        $region59: #{mymodel_forward.1} parent=11 // pred_region
          _
        $region60: #{mymodel_forward.1} parent=11 // pred_fallthru
          _
        // Predicated region
        $region61: #{mymodel_forward.1} parent=11 // pred_check
          %p443 = pneg %p324
        $region62: #{mymodel_forward.1} parent=11 // pred_check_branch
          %445 = sbr.rel (%p443) target = $region64
        $region63: #{mymodel_forward.1} parent=11 // pred_region
          _
        $region64: #{mymodel_forward.1} parent=11 // pred_fallthru
          _
        // Predicated region
        $region65: #{mymodel_forward.1} parent=11 // pred_check
          %p446 = pneg %p345
        $region66: #{mymodel_forward.1} parent=11 // pred_check_branch
          %448 = sbr.rel (%p446) target = $region68
        $region67: #{mymodel_forward.1} parent=11 // pred_region
          _
        $region68: #{mymodel_forward.1} parent=11 // pred_fallthru
          _
        // Predicated region
        $region69: #{mymodel_forward.1} parent=11 // pred_check
          %p449 = pneg %p366
        $region70: #{mymodel_forward.1} parent=11 // pred_check_branch
          %451 = sbr.rel (%p449) target = $region72
        $region71: #{mymodel_forward.1} parent=11 // pred_region
          _
        $region72: #{mymodel_forward.1} parent=11 // pred_fallthru
          _
      $region12: #{mymodel_forward.1} parent=5 // pred_fallthru
        _
      %p452 = scmp.lt.s32.totalorder %s25, 2
      // Predicated region
      $region73: #{mymodel_forward.1} parent=5 // pred_check
        %p453 = pneg %p452
      $region74: #{mymodel_forward.1} parent=5 // pred_check_branch
        %455 = sbr.rel (%p453) target = $region76
      $region75: #{mymodel_forward.1} parent=5 // pred_region
        // Predicated region
        $region77: #{mymodel_forward.1} parent=75 // pred_check
          %p456 = pneg %p45
        $region78: #{mymodel_forward.1} parent=75 // pred_check_branch
          %458 = sbr.rel (%p456) target = $region80
        $region79: #{mymodel_forward.1} parent=75 // pred_region
          %p459 = scmp.lt.s32.totalorder %s25, 1
          %s460 = scalar_select %p459, %s25, 1
          %s461 = smul.addr %s460, 8
          %s462 = scalar_lea.vmem %s0, %s461
        $region80: #{mymodel_forward.1} parent=75 // pred_fallthru
          _
      $region76: #{mymodel_forward.1} parent=5 // pred_fallthru
        _
      %p463 = scmp.le.s32.totalorder 1, %s25
      %p464 = scmp.lt.s32.totalorder %s25, 3
      %p465 = pnand %p463, %p464
      %p466 = pneg %p465
      // Predicated region
      $region81: #{mymodel_forward.1} parent=5 // pred_check
        _
      $region82: #{mymodel_forward.1} parent=5 // pred_check_branch
        %468 = sbr.rel (%p465) target = $region84
      $region83: #{mymodel_forward.1} parent=5 // pred_region
        %s469 = ssub.s32 %s25, 1
        %p470 = scmp.lt.s32.totalorder %s30, 1
        %s471 = scalar_select %p470, %s30, 1
        %s472 = smul.addr %s471, 8
        %s473 = scalar_lea.vmem %s0, %s472
        %p474 = pneg %p51
        %p475 = pneg %p48
        %p476 = pneg %p72
        %p477 = pneg %p69
        %p478 = pneg %p93
        %p479 = pneg %p90
        %p480 = pneg %p114
        %p481 = pneg %p111
        %p482 = pneg %p135
        %p483 = pneg %p132
        %p484 = pneg %p156
        %p485 = pneg %p153
        %p486 = pneg %p177
        %p487 = pneg %p174
        %p488 = pneg %p198
        %p489 = pneg %p195
        %p490 = pneg %p219
        %p491 = pneg %p216
        %p492 = pneg %p240
        %p493 = pneg %p237
        %p494 = pneg %p261
        %p495 = pneg %p258
        %p496 = pneg %p282
        %p497 = pneg %p279
        %p498 = pneg %p303
        %p499 = pneg %p300
        %p500 = pneg %p324
        %p501 = pneg %p321
        %p502 = pneg %p345
        %p503 = pneg %p342
        %p504 = pneg %p366
        %p505 = pneg %p363
        %p506 = pneg %p392
        %p507 = pneg %p389
        %s508 = sand.u32 %s379, 1
        %s509 = scalar_lea.sflag [#allocation3], %s508
        %s510 = sand.u32 %s379, 1
        %s511 = scalar_lea.vmem [#allocation2], %s510
        %p512 = scmp.lt.s32.totalorder %s30, 1
        %s513 = scalar_select %p512, %s30, 1
        %s514 = smul.addr %s513, 8
        %s515 = scalar_lea.vmem %s0, %s514
        %v516 = vld [vmem:[%s515] sm:$0xff]
        %v517 = vld [vmem:[%s1] sm:$0xff]
        %v518 = vld [vmem:[%s1 + $0x8] sm:$0x3]
        %v519 = vld [vmem:[%s2] sm:$0x1]
        %v521 = vlaneseq
        %v522 = vshrl.u32 %v521, 7
        %v523 = vsub.s32 0, %v522
        %v524 = vrot.slane %v519, %v523
        %vm526 = vcmask 80896
        %v528 = vsel %vm526, %v516, 0
        %vm530 = vcmask 1041408
        %v532 = vsel %vm530, %v518, 0
        %534 = vmatprep.subr.mxu0 0.0
        %535 = vmatpush1.msra.mxu0 %v517
        %536 = vmatprep.subr.mxu0 0.0
        %537 = vmatpush1.msra.mxu0 %v532
        %538 = vmatprep.subr.mxu0 0.0
        %539 = vmatpush1.msra.mxu0 0.0
        %540 = vmatprep.subr.mxu0 0.0
        %541 = vmatpush1.msra.mxu0 0.0
        %542 = vmatprep.subr.mxu0 0.0
        %543 = vmatpush1.msra.mxu0 0.0
        %544 = vmatprep.subr.mxu0 0.0
        %545 = vmatpush1.msra.mxu0 0.0
        %546 = vmatprep.subr.mxu0 0.0
        %547 = vmatpush1.msra.mxu0 0.0
        %548 = vmatprep.subr.mxu0 0.0
        %549 = vmatpush1.msra.mxu0 0.0
        %550 = vmatprep.subr.mxu0 0.0
        %551 = vmatpush1.msra.mxu0 0.0
        %552 = vmatprep.subr.mxu0 0.0
        %553 = vmatpush1.msra.mxu0 0.0
        %554 = vmatprep.subr.mxu0 0.0
        %555 = vmatpush1.msra.mxu0 0.0
        %556 = vmatprep.subr.mxu0 0.0
        %557 = vmatpush1.msra.mxu0 0.0
        %558 = vmatprep.subr.mxu0 0.0
        %559 = vmatpush1.msra.mxu0 0.0
        %560 = vmatprep.subr.mxu0 0.0
        %561 = vmatpush1.msra.mxu0 0.0
        %562 = vmatprep.subr.mxu0 0.0
        %563 = vmatpush1.msra.mxu0 0.0
        %564 = vmatprep.subr.mxu0 0.0
        %565 = vmatpush1.msra.mxu0 0.0
        %566 = vmatprep.subr.mxu0 0.0
        %567 = vmatpush1.msra.mxu0 0.0
        %568 = vmatprep.subr.mxu0 0.0
        %569 = vmatpush1.msra.mxu0 0.0
        %570 = vmatprep.subr.mxu0 0.0
        %571 = vmatpush1.msra.mxu0 0.0
        %572 = vmatprep.subr.mxu0 0.0
        %573 = vmatpush1.msra.mxu0 0.0
        %574 = vmatprep.subr.mxu0 0.0
        %575 = vmatpush1.msra.mxu0 0.0
        %576 = vmatprep.subr.mxu0 0.0
        %577 = vmatpush1.msra.mxu0 0.0
        %578 = vmatprep.subr.mxu0 0.0
        %579 = vmatpush1.msra.mxu0 0.0
        %580 = vmatprep.subr.mxu0 0.0
        %581 = vmatpush1.msra.mxu0 0.0
        %582 = vmatprep.subr.mxu0 0.0
        %583 = vmatpush1.msra.mxu0 0.0
        %584 = vmatprep.subr.mxu0 0.0
        %585 = vmatpush1.msra.mxu0 0.0
        %586 = vmatprep.subr.mxu0 0.0
        %587 = vmatpush1.msra.mxu0 0.0
        %588 = vmatprep.subr.mxu0 0.0
        %589 = vmatpush1.msra.mxu0 0.0
        %590 = vmatprep.subr.mxu0 0.0
        %591 = vmatpush1.msra.mxu0 0.0
        %592 = vmatprep.subr.mxu0 0.0
        %593 = vmatpush1.msra.mxu0 0.0
        %594 = vmatprep.subr.mxu0 0.0
        %595 = vmatpush1.msra.mxu0 0.0
        %596 = vmatprep.subr.mxu0 0.0
        %597 = vmatpush1.msra.mxu0 0.0
        %598 = vmatprep.mubr.f32.mxu0 0.0
        %599 = vmatmul.mubr.f32.gmra.mrb[0].mxu0 %v528
        %v600 = vpop.f32.mrb[0].mxu0
        %v601 = vadd.f32 %v524, %v600
        %v602 = vpop.f32.mrb[0].mxu0
        %603 = vdwg.mxu0
        %v604 = vld [vmem:[%s3] sm:$0x1]
        %v605 = vld [vmem:[%s4] sm:$0x1]
        %vm606 = vcmask 261120
        %v607 = vsel %vm606, %v601, 0.0
        %608 = vadd.xlane.f32.xlu0 %v607
        %v609 = vpop.xlane.xlu0 %608
        %v610 = vrcp.pop 32.0
        %v611 = vmul.f32 %v609, %v610
        %v612 = vsub.f32 %v601, %v611
        %v613 = vmul.f32 %v612, %v612
        %v614 = vsel %vm606, %v613, 0.0
        %615 = vadd.xlane.f32.xlu0 %v614
        %v616 = vpop.xlane.xlu0 %615
        %v617 = vmul.f32 %v616, %v610
        %v618 = vadd.f32 %v617, 1e-05
        %v619 = vrsqrt.pop %v618
        %v620 = vmul.f32 %v612, %v619
        %v621 = vlaneseq
        %v622 = vshrl.u32 %v621, 7
        %v623 = vsub.s32 0, %v622
        %v624 = vrot.slane %v604, %v623
        %v625 = vmul.f32 %v620, %v624
        %v626 = vlaneseq
        %v627 = vshrl.u32 %v626, 7
        %v628 = vsub.s32 0, %v627
        %v629 = vrot.slane %v605, %v628
        %v630 = vadd.f32 %v625, %v629
        %v631 = vld [vmem:[%s5] sm:$0xff]
        %v632 = vld [vmem:[%s5 + $0x8] sm:$0xff]
        %v633 = vld [vmem:[%s5 + $0x10] sm:$0xff]
        %v634 = vld [vmem:[%s5 + $0x18] sm:$0xff]
        %v635 = vld [vmem:[%s5 + $0x20] sm:$0xff]
        %v636 = vld [vmem:[%s5 + $0x28] sm:$0xff]
        %v637 = vld [vmem:[%s5 + $0x30] sm:$0xff]
        %v638 = vld [vmem:[%s5 + $0x38] sm:$0xff]
        %v640 = vsel %vm606, %v630, 0
        %642 = vmatprep.subr.mxu0 %v632
        %643 = vmatpush1.msra.mxu0 %v631
        %644 = vmatprep.subr.mxu0 %v634
        %645 = vmatpush1.msra.mxu0 %v633
        %646 = vmatprep.subr.mxu0 %v636
        %647 = vmatpush1.msra.mxu0 %v635
        %648 = vmatprep.subr.mxu0 %v638
        %649 = vmatpush1.msra.mxu0 %v637
        %650 = vmatprep.subr.mxu0 0.0
        %651 = vmatpush1.msra.mxu0 0.0
        %652 = vmatprep.subr.mxu0 0.0
        %653 = vmatpush1.msra.mxu0 0.0
        %654 = vmatprep.subr.mxu0 0.0
        %655 = vmatpush1.msra.mxu0 0.0
        %656 = vmatprep.subr.mxu0 0.0
        %657 = vmatpush1.msra.mxu0 0.0
        %658 = vmatprep.subr.mxu0 0.0
        %659 = vmatpush1.msra.mxu0 0.0
        %660 = vmatprep.subr.mxu0 0.0
        %661 = vmatpush1.msra.mxu0 0.0
        %662 = vmatprep.subr.mxu0 0.0
        %663 = vmatpush1.msra.mxu0 0.0
        %664 = vmatprep.subr.mxu0 0.0
        %665 = vmatpush1.msra.mxu0 0.0
        %666 = vmatprep.subr.mxu0 0.0
        %667 = vmatpush1.msra.mxu0 0.0
        %668 = vmatprep.subr.mxu0 0.0
        %669 = vmatpush1.msra.mxu0 0.0
        %670 = vmatprep.subr.mxu0 0.0
        %671 = vmatpush1.msra.mxu0 0.0
        %672 = vmatprep.subr.mxu0 0.0
        %673 = vmatpush1.msra.mxu0 0.0
        %674 = vmatprep.subr.mxu0 0.0
        %675 = vmatpush1.msra.mxu0 0.0
        %676 = vmatprep.subr.mxu0 0.0
        %677 = vmatpush1.msra.mxu0 0.0
        %678 = vmatprep.subr.mxu0 0.0
        %679 = vmatpush1.msra.mxu0 0.0
        %680 = vmatprep.subr.mxu0 0.0
        %681 = vmatpush1.msra.mxu0 0.0
        %682 = vmatprep.subr.mxu0 0.0
        %683 = vmatpush1.msra.mxu0 0.0
        %684 = vmatprep.subr.mxu0 0.0
        %685 = vmatpush1.msra.mxu0 0.0
        %686 = vmatprep.subr.mxu0 0.0
        %687 = vmatpush1.msra.mxu0 0.0
        %688 = vmatprep.subr.mxu0 0.0
        %689 = vmatpush1.msra.mxu0 0.0
        %690 = vmatprep.subr.mxu0 0.0
        %691 = vmatpush1.msra.mxu0 0.0
        %692 = vmatprep.subr.mxu0 0.0
        %693 = vmatpush1.msra.mxu0 0.0
        %694 = vmatprep.subr.mxu0 0.0
        %695 = vmatpush1.msra.mxu0 0.0
        %696 = vmatprep.subr.mxu0 0.0
        %697 = vmatpush1.msra.mxu0 0.0
        %698 = vmatprep.subr.mxu0 0.0
        %699 = vmatpush1.msra.mxu0 0.0
        %700 = vmatprep.subr.mxu0 0.0
        %701 = vmatpush1.msra.mxu0 0.0
        %702 = vmatprep.subr.mxu0 0.0
        %703 = vmatpush1.msra.mxu0 0.0
        %704 = vmatprep.subr.mxu0 0.0
        %705 = vmatpush1.msra.mxu0 0.0
        %706 = vmatprep.mubr.f32.mxu0 0.0
        %707 = vmatmul.mubr.f32.gmra.mrb[0].mxu0 %v640
        %v708 = vpop.f32.mrb[0].mxu0
        %v709 = vadd.f32 0.0, %v708
        %v710 = vpop.f32.mrb[0].mxu0
        %v711 = vadd.f32 0.0, %v710
        %712 = vdwg.mxu0
        %v713 = vld [vmem:[%s6] sm:$0xff]
        %v714 = vld [vmem:[%s6 + $0x8] sm:$0xff]
        %v715 = vld [vmem:[%s6 + $0x10] sm:$0xff]
        %v716 = vld [vmem:[%s6 + $0x18] sm:$0xff]
        %v717 = vld [vmem:[%s6 + $0x20] sm:$0xff]
        %v718 = vld [vmem:[%s6 + $0x28] sm:$0xff]
        %v719 = vld [vmem:[%s6 + $0x30] sm:$0xff]
        %v720 = vld [vmem:[%s6 + $0x38] sm:$0xff]
        %722 = vrot.lane.b32.xlu0 %v709, 64
        %v723 = vpop.permute.xlu0 %722
        %vm724 = vcmask 130048
        %v725 = vsel %vm724, %v709, 0
        %v727 = vsel %vm724, %v723, 0
        %729 = vmatprep.subr.mxu0 0.0
        %730 = vmatpush1.xpose.msra.mxu0 %v727
        %731 = vmatprep.subr.mxu0 0.0
        %732 = vmatpush1.xpose.msra.mxu0 0.0
        %733 = vmatprep.subr.mxu0 0.0
        %734 = vmatpush1.xpose.msra.mxu0 0.0
        %735 = vmatprep.subr.mxu0 0.0
        %736 = vmatpush1.xpose.msra.mxu0 0.0
        %737 = vmatprep.subr.mxu0 0.0
        %738 = vmatpush1.xpose.msra.mxu0 0.0
        %739 = vmatprep.subr.mxu0 0.0
        %740 = vmatpush1.xpose.msra.mxu0 0.0
        %741 = vmatprep.subr.mxu0 0.0
        %742 = vmatpush1.xpose.msra.mxu0 0.0
        %743 = vmatprep.subr.mxu0 0.0
        %744 = vmatpush1.xpose.msra.mxu0 0.0
        %745 = vmatprep.subr.mxu0 0.0
        %746 = vmatpush1.xpose.msra.mxu0 0.0
        %747 = vmatprep.subr.mxu0 0.0
        %748 = vmatpush1.xpose.msra.mxu0 0.0
        %749 = vmatprep.subr.mxu0 0.0
        %750 = vmatpush1.xpose.msra.mxu0 0.0
        %751 = vmatprep.subr.mxu0 0.0
        %752 = vmatpush1.xpose.msra.mxu0 0.0
        %753 = vmatprep.subr.mxu0 0.0
        %754 = vmatpush1.xpose.msra.mxu0 0.0
        %755 = vmatprep.subr.mxu0 0.0
        %756 = vmatpush1.xpose.msra.mxu0 0.0
        %757 = vmatprep.subr.mxu0 0.0
        %758 = vmatpush1.xpose.msra.mxu0 0.0
        %759 = vmatprep.subr.mxu0 0.0
        %760 = vmatpush1.xpose.msra.mxu0 0.0
        %761 = vmatprep.subr.mxu0 0.0
        %762 = vmatpush1.xpose.msra.mxu0 0.0
        %763 = vmatprep.subr.mxu0 0.0
        %764 = vmatpush1.xpose.msra.mxu0 0.0
        %765 = vmatprep.subr.mxu0 0.0
        %766 = vmatpush1.xpose.msra.mxu0 0.0
        %767 = vmatprep.subr.mxu0 0.0
        %768 = vmatpush1.xpose.msra.mxu0 0.0
        %769 = vmatprep.subr.mxu0 0.0
        %770 = vmatpush1.xpose.msra.mxu0 0.0
        %771 = vmatprep.subr.mxu0 0.0
        %772 = vmatpush1.xpose.msra.mxu0 0.0
        %773 = vmatprep.subr.mxu0 0.0
        %774 = vmatpush1.xpose.msra.mxu0 0.0
        %775 = vmatprep.subr.mxu0 0.0
        %776 = vmatpush1.xpose.msra.mxu0 0.0
        %777 = vmatprep.subr.mxu0 0.0
        %778 = vmatpush1.xpose.msra.mxu0 0.0
        %779 = vmatprep.subr.mxu0 0.0
        %780 = vmatpush1.xpose.msra.mxu0 0.0
        %781 = vmatprep.subr.mxu0 0.0
        %782 = vmatpush1.xpose.msra.mxu0 0.0
        %783 = vmatprep.subr.mxu0 0.0
        %784 = vmatpush1.xpose.msra.mxu0 0.0
        %785 = vmatprep.subr.mxu0 0.0
        %786 = vmatpush1.xpose.msra.mxu0 0.0
        %787 = vmatprep.subr.mxu0 0.0
        %788 = vmatpush1.xpose.msra.mxu0 0.0
        %789 = vmatprep.subr.mxu0 0.0
        %790 = vmatpush1.xpose.msra.mxu0 0.0
        %791 = vmatprep.subr.mxu0 0.0
        %792 = vmatpush1.xpose.msra.mxu0 0.0
        %793 = vmatprep.mubr.f32.mxu0 0.0
        %794 = vmatmul.mubr.f32.gmra.mrb[0].mxu0 %v725
        %v795 = vpop.f32.mrb[0].mxu0
        %v796 = vadd.f32 0.0, %v795
        %v797 = vpop.f32.mrb[0].mxu0
        %798 = vdwg.mxu0
        %v799 = vmul.f32 %v796, 0.25
        %vm800 = vcmask 64512
        %v801 = vsel %vm800, %v799, -inf
        %802 = vmax.xlane.f32.xlu0 %v801
        %v803 = vpop.xlane.xlu0 %802
        %v804 = vsub.f32 %v799, %v803
        %v805 = vmul.f32 %v804, 1.442695
        %v806 = vpow.pop %v805
        %v807 = vsel %vm800, %v806, 0.0
        %808 = vadd.xlane.f32.xlu0 %v807
        %v809 = vpop.xlane.xlu0 %808
        %v810 = vrcp.pop %v809
        %v811 = vmul.f32 %v806, %v810
        %v813 = vsel %vm800, %v811, 0
        %815 = vmatprep.subr.mxu0 0.0
        %816 = vmatpush1.msra.mxu0 %v711
        %817 = vmatprep.subr.mxu0 0.0
        %818 = vmatpush1.msra.mxu0 0.0
        %819 = vmatprep.subr.mxu0 0.0
        %820 = vmatpush1.msra.mxu0 0.0
        %821 = vmatprep.subr.mxu0 0.0
        %822 = vmatpush1.msra.mxu0 0.0
        %823 = vmatprep.subr.mxu0 0.0
        %824 = vmatpush1.msra.mxu0 0.0
        %825 = vmatprep.subr.mxu0 0.0
        %826 = vmatpush1.msra.mxu0 0.0
        %827 = vmatprep.subr.mxu0 0.0
        %828 = vmatpush1.msra.mxu0 0.0
        %829 = vmatprep.subr.mxu0 0.0
        %830 = vmatpush1.msra.mxu0 0.0
        %831 = vmatprep.subr.mxu0 0.0
        %832 = vmatpush1.msra.mxu0 0.0
        %833 = vmatprep.subr.mxu0 0.0
        %834 = vmatpush1.msra.mxu0 0.0
        %835 = vmatprep.subr.mxu0 0.0
        %836 = vmatpush1.msra.mxu0 0.0
        %837 = vmatprep.subr.mxu0 0.0
        %838 = vmatpush1.msra.mxu0 0.0
        %839 = vmatprep.subr.mxu0 0.0
        %840 = vmatpush1.msra.mxu0 0.0
        %841 = vmatprep.subr.mxu0 0.0
        %842 = vmatpush1.msra.mxu0 0.0
        %843 = vmatprep.subr.mxu0 0.0
        %844 = vmatpush1.msra.mxu0 0.0
        %845 = vmatprep.subr.mxu0 0.0
        %846 = vmatpush1.msra.mxu0 0.0
        %847 = vmatprep.subr.mxu0 0.0
        %848 = vmatpush1.msra.mxu0 0.0
        %849 = vmatprep.subr.mxu0 0.0
        %850 = vmatpush1.msra.mxu0 0.0
        %851 = vmatprep.subr.mxu0 0.0
        %852 = vmatpush1.msra.mxu0 0.0
        %853 = vmatprep.subr.mxu0 0.0
        %854 = vmatpush1.msra.mxu0 0.0
        %855 = vmatprep.subr.mxu0 0.0
        %856 = vmatpush1.msra.mxu0 0.0
        %857 = vmatprep.subr.mxu0 0.0
        %858 = vmatpush1.msra.mxu0 0.0
        %859 = vmatprep.subr.mxu0 0.0
        %860 = vmatpush1.msra.mxu0 0.0
        %861 = vmatprep.subr.mxu0 0.0
        %862 = vmatpush1.msra.mxu0 0.0
        %863 = vmatprep.subr.mxu0 0.0
        %864 = vmatpush1.msra.mxu0 0.0
        %865 = vmatprep.subr.mxu0 0.0
        %866 = vmatpush1.msra.mxu0 0.0
        %867 = vmatprep.subr.mxu0 0.0
        %868 = vmatpush1.msra.mxu0 0.0
        %869 = vmatprep.subr.mxu0 0.0
        %870 = vmatpush1.msra.mxu0 0.0
        %871 = vmatprep.subr.mxu0 0.0
        %872 = vmatpush1.msra.mxu0 0.0
        %873 = vmatprep.subr.mxu0 0.0
        %874 = vmatpush1.msra.mxu0 0.0
        %875 = vmatprep.subr.mxu0 0.0
        %876 = vmatpush1.msra.mxu0 0.0
        %877 = vmatprep.subr.mxu0 0.0
        %878 = vmatpush1.msra.mxu0 0.0
        %879 = vmatprep.mubr.f32.mxu0 0.0
        %880 = vmatmul.mubr.f32.gmra.mrb[0].mxu0 %v813
        %v881 = vpop.f32.mrb[0].mxu0
        %v882 = vadd.f32 0.0, %v881
        %v883 = vpop.f32.mrb[0].mxu0
        %884 = vdwg.mxu0
        %885 = vrot.lane.b32.xlu0 %v709, 112
        %v886 = vpop.permute.xlu0 %885
        %887 = vrot.lane.b32.xlu0 %v709, 48
        %v888 = vpop.permute.xlu0 %887
        %v889 = vsel %vm724, %v886, 0
        %v891 = vsel %vm724, %v888, 0
        %893 = vmatprep.subr.mxu0 0.0
        %894 = vmatpush1.xpose.msra.mxu0 %v891
        %895 = vmatprep.subr.mxu0 0.0
        %896 = vmatpush1.xpose.msra.mxu0 0.0
        %897 = vmatprep.subr.mxu0 0.0
        %898 = vmatpush1.xpose.msra.mxu0 0.0
        %899 = vmatprep.subr.mxu0 0.0
        %900 = vmatpush1.xpose.msra.mxu0 0.0
        %901 = vmatprep.subr.mxu0 0.0
        %902 = vmatpush1.xpose.msra.mxu0 0.0
        %903 = vmatprep.subr.mxu0 0.0
        %904 = vmatpush1.xpose.msra.mxu0 0.0
        %905 = vmatprep.subr.mxu0 0.0
        %906 = vmatpush1.xpose.msra.mxu0 0.0
        %907 = vmatprep.subr.mxu0 0.0
        %908 = vmatpush1.xpose.msra.mxu0 0.0
        %909 = vmatprep.subr.mxu0 0.0
        %910 = vmatpush1.xpose.msra.mxu0 0.0
        %911 = vmatprep.subr.mxu0 0.0
        %912 = vmatpush1.xpose.msra.mxu0 0.0
        %913 = vmatprep.subr.mxu0 0.0
        %914 = vmatpush1.xpose.msra.mxu0 0.0
        %915 = vmatprep.subr.mxu0 0.0
        %916 = vmatpush1.xpose.msra.mxu0 0.0
        %917 = vmatprep.subr.mxu0 0.0
        %918 = vmatpush1.xpose.msra.mxu0 0.0
        %919 = vmatprep.subr.mxu0 0.0
        %920 = vmatpush1.xpose.msra.mxu0 0.0
        %921 = vmatprep.subr.mxu0 0.0
        %922 = vmatpush1.xpose.msra.mxu0 0.0
        %923 = vmatprep.subr.mxu0 0.0
        %924 = vmatpush1.xpose.msra.mxu0 0.0
        %925 = vmatprep.subr.mxu0 0.0
        %926 = vmatpush1.xpose.msra.mxu0 0.0
        %927 = vmatprep.subr.mxu0 0.0
        %928 = vmatpush1.xpose.msra.mxu0 0.0
        %929 = vmatprep.subr.mxu0 0.0
        %930 = vmatpush1.xpose.msra.mxu0 0.0
        %931 = vmatprep.subr.mxu0 0.0
        %932 = vmatpush1.xpose.msra.mxu0 0.0
        %933 = vmatprep.subr.mxu0 0.0
        %934 = vmatpush1.xpose.msra.mxu0 0.0
        %935 = vmatprep.subr.mxu0 0.0
        %936 = vmatpush1.xpose.msra.mxu0 0.0
        %937 = vmatprep.subr.mxu0 0.0
        %938 = vmatpush1.xpose.msra.mxu0 0.0
        %939 = vmatprep.subr.mxu0 0.0
        %940 = vmatpush1.xpose.msra.mxu0 0.0
        %941 = vmatprep.subr.mxu0 0.0
        %942 = vmatpush1.xpose.msra.mxu0 0.0
        %943 = vmatprep.subr.mxu0 0.0
        %944 = vmatpush1.xpose.msra.mxu0 0.0
        %945 = vmatprep.subr.mxu0 0.0
        %946 = vmatpush1.xpose.msra.mxu0 0.0
        %947 = vmatprep.subr.mxu0 0.0
        %948 = vmatpush1.xpose.msra.mxu0 0.0
        %949 = vmatprep.subr.mxu0 0.0
        %950 = vmatpush1.xpose.msra.mxu0 0.0
        %951 = vmatprep.subr.mxu0 0.0
        %952 = vmatpush1.xpose.msra.mxu0 0.0
        %953 = vmatprep.subr.mxu0 0.0
        %954 = vmatpush1.xpose.msra.mxu0 0.0
        %955 = vmatprep.subr.mxu0 0.0
        %956 = vmatpush1.xpose.msra.mxu0 0.0
        %957 = vmatprep.mubr.f32.mxu0 0.0
        %958 = vmatmul.mubr.f32.gmra.mrb[0].mxu0 %v889
        %v959 = vpop.f32.mrb[0].mxu0
        %v960 = vadd.f32 0.0, %v959
        %v961 = vpop.f32.mrb[0].mxu0
        %962 = vdwg.mxu0
        %v963 = vmul.f32 %v960, 0.25
        %v964 = vsel %vm800, %v963, -inf
        %965 = vmax.xlane.f32.xlu0 %v964
        %v966 = vpop.xlane.xlu0 %965
        %v967 = vsub.f32 %v963, %v966
        %v968 = vmul.f32 %v967, 1.442695
        %v969 = vpow.pop %v968
        %v970 = vsel %vm800, %v969, 0.0
        %971 = vadd.xlane.f32.xlu0 %v970
        %v972 = vpop.xlane.xlu0 %971
        %v973 = vrcp.pop %v972
        %v974 = vmul.f32 %v969, %v973
        %976 = vrot.lane.b32.xlu0 %v711, 112
        %v977 = vpop.permute.xlu0 %976
        %v980 = vsel %vm800, %v974, 0
        %982 = vmatprep.subr.mxu0 0.0
        %983 = vmatpush1.msra.mxu0 %v977
        %984 = vmatprep.subr.mxu0 0.0
        %985 = vmatpush1.msra.mxu0 0.0
        %986 = vmatprep.subr.mxu0 0.0
        %987 = vmatpush1.msra.mxu0 0.0
        %988 = vmatprep.subr.mxu0 0.0
        %989 = vmatpush1.msra.mxu0 0.0
        %990 = vmatprep.subr.mxu0 0.0
        %991 = vmatpush1.msra.mxu0 0.0
        %992 = vmatprep.subr.mxu0 0.0
        %993 = vmatpush1.msra.mxu0 0.0
        %994 = vmatprep.subr.mxu0 0.0
        %995 = vmatpush1.msra.mxu0 0.0
        %996 = vmatprep.subr.mxu0 0.0
        %997 = vmatpush1.msra.mxu0 0.0
        %998 = vmatprep.subr.mxu0 0.0
        %999 = vmatpush1.msra.mxu0 0.0
        %1000 = vmatprep.subr.mxu0 0.0
        %1001 = vmatpush1.msra.mxu0 0.0
        %1002 = vmatprep.subr.mxu0 0.0
        %1003 = vmatpush1.msra.mxu0 0.0
        %1004 = vmatprep.subr.mxu0 0.0
        %1005 = vmatpush1.msra.mxu0 0.0
        %1006 = vmatprep.subr.mxu0 0.0
        %1007 = vmatpush1.msra.mxu0 0.0
        %1008 = vmatprep.subr.mxu0 0.0
        %1009 = vmatpush1.msra.mxu0 0.0
        %1010 = vmatprep.subr.mxu0 0.0
        %1011 = vmatpush1.msra.mxu0 0.0
        %1012 = vmatprep.subr.mxu0 0.0
        %1013 = vmatpush1.msra.mxu0 0.0
        %1014 = vmatprep.subr.mxu0 0.0
        %1015 = vmatpush1.msra.mxu0 0.0
        %1016 = vmatprep.subr.mxu0 0.0
        %1017 = vmatpush1.msra.mxu0 0.0
        %1018 = vmatprep.subr.mxu0 0.0
        %1019 = vmatpush1.msra.mxu0 0.0
        %1020 = vmatprep.subr.mxu0 0.0
        %1021 = vmatpush1.msra.mxu0 0.0
        %1022 = vmatprep.subr.mxu0 0.0
        %1023 = vmatpush1.msra.mxu0 0.0
        %1024 = vmatprep.subr.mxu0 0.0
        %1025 = vmatpush1.msra.mxu0 0.0
        %1026 = vmatprep.subr.mxu0 0.0
        %1027 = vmatpush1.msra.mxu0 0.0
        %1028 = vmatprep.subr.mxu0 0.0
        %1029 = vmatpush1.msra.mxu0 0.0
        %1030 = vmatprep.subr.mxu0 0.0
        %1031 = vmatpush1.msra.mxu0 0.0
        %1032 = vmatprep.subr.mxu0 0.0
        %1033 = vmatpush1.msra.mxu0 0.0
        %1034 = vmatprep.subr.mxu0 0.0
        %1035 = vmatpush1.msra.mxu0 0.0
        %1036 = vmatprep.subr.mxu0 0.0
        %1037 = vmatpush1.msra.mxu0 0.0
        %1038 = vmatprep.subr.mxu0 0.0
        %1039 = vmatpush1.msra.mxu0 0.0
        %1040 = vmatprep.subr.mxu0 0.0
        %1041 = vmatpush1.msra.mxu0 0.0
        %1042 = vmatprep.subr.mxu0 0.0
        %1043 = vmatpush1.msra.mxu0 0.0
        %1044 = vmatprep.subr.mxu0 0.0
        %1045 = vmatpush1.msra.mxu0 0.0
        %1046 = vmatprep.mubr.f32.mxu0 0.0
        %1047 = vmatmul.mubr.f32.gmra.mrb[0].mxu0 %v980
        %v1048 = vpop.f32.mrb[0].mxu0
        %v1049 = vadd.f32 0.0, %v1048
        %v1050 = vpop.f32.mrb[0].mxu0
        %1051 = vdwg.mxu0
        %v1053 = vsel %vm724, %v1049, 0
        %1055 = vmatprep.subr.mxu0 0.0
        %1056 = vmatpush1.msra.mxu0 %v715
        %1057 = vmatprep.subr.mxu0 0.0
        %1058 = vmatpush1.msra.mxu0 %v716
        %1059 = vmatprep.subr.mxu0 0.0
        %1060 = vmatpush1.msra.mxu0 0.0
        %1061 = vmatprep.subr.mxu0 0.0
        %1062 = vmatpush1.msra.mxu0 0.0
        %1063 = vmatprep.subr.mxu0 0.0
        %1064 = vmatpush1.msra.mxu0 0.0
        %1065 = vmatprep.subr.mxu0 0.0
        %1066 = vmatpush1.msra.mxu0 0.0
        %1067 = vmatprep.subr.mxu0 0.0
        %1068 = vmatpush1.msra.mxu0 0.0
        %1069 = vmatprep.subr.mxu0 0.0
        %1070 = vmatpush1.msra.mxu0 0.0
        %1071 = vmatprep.subr.mxu0 0.0
        %1072 = vmatpush1.msra.mxu0 0.0
        %1073 = vmatprep.subr.mxu0 0.0
        %1074 = vmatpush1.msra.mxu0 0.0
        %1075 = vmatprep.subr.mxu0 0.0
        %1076 = vmatpush1.msra.mxu0 0.0
        %1077 = vmatprep.subr.mxu0 0.0
        %1078 = vmatpush1.msra.mxu0 0.0
        %1079 = vmatprep.subr.mxu0 0.0
        %1080 = vmatpush1.msra.mxu0 0.0
        %1081 = vmatprep.subr.mxu0 0.0
        %1082 = vmatpush1.msra.mxu0 0.0
        %1083 = vmatprep.subr.mxu0 0.0
        %1084 = vmatpush1.msra.mxu0 0.0
        %1085 = vmatprep.subr.mxu0 0.0
        %1086 = vmatpush1.msra.mxu0 0.0
        %1087 = vmatprep.subr.mxu0 0.0
        %1088 = vmatpush1.msra.mxu0 0.0
        %1089 = vmatprep.subr.mxu0 0.0
        %1090 = vmatpush1.msra.mxu0 0.0
        %1091 = vmatprep.subr.mxu0 0.0
        %1092 = vmatpush1.msra.mxu0 0.0
        %1093 = vmatprep.subr.mxu0 0.0
        %1094 = vmatpush1.msra.mxu0 0.0
        %1095 = vmatprep.subr.mxu0 0.0
        %1096 = vmatpush1.msra.mxu0 0.0
        %1097 = vmatprep.subr.mxu0 0.0
        %1098 = vmatpush1.msra.mxu0 0.0
        %1099 = vmatprep.subr.mxu0 0.0
        %1100 = vmatpush1.msra.mxu0 0.0
        %1101 = vmatprep.subr.mxu0 0.0
        %1102 = vmatpush1.msra.mxu0 0.0
        %1103 = vmatprep.subr.mxu0 0.0
        %1104 = vmatpush1.msra.mxu0 0.0
        %1105 = vmatprep.subr.mxu0 0.0
        %1106 = vmatpush1.msra.mxu0 0.0
        %1107 = vmatprep.subr.mxu0 0.0
        %1108 = vmatpush1.msra.mxu0 0.0
        %1109 = vmatprep.subr.mxu0 0.0
        %1110 = vmatpush1.msra.mxu0 0.0
        %1111 = vmatprep.subr.mxu0 0.0
        %1112 = vmatpush1.msra.mxu0 0.0
        %1113 = vmatprep.subr.mxu0 0.0
        %1114 = vmatpush1.msra.mxu0 0.0
        %1115 = vmatprep.subr.mxu0 0.0
        %1116 = vmatpush1.msra.mxu0 0.0
        %1117 = vmatprep.subr.mxu0 0.0
        %1118 = vmatpush1.msra.mxu0 0.0
        %1119 = vmatprep.mubr.f32.mxu0 0.0
        %1120 = vmatmul.mubr.f32.gmra.mrb[0].mxu0 %v1053
        %v1121 = vpop.f32.mrb[0].mxu0
        %v1122 = vadd.f32 0.0, %v1121
        %v1123 = vpop.f32.mrb[0].mxu0
        %1124 = vdwg.mxu0
        %v1126 = vsel %vm724, %v882, 0
        %1128 = vmatprep.subr.mxu0 0.0
        %1129 = vmatpush1.msra.mxu0 %v713
        %1130 = vmatprep.subr.mxu0 0.0
        %1131 = vmatpush1.msra.mxu0 %v714
        %1132 = vmatprep.subr.mxu0 0.0
        %1133 = vmatpush1.msra.mxu0 0.0
        %1134 = vmatprep.subr.mxu0 0.0
        %1135 = vmatpush1.msra.mxu0 0.0
        %1136 = vmatprep.subr.mxu0 0.0
        %1137 = vmatpush1.msra.mxu0 0.0
        %1138 = vmatprep.subr.mxu0 0.0
        %1139 = vmatpush1.msra.mxu0 0.0
        %1140 = vmatprep.subr.mxu0 0.0
        %1141 = vmatpush1.msra.mxu0 0.0
        %1142 = vmatprep.subr.mxu0 0.0
        %1143 = vmatpush1.msra.mxu0 0.0
        %1144 = vmatprep.subr.mxu0 0.0
        %1145 = vmatpush1.msra.mxu0 0.0
        %1146 = vmatprep.subr.mxu0 0.0
        %1147 = vmatpush1.msra.mxu0 0.0
        %1148 = vmatprep.subr.mxu0 0.0
        %1149 = vmatpush1.msra.mxu0 0.0
        %1150 = vmatprep.subr.mxu0 0.0
        %1151 = vmatpush1.msra.mxu0 0.0
        %1152 = vmatprep.subr.mxu0 0.0
        %1153 = vmatpush1.msra.mxu0 0.0
        %1154 = vmatprep.subr.mxu0 0.0
        %1155 = vmatpush1.msra.mxu0 0.0
        %1156 = vmatprep.subr.mxu0 0.0
        %1157 = vmatpush1.msra.mxu0 0.0
        %1158 = vmatprep.subr.mxu0 0.0
        %1159 = vmatpush1.msra.mxu0 0.0
        %1160 = vmatprep.subr.mxu0 0.0
        %1161 = vmatpush1.msra.mxu0 0.0
        %1162 = vmatprep.subr.mxu0 0.0
        %1163 = vmatpush1.msra.mxu0 0.0
        %1164 = vmatprep.subr.mxu0 0.0
        %1165 = vmatpush1.msra.mxu0 0.0
        %1166 = vmatprep.subr.mxu0 0.0
        %1167 = vmatpush1.msra.mxu0 0.0
        %1168 = vmatprep.subr.mxu0 0.0
        %1169 = vmatpush1.msra.mxu0 0.0
        %1170 = vmatprep.subr.mxu0 0.0
        %1171 = vmatpush1.msra.mxu0 0.0
        %1172 = vmatprep.subr.mxu0 0.0
        %1173 = vmatpush1.msra.mxu0 0.0
        %1174 = vmatprep.subr.mxu0 0.0
        %1175 = vmatpush1.msra.mxu0 0.0
        %1176 = vmatprep.subr.mxu0 0.0
        %1177 = vmatpush1.msra.mxu0 0.0
        %1178 = vmatprep.subr.mxu0 0.0
        %1179 = vmatpush1.msra.mxu0 0.0
        %1180 = vmatprep.subr.mxu0 0.0
        %1181 = vmatpush1.msra.mxu0 0.0
        %1182 = vmatprep.subr.mxu0 0.0
        %1183 = vmatpush1.msra.mxu0 0.0
        %1184 = vmatprep.subr.mxu0 0.0
        %1185 = vmatpush1.msra.mxu0 0.0
        %1186 = vmatprep.subr.mxu0 0.0
        %1187 = vmatpush1.msra.mxu0 0.0
        %1188 = vmatprep.subr.mxu0 0.0
        %1189 = vmatpush1.msra.mxu0 0.0
        %1190 = vmatprep.subr.mxu0 0.0
        %1191 = vmatpush1.msra.mxu0 0.0
        %1192 = vmatprep.mubr.f32.mxu0 0.0
        %1193 = vmatmul.mubr.f32.gmra.mrb[0].mxu0 %v1126
        %v1194 = vpop.f32.mrb[0].mxu0
        %v1195 = vadd.f32 %v1122, %v1194
        %v1196 = vpop.f32.mrb[0].mxu0
        %1197 = vdwg.mxu0
        %1198 = vrot.lane.b32.xlu0 %v709, 96
        %v1199 = vpop.permute.xlu0 %1198
        %1200 = vrot.lane.b32.xlu0 %v709, 32
        %v1201 = vpop.permute.xlu0 %1200
        %v1202 = vsel %vm724, %v1199, 0
        %v1204 = vsel %vm724, %v1201, 0
        %1206 = vmatprep.subr.mxu0 0.0
        %1207 = vmatpush1.xpose.msra.mxu0 %v1204
        %1208 = vmatprep.subr.mxu0 0.0
        %1209 = vmatpush1.xpose.msra.mxu0 0.0
        %1210 = vmatprep.subr.mxu0 0.0
        %1211 = vmatpush1.xpose.msra.mxu0 0.0
        %1212 = vmatprep.subr.mxu0 0.0
        %1213 = vmatpush1.xpose.msra.mxu0 0.0
        %1214 = vmatprep.subr.mxu0 0.0
        %1215 = vmatpush1.xpose.msra.mxu0 0.0
        %1216 = vmatprep.subr.mxu0 0.0
        %1217 = vmatpush1.xpose.msra.mxu0 0.0
        %1218 = vmatprep.subr.mxu0 0.0
        %1219 = vmatpush1.xpose.msra.mxu0 0.0
        %1220 = vmatprep.subr.mxu0 0.0
        %1221 = vmatpush1.xpose.msra.mxu0 0.0
        %1222 = vmatprep.subr.mxu0 0.0
        %1223 = vmatpush1.xpose.msra.mxu0 0.0
        %1224 = vmatprep.subr.mxu0 0.0
        %1225 = vmatpush1.xpose.msra.mxu0 0.0
        %1226 = vmatprep.subr.mxu0 0.0
        %1227 = vmatpush1.xpose.msra.mxu0 0.0
        %1228 = vmatprep.subr.mxu0 0.0
        %1229 = vmatpush1.xpose.msra.mxu0 0.0
        %1230 = vmatprep.subr.mxu0 0.0
        %1231 = vmatpush1.xpose.msra.mxu0 0.0
        %1232 = vmatprep.subr.mxu0 0.0
        %1233 = vmatpush1.xpose.msra.mxu0 0.0
        %1234 = vmatprep.subr.mxu0 0.0
        %1235 = vmatpush1.xpose.msra.mxu0 0.0
        %1236 = vmatprep.subr.mxu0 0.0
        %1237 = vmatpush1.xpose.msra.mxu0 0.0
        %1238 = vmatprep.subr.mxu0 0.0
        %1239 = vmatpush1.xpose.msra.mxu0 0.0
        %1240 = vmatprep.subr.mxu0 0.0
        %1241 = vmatpush1.xpose.msra.mxu0 0.0
        %1242 = vmatprep.subr.mxu0 0.0
        %1243 = vmatpush1.xpose.msra.mxu0 0.0
        %1244 = vmatprep.subr.mxu0 0.0
        %1245 = vmatpush1.xpose.msra.mxu0 0.0
        %1246 = vmatprep.subr.mxu0 0.0
        %1247 = vmatpush1.xpose.msra.mxu0 0.0
        %1248 = vmatprep.subr.mxu0 0.0
        %1249 = vmatpush1.xpose.msra.mxu0 0.0
        %1250 = vmatprep.subr.mxu0 0.0
        %1251 = vmatpush1.xpose.msra.mxu0 0.0
        %1252 = vmatprep.subr.mxu0 0.0
        %1253 = vmatpush1.xpose.msra.mxu0 0.0
        %1254 = vmatprep.subr.mxu0 0.0
        %1255 = vmatpush1.xpose.msra.mxu0 0.0
        %1256 = vmatprep.subr.mxu0 0.0
        %1257 = vmatpush1.xpose.msra.mxu0 0.0
        %1258 = vmatprep.subr.mxu0 0.0
        %1259 = vmatpush1.xpose.msra.mxu0 0.0
        %1260 = vmatprep.subr.mxu0 0.0
        %1261 = vmatpush1.xpose.msra.mxu0 0.0
        %1262 = vmatprep.subr.mxu0 0.0
        %1263 = vmatpush1.xpose.msra.mxu0 0.0
        %1264 = vmatprep.subr.mxu0 0.0
        %1265 = vmatpush1.xpose.msra.mxu0 0.0
        %1266 = vmatprep.subr.mxu0 0.0
        %1267 = vmatpush1.xpose.msra.mxu0 0.0
        %1268 = vmatprep.subr.mxu0 0.0
        %1269 = vmatpush1.xpose.msra.mxu0 0.0
        %1270 = vmatprep.mubr.f32.mxu0 0.0
        %1271 = vmatmul.mubr.f32.gmra.mrb[0].mxu0 %v1202
        %v1272 = vpop.f32.mrb[0].mxu0
        %v1273 = vadd.f32 0.0, %v1272
        %v1274 = vpop.f32.mrb[0].mxu0
        %1275 = vdwg.mxu0
        %v1276 = vmul.f32 %v1273, 0.25
        %v1277 = vsel %vm800, %v1276, -inf
        %1278 = vmax.xlane.f32.xlu0 %v1277
        %v1279 = vpop.xlane.xlu0 %1278
        %v1280 = vsub.f32 %v1276, %v1279
        %v1281 = vmul.f32 %v1280, 1.442695
        %v1282 = vpow.pop %v1281
        %v1283 = vsel %vm800, %v1282, 0.0
        %1284 = vadd.xlane.f32.xlu0 %v1283
        %v1285 = vpop.xlane.xlu0 %1284
        %v1286 = vrcp.pop %v1285
        %v1287 = vmul.f32 %v1282, %v1286
        %1288 = vrot.lane.b32.xlu0 %v711, 96
        %v1289 = vpop.permute.xlu0 %1288
        %v1292 = vsel %vm800, %v1287, 0
        %1294 = vmatprep.subr.mxu0 0.0
        %1295 = vmatpush1.msra.mxu0 %v1289
        %1296 = vmatprep.subr.mxu0 0.0
        %1297 = vmatpush1.msra.mxu0 0.0
        %1298 = vmatprep.subr.mxu0 0.0
        %1299 = vmatpush1.msra.mxu0 0.0
        %1300 = vmatprep.subr.mxu0 0.0
        %1301 = vmatpush1.msra.mxu0 0.0
        %1302 = vmatprep.subr.mxu0 0.0
        %1303 = vmatpush1.msra.mxu0 0.0
        %1304 = vmatprep.subr.mxu0 0.0
        %1305 = vmatpush1.msra.mxu0 0.0
        %1306 = vmatprep.subr.mxu0 0.0
        %1307 = vmatpush1.msra.mxu0 0.0
        %1308 = vmatprep.subr.mxu0 0.0
        %1309 = vmatpush1.msra.mxu0 0.0
        %1310 = vmatprep.subr.mxu0 0.0
        %1311 = vmatpush1.msra.mxu0 0.0
        %1312 = vmatprep.subr.mxu0 0.0
        %1313 = vmatpush1.msra.mxu0 0.0
        %1314 = vmatprep.subr.mxu0 0.0
        %1315 = vmatpush1.msra.mxu0 0.0
        %1316 = vmatprep.subr.mxu0 0.0
        %1317 = vmatpush1.msra.mxu0 0.0
        %1318 = vmatprep.subr.mxu0 0.0
        %1319 = vmatpush1.msra.mxu0 0.0
        %1320 = vmatprep.subr.mxu0 0.0
        %1321 = vmatpush1.msra.mxu0 0.0
        %1322 = vmatprep.subr.mxu0 0.0
        %1323 = vmatpush1.msra.mxu0 0.0
        %1324 = vmatprep.subr.mxu0 0.0
        %1325 = vmatpush1.msra.mxu0 0.0
        %1326 = vmatprep.subr.mxu0 0.0
        %1327 = vmatpush1.msra.mxu0 0.0
        %1328 = vmatprep.subr.mxu0 0.0
        %1329 = vmatpush1.msra.mxu0 0.0
        %1330 = vmatprep.subr.mxu0 0.0
        %1331 = vmatpush1.msra.mxu0 0.0
        %1332 = vmatprep.subr.mxu0 0.0
        %1333 = vmatpush1.msra.mxu0 0.0
        %1334 = vmatprep.subr.mxu0 0.0
        %1335 = vmatpush1.msra.mxu0 0.0
        %1336 = vmatprep.subr.mxu0 0.0
        %1337 = vmatpush1.msra.mxu0 0.0
        %1338 = vmatprep.subr.mxu0 0.0
        %1339 = vmatpush1.msra.mxu0 0.0
        %1340 = vmatprep.subr.mxu0 0.0
        %1341 = vmatpush1.msra.mxu0 0.0
        %1342 = vmatprep.subr.mxu0 0.0
        %1343 = vmatpush1.msra.mxu0 0.0
        %1344 = vmatprep.subr.mxu0 0.0
        %1345 = vmatpush1.msra.mxu0 0.0
        %1346 = vmatprep.subr.mxu0 0.0
        %1347 = vmatpush1.msra.mxu0 0.0
        %1348 = vmatprep.subr.mxu0 0.0
        %1349 = vmatpush1.msra.mxu0 0.0
        %1350 = vmatprep.subr.mxu0 0.0
        %1351 = vmatpush1.msra.mxu0 0.0
        %1352 = vmatprep.subr.mxu0 0.0
        %1353 = vmatpush1.msra.mxu0 0.0
        %1354 = vmatprep.subr.mxu0 0.0
        %1355 = vmatpush1.msra.mxu0 0.0
        %1356 = vmatprep.subr.mxu0 0.0
        %1357 = vmatpush1.msra.mxu0 0.0
        %1358 = vmatprep.mubr.f32.mxu0 0.0
        %1359 = vmatmul.mubr.f32.gmra.mrb[0].mxu0 %v1292
        %v1360 = vpop.f32.mrb[0].mxu0
        %v1361 = vadd.f32 0.0, %v1360
        %v1362 = vpop.f32.mrb[0].mxu0
        %1363 = vdwg.mxu0
        %v1365 = vsel %vm724, %v1361, 0
        %1367 = vmatprep.subr.mxu0 0.0
        %1368 = vmatpush1.msra.mxu0 %v717
        %1369 = vmatprep.subr.mxu0 0.0
        %1370 = vmatpush1.msra.mxu0 %v718
        %1371 = vmatprep.subr.mxu0 0.0
        %1372 = vmatpush1.msra.mxu0 0.0
        %1373 = vmatprep.subr.mxu0 0.0
        %1374 = vmatpush1.msra.mxu0 0.0
        %1375 = vmatprep.subr.mxu0 0.0
        %1376 = vmatpush1.msra.mxu0 0.0
        %1377 = vmatprep.subr.mxu0 0.0
        %1378 = vmatpush1.msra.mxu0 0.0
        %1379 = vmatprep.subr.mxu0 0.0
        %1380 = vmatpush1.msra.mxu0 0.0
        %1381 = vmatprep.subr.mxu0 0.0
        %1382 = vmatpush1.msra.mxu0 0.0
        %1383 = vmatprep.subr.mxu0 0.0
        %1384 = vmatpush1.msra.mxu0 0.0
        %1385 = vmatprep.subr.mxu0 0.0
        %1386 = vmatpush1.msra.mxu0 0.0
        %1387 = vmatprep.subr.mxu0 0.0
        %1388 = vmatpush1.msra.mxu0 0.0
        %1389 = vmatprep.subr.mxu0 0.0
        %1390 = vmatpush1.msra.mxu0 0.0
        %1391 = vmatprep.subr.mxu0 0.0
        %1392 = vmatpush1.msra.mxu0 0.0
        %1393 = vmatprep.subr.mxu0 0.0
        %1394 = vmatpush1.msra.mxu0 0.0
        %1395 = vmatprep.subr.mxu0 0.0
        %1396 = vmatpush1.msra.mxu0 0.0
        %1397 = vmatprep.subr.mxu0 0.0
        %1398 = vmatpush1.msra.mxu0 0.0
        %1399 = vmatprep.subr.mxu0 0.0
        %1400 = vmatpush1.msra.mxu0 0.0
        %1401 = vmatprep.subr.mxu0 0.0
        %1402 = vmatpush1.msra.mxu0 0.0
        %1403 = vmatprep.subr.mxu0 0.0
        %1404 = vmatpush1.msra.mxu0 0.0
        %1405 = vmatprep.subr.mxu0 0.0
        %1406 = vmatpush1.msra.mxu0 0.0
        %1407 = vmatprep.subr.mxu0 0.0
        %1408 = vmatpush1.msra.mxu0 0.0
        %1409 = vmatprep.subr.mxu0 0.0
        %1410 = vmatpush1.msra.mxu0 0.0
        %1411 = vmatprep.subr.mxu0 0.0
        %1412 = vmatpush1.msra.mxu0 0.0
        %1413 = vmatprep.subr.mxu0 0.0
        %1414 = vmatpush1.msra.mxu0 0.0
        %1415 = vmatprep.subr.mxu0 0.0
        %1416 = vmatpush1.msra.mxu0 0.0
        %1417 = vmatprep.subr.mxu0 0.0
        %1418 = vmatpush1.msra.mxu0 0.0
        %1419 = vmatprep.subr.mxu0 0.0
        %1420 = vmatpush1.msra.mxu0 0.0
        %1421 = vmatprep.subr.mxu0 0.0
        %1422 = vmatpush1.msra.mxu0 0.0
        %1423 = vmatprep.subr.mxu0 0.0
        %1424 = vmatpush1.msra.mxu0 0.0
        %1425 = vmatprep.subr.mxu0 0.0
        %1426 = vmatpush1.msra.mxu0 0.0
        %1427 = vmatprep.subr.mxu0 0.0
        %1428 = vmatpush1.msra.mxu0 0.0
        %1429 = vmatprep.subr.mxu0 0.0
        %1430 = vmatpush1.msra.mxu0 0.0
        %1431 = vmatprep.mubr.f32.mxu0 0.0
        %1432 = vmatmul.mubr.f32.gmra.mrb[0].mxu0 %v1365
        %v1433 = vpop.f32.mrb[0].mxu0
        %v1434 = vadd.f32 0.0, %v1433
        %v1435 = vpop.f32.mrb[0].mxu0
        %1436 = vdwg.mxu0
        %v1437 = vadd.f32 %v1195, %v1434
        %1438 = vrot.lane.b32.xlu0 %v709, 80
        %v1439 = vpop.permute.xlu0 %1438
        %1440 = vrot.lane.b32.xlu0 %v709, 16
        %v1441 = vpop.permute.xlu0 %1440
        %v1442 = vsel %vm724, %v1439, 0
        %v1444 = vsel %vm724, %v1441, 0
        %1446 = vmatprep.subr.mxu0 0.0
        %1447 = vmatpush1.xpose.msra.mxu0 %v1444
        %1448 = vmatprep.subr.mxu0 0.0
        %1449 = vmatpush1.xpose.msra.mxu0 0.0
        %1450 = vmatprep.subr.mxu0 0.0
        %1451 = vmatpush1.xpose.msra.mxu0 0.0
        %1452 = vmatprep.subr.mxu0 0.0
        %1453 = vmatpush1.xpose.msra.mxu0 0.0
        %1454 = vmatprep.subr.mxu0 0.0
        %1455 = vmatpush1.xpose.msra.mxu0 0.0
        %1456 = vmatprep.subr.mxu0 0.0
        %1457 = vmatpush1.xpose.msra.mxu0 0.0
        %1458 = vmatprep.subr.mxu0 0.0
        %1459 = vmatpush1.xpose.msra.mxu0 0.0
        %1460 = vmatprep.subr.mxu0 0.0
        %1461 = vmatpush1.xpose.msra.mxu0 0.0
        %1462 = vmatprep.subr.mxu0 0.0
        %1463 = vmatpush1.xpose.msra.mxu0 0.0
        %1464 = vmatprep.subr.mxu0 0.0
        %1465 = vmatpush1.xpose.msra.mxu0 0.0
        %1466 = vmatprep.subr.mxu0 0.0
        %1467 = vmatpush1.xpose.msra.mxu0 0.0
        %1468 = vmatprep.subr.mxu0 0.0
        %1469 = vmatpush1.xpose.msra.mxu0 0.0
        %1470 = vmatprep.subr.mxu0 0.0
        %1471 = vmatpush1.xpose.msra.mxu0 0.0
        %1472 = vmatprep.subr.mxu0 0.0
        %1473 = vmatpush1.xpose.msra.mxu0 0.0
        %1474 = vmatprep.subr.mxu0 0.0
        %1475 = vmatpush1.xpose.msra.mxu0 0.0
        %1476 = vmatprep.subr.mxu0 0.0
        %1477 = vmatpush1.xpose.msra.mxu0 0.0
        %1478 = vmatprep.subr.mxu0 0.0
        %1479 = vmatpush1.xpose.msra.mxu0 0.0
        %1480 = vmatprep.subr.mxu0 0.0
        %1481 = vmatpush1.xpose.msra.mxu0 0.0
        %1482 = vmatprep.subr.mxu0 0.0
        %1483 = vmatpush1.xpose.msra.mxu0 0.0
        %1484 = vmatprep.subr.mxu0 0.0
        %1485 = vmatpush1.xpose.msra.mxu0 0.0
        %1486 = vmatprep.subr.mxu0 0.0
        %1487 = vmatpush1.xpose.msra.mxu0 0.0
        %1488 = vmatprep.subr.mxu0 0.0
        %1489 = vmatpush1.xpose.msra.mxu0 0.0
        %1490 = vmatprep.subr.mxu0 0.0
        %1491 = vmatpush1.xpose.msra.mxu0 0.0
        %1492 = vmatprep.subr.mxu0 0.0
        %1493 = vmatpush1.xpose.msra.mxu0 0.0
        %1494 = vmatprep.subr.mxu0 0.0
        %1495 = vmatpush1.xpose.msra.mxu0 0.0
        %1496 = vmatprep.subr.mxu0 0.0
        %1497 = vmatpush1.xpose.msra.mxu0 0.0
        %1498 = vmatprep.subr.mxu0 0.0
        %1499 = vmatpush1.xpose.msra.mxu0 0.0
        %1500 = vmatprep.subr.mxu0 0.0
        %1501 = vmatpush1.xpose.msra.mxu0 0.0
        %1502 = vmatprep.subr.mxu0 0.0
        %1503 = vmatpush1.xpose.msra.mxu0 0.0
        %1504 = vmatprep.subr.mxu0 0.0
        %1505 = vmatpush1.xpose.msra.mxu0 0.0
        %1506 = vmatprep.subr.mxu0 0.0
        %1507 = vmatpush1.xpose.msra.mxu0 0.0
        %1508 = vmatprep.subr.mxu0 0.0
        %1509 = vmatpush1.xpose.msra.mxu0 0.0
        %1510 = vmatprep.mubr.f32.mxu0 0.0
        %1511 = vmatmul.mubr.f32.gmra.mrb[0].mxu0 %v1442
        %v1512 = vpop.f32.mrb[0].mxu0
        %v1513 = vadd.f32 0.0, %v1512
        %v1514 = vpop.f32.mrb[0].mxu0
        %1515 = vdwg.mxu0
        %v1516 = vmul.f32 %v1513, 0.25
        %v1517 = vsel %vm800, %v1516, -inf
        %1518 = vmax.xlane.f32.xlu0 %v1517
        %v1519 = vpop.xlane.xlu0 %1518
        %v1520 = vsub.f32 %v1516, %v1519
        %v1521 = vmul.f32 %v1520, 1.442695
        %v1522 = vpow.pop %v1521
        %v1523 = vsel %vm800, %v1522, 0.0
        %1524 = vadd.xlane.f32.xlu0 %v1523
        %v1525 = vpop.xlane.xlu0 %1524
        %v1526 = vrcp.pop %v1525
        %v1527 = vmul.f32 %v1522, %v1526
        %1528 = vrot.lane.b32.xlu0 %v711, 80
        %v1529 = vpop.permute.xlu0 %1528
        %v1532 = vsel %vm800, %v1527, 0
        %1534 = vmatprep.subr.mxu0 0.0
        %1535 = vmatpush1.msra.mxu0 %v1529
        %1536 = vmatprep.subr.mxu0 0.0
        %1537 = vmatpush1.msra.mxu0 0.0
        %1538 = vmatprep.subr.mxu0 0.0
        %1539 = vmatpush1.msra.mxu0 0.0
        %1540 = vmatprep.subr.mxu0 0.0
        %1541 = vmatpush1.msra.mxu0 0.0
        %1542 = vmatprep.subr.mxu0 0.0
        %1543 = vmatpush1.msra.mxu0 0.0
        %1544 = vmatprep.subr.mxu0 0.0
        %1545 = vmatpush1.msra.mxu0 0.0
        %1546 = vmatprep.subr.mxu0 0.0
        %1547 = vmatpush1.msra.mxu0 0.0
        %1548 = vmatprep.subr.mxu0 0.0
        %1549 = vmatpush1.msra.mxu0 0.0
        %1550 = vmatprep.subr.mxu0 0.0
        %1551 = vmatpush1.msra.mxu0 0.0
        %1552 = vmatprep.subr.mxu0 0.0
        %1553 = vmatpush1.msra.mxu0 0.0
        %1554 = vmatprep.subr.mxu0 0.0
        %1555 = vmatpush1.msra.mxu0 0.0
        %1556 = vmatprep.subr.mxu0 0.0
        %1557 = vmatpush1.msra.mxu0 0.0
        %1558 = vmatprep.subr.mxu0 0.0
        %1559 = vmatpush1.msra.mxu0 0.0
        %1560 = vmatprep.subr.mxu0 0.0
        %1561 = vmatpush1.msra.mxu0 0.0
        %1562 = vmatprep.subr.mxu0 0.0
        %1563 = vmatpush1.msra.mxu0 0.0
        %1564 = vmatprep.subr.mxu0 0.0
        %1565 = vmatpush1.msra.mxu0 0.0
        %1566 = vmatprep.subr.mxu0 0.0
        %1567 = vmatpush1.msra.mxu0 0.0
        %1568 = vmatprep.subr.mxu0 0.0
        %1569 = vmatpush1.msra.mxu0 0.0
        %1570 = vmatprep.subr.mxu0 0.0
        %1571 = vmatpush1.msra.mxu0 0.0
        %1572 = vmatprep.subr.mxu0 0.0
        %1573 = vmatpush1.msra.mxu0 0.0
        %1574 = vmatprep.subr.mxu0 0.0
        %1575 = vmatpush1.msra.mxu0 0.0
        %1576 = vmatprep.subr.mxu0 0.0
        %1577 = vmatpush1.msra.mxu0 0.0
        %1578 = vmatprep.subr.mxu0 0.0
        %1579 = vmatpush1.msra.mxu0 0.0
        %1580 = vmatprep.subr.mxu0 0.0
        %1581 = vmatpush1.msra.mxu0 0.0
        %1582 = vmatprep.subr.mxu0 0.0
        %1583 = vmatpush1.msra.mxu0 0.0
        %1584 = vmatprep.subr.mxu0 0.0
        %1585 = vmatpush1.msra.mxu0 0.0
        %1586 = vmatprep.subr.mxu0 0.0
        %1587 = vmatpush1.msra.mxu0 0.0
        %1588 = vmatprep.subr.mxu0 0.0
        %1589 = vmatpush1.msra.mxu0 0.0
        %1590 = vmatprep.subr.mxu0 0.0
        %1591 = vmatpush1.msra.mxu0 0.0
        %1592 = vmatprep.subr.mxu0 0.0
        %1593 = vmatpush1.msra.mxu0 0.0
        %1594 = vmatprep.subr.mxu0 0.0
        %1595 = vmatpush1.msra.mxu0 0.0
        %1596 = vmatprep.subr.mxu0 0.0
        %1597 = vmatpush1.msra.mxu0 0.0
        %1598 = vmatprep.mubr.f32.mxu0 0.0
        %1599 = vmatmul.mubr.f32.gmra.mrb[0].mxu0 %v1532
        %v1600 = vpop.f32.mrb[0].mxu0
        %v1601 = vadd.f32 0.0, %v1600
        %v1602 = vpop.f32.mrb[0].mxu0
        %1603 = vdwg.mxu0
        %v1605 = vsel %vm724, %v1601, 0
        %1607 = vmatprep.subr.mxu0 0.0
        %1608 = vmatpush1.msra.mxu0 %v719
        %1609 = vmatprep.subr.mxu0 0.0
        %1610 = vmatpush1.msra.mxu0 %v720
        %1611 = vmatprep.subr.mxu0 0.0
        %1612 = vmatpush1.msra.mxu0 0.0
        %1613 = vmatprep.subr.mxu0 0.0
        %1614 = vmatpush1.msra.mxu0 0.0
        %1615 = vmatprep.subr.mxu0 0.0
        %1616 = vmatpush1.msra.mxu0 0.0
        %1617 = vmatprep.subr.mxu0 0.0
        %1618 = vmatpush1.msra.mxu0 0.0
        %1619 = vmatprep.subr.mxu0 0.0
        %1620 = vmatpush1.msra.mxu0 0.0
        %1621 = vmatprep.subr.mxu0 0.0
        %1622 = vmatpush1.msra.mxu0 0.0
        %1623 = vmatprep.subr.mxu0 0.0
        %1624 = vmatpush1.msra.mxu0 0.0
        %1625 = vmatprep.subr.mxu0 0.0
        %1626 = vmatpush1.msra.mxu0 0.0
        %1627 = vmatprep.subr.mxu0 0.0
        %1628 = vmatpush1.msra.mxu0 0.0
        %1629 = vmatprep.subr.mxu0 0.0
        %1630 = vmatpush1.msra.mxu0 0.0
        %1631 = vmatprep.subr.mxu0 0.0
        %1632 = vmatpush1.msra.mxu0 0.0
        %1633 = vmatprep.subr.mxu0 0.0
        %1634 = vmatpush1.msra.mxu0 0.0
        %1635 = vmatprep.subr.mxu0 0.0
        %1636 = vmatpush1.msra.mxu0 0.0
        %1637 = vmatprep.subr.mxu0 0.0
        %1638 = vmatpush1.msra.mxu0 0.0
        %1639 = vmatprep.subr.mxu0 0.0
        %1640 = vmatpush1.msra.mxu0 0.0
        %1641 = vmatprep.subr.mxu0 0.0
        %1642 = vmatpush1.msra.mxu0 0.0
        %1643 = vmatprep.subr.mxu0 0.0
        %1644 = vmatpush1.msra.mxu0 0.0
        %1645 = vmatprep.subr.mxu0 0.0
        %1646 = vmatpush1.msra.mxu0 0.0
        %1647 = vmatprep.subr.mxu0 0.0
        %1648 = vmatpush1.msra.mxu0 0.0
        %1649 = vmatprep.subr.mxu0 0.0
        %1650 = vmatpush1.msra.mxu0 0.0
        %1651 = vmatprep.subr.mxu0 0.0
        %1652 = vmatpush1.msra.mxu0 0.0
        %1653 = vmatprep.subr.mxu0 0.0
        %1654 = vmatpush1.msra.mxu0 0.0
        %1655 = vmatprep.subr.mxu0 0.0
        %1656 = vmatpush1.msra.mxu0 0.0
        %1657 = vmatprep.subr.mxu0 0.0
        %1658 = vmatpush1.msra.mxu0 0.0
        %1659 = vmatprep.subr.mxu0 0.0
        %1660 = vmatpush1.msra.mxu0 0.0
        %1661 = vmatprep.subr.mxu0 0.0
        %1662 = vmatpush1.msra.mxu0 0.0
        %1663 = vmatprep.subr.mxu0 0.0
        %1664 = vmatpush1.msra.mxu0 0.0
        %1665 = vmatprep.subr.mxu0 0.0
        %1666 = vmatpush1.msra.mxu0 0.0
        %1667 = vmatprep.subr.mxu0 0.0
        %1668 = vmatpush1.msra.mxu0 0.0
        %1669 = vmatprep.subr.mxu0 0.0
        %1670 = vmatpush1.msra.mxu0 0.0
        %1671 = vmatprep.mubr.f32.mxu0 0.0
        %1672 = vmatmul.mubr.f32.gmra.mrb[0].mxu0 %v1605
        %v1673 = vpop.f32.mrb[0].mxu0
        %v1674 = vadd.f32 0.0, %v1673
        %v1675 = vpop.f32.mrb[0].mxu0
        %1676 = vdwg.mxu0
        %v1677 = vadd.f32 %v1437, %v1674
        %v1678 = vadd.f32 %v601, %v1677
        %v1679 = vld [vmem:[%s7] sm:$0x1]
        %v1680 = vlaneseq
        %v1681 = vshrl.u32 %v1680, 7
        %v1682 = vsub.s32 0, %v1681
        %v1683 = vrot.slane %v1679, %v1682
        %v1684 = vadd.f32 %v1678, %v1683
        %v1685 = vld [vmem:[%s8] sm:$0x1]
        %v1686 = vld [vmem:[%s9] sm:$0x1]
        %v1687 = vsel %vm606, %v1684, 0.0
        %1688 = vadd.xlane.f32.xlu0 %v1687
        %v1689 = vpop.xlane.xlu0 %1688
        %v1690 = vmul.f32 %v1689, %v610
        %v1691 = vsub.f32 %v1684, %v1690
        %v1692 = vmul.f32 %v1691, %v1691
        %v1693 = vsel %vm606, %v1692, 0.0
        %1694 = vadd.xlane.f32.xlu0 %v1693
        %v1695 = vpop.xlane.xlu0 %1694
        %v1696 = vmul.f32 %v1695, %v610
        %v1697 = vadd.f32 %v1696, 1e-05
        %v1698 = vrsqrt.pop %v1697
        %v1699 = vmul.f32 %v1691, %v1698
        %v1700 = vlaneseq
        %v1701 = vshrl.u32 %v1700, 7
        %v1702 = vsub.s32 0, %v1701
        %v1703 = vrot.slane %v1685, %v1702
        %v1704 = vmul.f32 %v1699, %v1703
        %v1705 = vlaneseq
        %v1706 = vshrl.u32 %v1705, 7
        %v1707 = vsub.s32 0, %v1706
        %v1708 = vrot.slane %v1686, %v1707
        %v1709 = vadd.f32 %v1704, %v1708
        %v1710 = vld [vmem:[%s10] sm:$0xff]
        %v1711 = vld [vmem:[%s10 + $0x8] sm:$0xff]
        %v1712 = vld [vmem:[%s10 + $0x10] sm:$0xff]
        %v1713 = vld [vmem:[%s10 + $0x18] sm:$0xff]
        %v1714 = vld [vmem:[%s11] sm:$0x1]
        %v1715 = vlaneseq
        %v1716 = vshrl.u32 %v1715, 7
        %v1717 = vsub.s32 0, %v1716
        %v1718 = vrot.slane %v1714, %v1717
        %v1720 = vsel %vm606, %v1709, 0
        %1722 = vmatprep.subr.mxu0 0.0
        %1723 = vmatpush1.msra.mxu0 %v1710
        %1724 = vmatprep.subr.mxu0 0.0
        %1725 = vmatpush1.msra.mxu0 %v1711
        %1726 = vmatprep.subr.mxu0 0.0
        %1727 = vmatpush1.msra.mxu0 %v1712
        %1728 = vmatprep.subr.mxu0 0.0
        %1729 = vmatpush1.msra.mxu0 %v1713
        %1730 = vmatprep.subr.mxu0 0.0
        %1731 = vmatpush1.msra.mxu0 0.0
        %1732 = vmatprep.subr.mxu0 0.0
        %1733 = vmatpush1.msra.mxu0 0.0
        %1734 = vmatprep.subr.mxu0 0.0
        %1735 = vmatpush1.msra.mxu0 0.0
        %1736 = vmatprep.subr.mxu0 0.0
        %1737 = vmatpush1.msra.mxu0 0.0
        %1738 = vmatprep.subr.mxu0 0.0
        %1739 = vmatpush1.msra.mxu0 0.0
        %1740 = vmatprep.subr.mxu0 0.0
        %1741 = vmatpush1.msra.mxu0 0.0
        %1742 = vmatprep.subr.mxu0 0.0
        %1743 = vmatpush1.msra.mxu0 0.0
        %1744 = vmatprep.subr.mxu0 0.0
        %1745 = vmatpush1.msra.mxu0 0.0
        %1746 = vmatprep.subr.mxu0 0.0
        %1747 = vmatpush1.msra.mxu0 0.0
        %1748 = vmatprep.subr.mxu0 0.0
        %1749 = vmatpush1.msra.mxu0 0.0
        %1750 = vmatprep.subr.mxu0 0.0
        %1751 = vmatpush1.msra.mxu0 0.0
        %1752 = vmatprep.subr.mxu0 0.0
        %1753 = vmatpush1.msra.mxu0 0.0
        %1754 = vmatprep.subr.mxu0 0.0
        %1755 = vmatpush1.msra.mxu0 0.0
        %1756 = vmatprep.subr.mxu0 0.0
        %1757 = vmatpush1.msra.mxu0 0.0
        %1758 = vmatprep.subr.mxu0 0.0
        %1759 = vmatpush1.msra.mxu0 0.0
        %1760 = vmatprep.subr.mxu0 0.0
        %1761 = vmatpush1.msra.mxu0 0.0
        %1762 = vmatprep.subr.mxu0 0.0
        %1763 = vmatpush1.msra.mxu0 0.0
        %1764 = vmatprep.subr.mxu0 0.0
        %1765 = vmatpush1.msra.mxu0 0.0
        %1766 = vmatprep.subr.mxu0 0.0
        %1767 = vmatpush1.msra.mxu0 0.0
        %1768 = vmatprep.subr.mxu0 0.0
        %1769 = vmatpush1.msra.mxu0 0.0
        %1770 = vmatprep.subr.mxu0 0.0
        %1771 = vmatpush1.msra.mxu0 0.0
        %1772 = vmatprep.subr.mxu0 0.0
        %1773 = vmatpush1.msra.mxu0 0.0
        %1774 = vmatprep.subr.mxu0 0.0
        %1775 = vmatpush1.msra.mxu0 0.0
        %1776 = vmatprep.subr.mxu0 0.0
        %1777 = vmatpush1.msra.mxu0 0.0
        %1778 = vmatprep.subr.mxu0 0.0
        %1779 = vmatpush1.msra.mxu0 0.0
        %1780 = vmatprep.subr.mxu0 0.0
        %1781 = vmatpush1.msra.mxu0 0.0
        %1782 = vmatprep.subr.mxu0 0.0
        %1783 = vmatpush1.msra.mxu0 0.0
        %1784 = vmatprep.subr.mxu0 0.0
        %1785 = vmatpush1.msra.mxu0 0.0
        %1786 = vmatprep.mubr.f32.mxu0 0.0
        %1787 = vmatmul.mubr.f32.gmra.mrb[0].mxu0 %v1720
        %v1788 = vpop.f32.mrb[0].mxu0
        %v1789 = vadd.f32 %v1718, %v1788
        %v1790 = vpop.f32.mrb[0].mxu0
        %1791 = vdwg.mxu0
        %v1792 = vmul.f32 %v1789, 0.5
        %v1793 = vmul.f32 %v1789, 0.70710677
        %v1794 = vand.u32 2147483647, %v1793
        %v1795 = vmul.f32 %v1794, 0.3275911
        %v1796 = vadd.f32 %v1795, 1.0
        %v1797 = vrcp.pop %v1796
        %v1798 = vmul.f32 1.0, %v1797
        %v1799 = vmul.f32 %v1798, 1.0614054
        %v1800 = vsub.f32 %v1799, 1.4531521
        %v1801 = vmul.f32 %v1800, %v1798
        %v1802 = vadd.f32 %v1801, 1.4214138
        %v1803 = vmul.f32 %v1802, %v1798
        %v1804 = vsub.f32 %v1803, 0.28449672
        %v1805 = vmul.f32 %v1804, %v1798
        %v1806 = vadd.f32 %v1805, 0.2548296
        %v1807 = vmul.f32 %v1806, %v1798
        %v1808 = vsub.f32 0.0, %v1793
        %v1809 = vmul.f32 %v1808, %v1793
        %v1810 = vmul.f32 %v1809, 1.442695
        %v1811 = vpow.pop %v1810
        %v1812 = vmul.f32 %v1807, %v1811
        %v1813 = vsub.f32 1.0, %v1812
        %vm1814 = vcmp.ge.f32.partialorder %v1793, 0.0
        %v1815 = vsub.f32 0.0, %v1813
        %v1816 = vsel %vm1814, %v1813, %v1815
        %v1817 = vadd.f32 %v1816, 1.0
        %v1818 = vmul.f32 %v1792, %v1817
        %v1819 = vld [vmem:[%s12] sm:$0xff]
        %v1820 = vld [vmem:[%s12 + $0x8] sm:$0xff]
        %v1821 = vld [vmem:[%s12 + $0x10] sm:$0xff]
        %v1822 = vld [vmem:[%s12 + $0x18] sm:$0xff]
        %v1823 = vld [vmem:[%s12 + $0x20] sm:$0xff]
        %v1824 = vld [vmem:[%s12 + $0x28] sm:$0xff]
        %v1825 = vld [vmem:[%s12 + $0x30] sm:$0xff]
        %v1826 = vld [vmem:[%s12 + $0x38] sm:$0xff]
        %vm1827 = vcmask 523264
        %v1829 = vsel %vm1827, %v1818, 0
        %1831 = vmatprep.subr.mxu0 0.0
        %1832 = vmatpush1.msra.mxu0 %v1819
        %1833 = vmatprep.subr.mxu0 0.0
        %1834 = vmatpush1.msra.mxu0 %v1820
        %1835 = vmatprep.subr.mxu0 0.0
        %1836 = vmatpush1.msra.mxu0 %v1821
        %1837 = vmatprep.subr.mxu0 0.0
        %1838 = vmatpush1.msra.mxu0 %v1822
        %1839 = vmatprep.subr.mxu0 0.0
        %1840 = vmatpush1.msra.mxu0 %v1823
        %1841 = vmatprep.subr.mxu0 0.0
        %1842 = vmatpush1.msra.mxu0 %v1824
        %1843 = vmatprep.subr.mxu0 0.0
        %1844 = vmatpush1.msra.mxu0 %v1825
        %1845 = vmatprep.subr.mxu0 0.0
        %1846 = vmatpush1.msra.mxu0 %v1826
        %1847 = vmatprep.subr.mxu0 0.0
        %1848 = vmatpush1.msra.mxu0 0.0
        %1849 = vmatprep.subr.mxu0 0.0
        %1850 = vmatpush1.msra.mxu0 0.0
        %1851 = vmatprep.subr.mxu0 0.0
        %1852 = vmatpush1.msra.mxu0 0.0
        %1853 = vmatprep.subr.mxu0 0.0
        %1854 = vmatpush1.msra.mxu0 0.0
        %1855 = vmatprep.subr.mxu0 0.0
        %1856 = vmatpush1.msra.mxu0 0.0
        %1857 = vmatprep.subr.mxu0 0.0
        %1858 = vmatpush1.msra.mxu0 0.0
        %1859 = vmatprep.subr.mxu0 0.0
        %1860 = vmatpush1.msra.mxu0 0.0
        %1861 = vmatprep.subr.mxu0 0.0
        %1862 = vmatpush1.msra.mxu0 0.0
        %1863 = vmatprep.subr.mxu0 0.0
        %1864 = vmatpush1.msra.mxu0 0.0
        %1865 = vmatprep.subr.mxu0 0.0
        %1866 = vmatpush1.msra.mxu0 0.0
        %1867 = vmatprep.subr.mxu0 0.0
        %1868 = vmatpush1.msra.mxu0 0.0
        %1869 = vmatprep.subr.mxu0 0.0
        %1870 = vmatpush1.msra.mxu0 0.0
        %1871 = vmatprep.subr.mxu0 0.0
        %1872 = vmatpush1.msra.mxu0 0.0
        %1873 = vmatprep.subr.mxu0 0.0
        %1874 = vmatpush1.msra.mxu0 0.0
        %1875 = vmatprep.subr.mxu0 0.0
        %1876 = vmatpush1.msra.mxu0 0.0
        %1877 = vmatprep.subr.mxu0 0.0
        %1878 = vmatpush1.msra.mxu0 0.0
        %1879 = vmatprep.subr.mxu0 0.0
        %1880 = vmatpush1.msra.mxu0 0.0
        %1881 = vmatprep.subr.mxu0 0.0
        %1882 = vmatpush1.msra.mxu0 0.0
        %1883 = vmatprep.subr.mxu0 0.0
        %1884 = vmatpush1.msra.mxu0 0.0
        %1885 = vmatprep.subr.mxu0 0.0
        %1886 = vmatpush1.msra.mxu0 0.0
        %1887 = vmatprep.subr.mxu0 0.0
        %1888 = vmatpush1.msra.mxu0 0.0
        %1889 = vmatprep.subr.mxu0 0.0
        %1890 = vmatpush1.msra.mxu0 0.0
        %1891 = vmatprep.subr.mxu0 0.0
        %1892 = vmatpush1.msra.mxu0 0.0
        %1893 = vmatprep.subr.mxu0 0.0
        %1894 = vmatpush1.msra.mxu0 0.0
        %1895 = vmatprep.mubr.f32.mxu0 0.0
        %1896 = vmatmul.mubr.f32.gmra.mrb[0].mxu0 %v1829
        %v1897 = vpop.f32.mrb[0].mxu0
        %v1898 = vadd.f32 0.0, %v1897
        %v1899 = vpop.f32.mrb[0].mxu0
        %1900 = vdwg.mxu0
        %v1901 = vadd.f32 %v1684, %v1898
        %v1902 = vld [vmem:[%s13] sm:$0x1]
        %v1903 = vlaneseq
        %v1904 = vshrl.u32 %v1903, 7
        %v1905 = vsub.s32 0, %v1904
        %v1906 = vrot.slane %v1902, %v1905
        %v1907 = vadd.f32 %v1901, %v1906
        %v1908 = vld [vmem:[%s3 + $0x1] sm:$0x1]
        %v1909 = vld [vmem:[%s4 + $0x1] sm:$0x1]
        %v1910 = vsel %vm606, %v1907, 0.0
        %1911 = vadd.xlane.f32.xlu0 %v1910
        %v1912 = vpop.xlane.xlu0 %1911
        %v1913 = vmul.f32 %v1912, %v610
        %v1914 = vsub.f32 %v1907, %v1913
        %v1915 = vmul.f32 %v1914, %v1914
        %v1916 = vsel %vm606, %v1915, 0.0
        %1917 = vadd.xlane.f32.xlu0 %v1916
        %v1918 = vpop.xlane.xlu0 %1917
        %v1919 = vmul.f32 %v1918, %v610
        %v1920 = vadd.f32 %v1919, 1e-05
        %v1921 = vrsqrt.pop %v1920
        %v1922 = vmul.f32 %v1914, %v1921
        %v1923 = vlaneseq
        %v1924 = vshrl.u32 %v1923, 7
        %v1925 = vsub.s32 0, %v1924
        %v1926 = vrot.slane %v1908, %v1925
        %v1927 = vmul.f32 %v1922, %v1926
        %v1928 = vlaneseq
        %v1929 = vshrl.u32 %v1928, 7
        %v1930 = vsub.s32 0, %v1929
        %v1931 = vrot.slane %v1909, %v1930
        %v1932 = vadd.f32 %v1927, %v1931
        %s1933 = scalar_lea.vmem %s5, 64
        %v1934 = vld [vmem:[%s1933] sm:$0xff]
        %v1935 = vld [vmem:[%s1933 + $0x8] sm:$0xff]
        %v1936 = vld [vmem:[%s1933 + $0x10] sm:$0xff]
        %v1937 = vld [vmem:[%s1933 + $0x18] sm:$0xff]
        %v1938 = vld [vmem:[%s1933 + $0x20] sm:$0xff]
        %v1939 = vld [vmem:[%s1933 + $0x28] sm:$0xff]
        %v1940 = vld [vmem:[%s1933 + $0x30] sm:$0xff]
        %v1941 = vld [vmem:[%s1933 + $0x38] sm:$0xff]
        %v1943 = vsel %vm606, %v1932, 0
        %1945 = vmatprep.subr.mxu0 %v1935
        %1946 = vmatpush1.msra.mxu0 %v1934
        %1947 = vmatprep.subr.mxu0 %v1937
        %1948 = vmatpush1.msra.mxu0 %v1936
        %1949 = vmatprep.subr.mxu0 %v1939
        %1950 = vmatpush1.msra.mxu0 %v1938
        %1951 = vmatprep.subr.mxu0 %v1941
        %1952 = vmatpush1.msra.mxu0 %v1940
        %1953 = vmatprep.subr.mxu0 0.0
        %1954 = vmatpush1.msra.mxu0 0.0
        %1955 = vmatprep.subr.mxu0 0.0
        %1956 = vmatpush1.msra.mxu0 0.0
        %1957 = vmatprep.subr.mxu0 0.0
        %1958 = vmatpush1.msra.mxu0 0.0
        %1959 = vmatprep.subr.mxu0 0.0
        %1960 = vmatpush1.msra.mxu0 0.0
        %1961 = vmatprep.subr.mxu0 0.0
        %1962 = vmatpush1.msra.mxu0 0.0
        %1963 = vmatprep.subr.mxu0 0.0
        %1964 = vmatpush1.msra.mxu0 0.0
        %1965 = vmatprep.subr.mxu0 0.0
        %1966 = vmatpush1.msra.mxu0 0.0
        %1967 = vmatprep.subr.mxu0 0.0
        %1968 = vmatpush1.msra.mxu0 0.0
        %1969 = vmatprep.subr.mxu0 0.0
        %1970 = vmatpush1.msra.mxu0 0.0
        %1971 = vmatprep.subr.mxu0 0.0
        %1972 = vmatpush1.msra.mxu0 0.0
        %1973 = vmatprep.subr.mxu0 0.0
        %1974 = vmatpush1.msra.mxu0 0.0
        %1975 = vmatprep.subr.mxu0 0.0
        %1976 = vmatpush1.msra.mxu0 0.0
        %1977 = vmatprep.subr.mxu0 0.0
        %1978 = vmatpush1.msra.mxu0 0.0
        %1979 = vmatprep.subr.mxu0 0.0
        %1980 = vmatpush1.msra.mxu0 0.0
        %1981 = vmatprep.subr.mxu0 0.0
        %1982 = vmatpush1.msra.mxu0 0.0
        %1983 = vmatprep.subr.mxu0 0.0
        %1984 = vmatpush1.msra.mxu0 0.0
        %1985 = vmatprep.subr.mxu0 0.0
        %1986 = vmatpush1.msra.mxu0 0.0
        %1987 = vmatprep.subr.mxu0 0.0
        %1988 = vmatpush1.msra.mxu0 0.0
        %1989 = vmatprep.subr.mxu0 0.0
        %1990 = vmatpush1.msra.mxu0 0.0
        %1991 = vmatprep.subr.mxu0 0.0
        %1992 = vmatpush1.msra.mxu0 0.0
        %1993 = vmatprep.subr.mxu0 0.0
        %1994 = vmatpush1.msra.mxu0 0.0
        %1995 = vmatprep.subr.mxu0 0.0
        %1996 = vmatpush1.msra.mxu0 0.0
        %1997 = vmatprep.subr.mxu0 0.0
        %1998 = vmatpush1.msra.mxu0 0.0
        %1999 = vmatprep.subr.mxu0 0.0
        %2000 = vmatpush1.msra.mxu0 0.0
        %2001 = vmatprep.subr.mxu0 0.0
        %2002 = vmatpush1.msra.mxu0 0.0
        %2003 = vmatprep.subr.mxu0 0.0
        %2004 = vmatpush1.msra.mxu0 0.0
        %2005 = vmatprep.subr.mxu0 0.0
        %2006 = vmatpush1.msra.mxu0 0.0
        %2007 = vmatprep.subr.mxu0 0.0
        %2008 = vmatpush1.msra.mxu0 0.0
        %2009 = vmatprep.mubr.f32.mxu0 0.0
        %2010 = vmatmul.mubr.f32.gmra.mrb[0].mxu0 %v1943
        %v2011 = vpop.f32.mrb[0].mxu0
        %v2012 = vadd.f32 0.0, %v2011
        %v2013 = vpop.f32.mrb[0].mxu0
        %v2014 = vadd.f32 0.0, %v2013
        %2015 = vdwg.mxu0
        %s2016 = scalar_lea.vmem %s6, 64
        %v2017 = vld [vmem:[%s2016] sm:$0xff]
        %v2018 = vld [vmem:[%s2016 + $0x8] sm:$0xff]
        %v2019 = vld [vmem:[%s2016 + $0x10] sm:$0xff]
        %v2020 = vld [vmem:[%s2016 + $0x18] sm:$0xff]
        %v2021 = vld [vmem:[%s2016 + $0x20] sm:$0xff]
        %v2022 = vld [vmem:[%s2016 + $0x28] sm:$0xff]
        %v2023 = vld [vmem:[%s2016 + $0x30] sm:$0xff]
        %v2024 = vld [vmem:[%s2016 + $0x38] sm:$0xff]
        %2026 = vrot.lane.b32.xlu0 %v2012, 64
        %v2027 = vpop.permute.xlu0 %2026
        %v2028 = vsel %vm724, %v2012, 0
        %v2030 = vsel %vm724, %v2027, 0
        %2032 = vmatprep.subr.mxu0 0.0
        %2033 = vmatpush1.xpose.msra.mxu0 %v2030
        %2034 = vmatprep.subr.mxu0 0.0
        %2035 = vmatpush1.xpose.msra.mxu0 0.0
        %2036 = vmatprep.subr.mxu0 0.0
        %2037 = vmatpush1.xpose.msra.mxu0 0.0
        %2038 = vmatprep.subr.mxu0 0.0
        %2039 = vmatpush1.xpose.msra.mxu0 0.0
        %2040 = vmatprep.subr.mxu0 0.0
        %2041 = vmatpush1.xpose.msra.mxu0 0.0
        %2042 = vmatprep.subr.mxu0 0.0
        %2043 = vmatpush1.xpose.msra.mxu0 0.0
        %2044 = vmatprep.subr.mxu0 0.0
        %2045 = vmatpush1.xpose.msra.mxu0 0.0
        %2046 = vmatprep.subr.mxu0 0.0
        %2047 = vmatpush1.xpose.msra.mxu0 0.0
        %2048 = vmatprep.subr.mxu0 0.0
        %2049 = vmatpush1.xpose.msra.mxu0 0.0
        %2050 = vmatprep.subr.mxu0 0.0
        %2051 = vmatpush1.xpose.msra.mxu0 0.0
        %2052 = vmatprep.subr.mxu0 0.0
        %2053 = vmatpush1.xpose.msra.mxu0 0.0
        %2054 = vmatprep.subr.mxu0 0.0
        %2055 = vmatpush1.xpose.msra.mxu0 0.0
        %2056 = vmatprep.subr.mxu0 0.0
        %2057 = vmatpush1.xpose.msra.mxu0 0.0
        %2058 = vmatprep.subr.mxu0 0.0
        %2059 = vmatpush1.xpose.msra.mxu0 0.0
        %2060 = vmatprep.subr.mxu0 0.0
        %2061 = vmatpush1.xpose.msra.mxu0 0.0
        %2062 = vmatprep.subr.mxu0 0.0
        %2063 = vmatpush1.xpose.msra.mxu0 0.0
        %2064 = vmatprep.subr.mxu0 0.0
        %2065 = vmatpush1.xpose.msra.mxu0 0.0
        %2066 = vmatprep.subr.mxu0 0.0
        %2067 = vmatpush1.xpose.msra.mxu0 0.0
        %2068 = vmatprep.subr.mxu0 0.0
        %2069 = vmatpush1.xpose.msra.mxu0 0.0
        %2070 = vmatprep.subr.mxu0 0.0
        %2071 = vmatpush1.xpose.msra.mxu0 0.0
        %2072 = vmatprep.subr.mxu0 0.0
        %2073 = vmatpush1.xpose.msra.mxu0 0.0
        %2074 = vmatprep.subr.mxu0 0.0
        %2075 = vmatpush1.xpose.msra.mxu0 0.0
        %2076 = vmatprep.subr.mxu0 0.0
        %2077 = vmatpush1.xpose.msra.mxu0 0.0
        %2078 = vmatprep.subr.mxu0 0.0
        %2079 = vmatpush1.xpose.msra.mxu0 0.0
        %2080 = vmatprep.subr.mxu0 0.0
        %2081 = vmatpush1.xpose.msra.mxu0 0.0
        %2082 = vmatprep.subr.mxu0 0.0
        %2083 = vmatpush1.xpose.msra.mxu0 0.0
        %2084 = vmatprep.subr.mxu0 0.0
        %2085 = vmatpush1.xpose.msra.mxu0 0.0
        %2086 = vmatprep.subr.mxu0 0.0
        %2087 = vmatpush1.xpose.msra.mxu0 0.0
        %2088 = vmatprep.subr.mxu0 0.0
        %2089 = vmatpush1.xpose.msra.mxu0 0.0
        %2090 = vmatprep.subr.mxu0 0.0
        %2091 = vmatpush1.xpose.msra.mxu0 0.0
        %2092 = vmatprep.subr.mxu0 0.0
        %2093 = vmatpush1.xpose.msra.mxu0 0.0
        %2094 = vmatprep.subr.mxu0 0.0
        %2095 = vmatpush1.xpose.msra.mxu0 0.0
        %2096 = vmatprep.mubr.f32.mxu0 0.0
        %2097 = vmatmul.mubr.f32.gmra.mrb[0].mxu0 %v2028
        %v2098 = vpop.f32.mrb[0].mxu0
        %v2099 = vadd.f32 0.0, %v2098
        %v2100 = vpop.f32.mrb[0].mxu0
        %2101 = vdwg.mxu0
        %v2102 = vmul.f32 %v2099, 0.25
        %v2103 = vsel %vm800, %v2102, -inf
        %2104 = vmax.xlane.f32.xlu0 %v2103
        %v2105 = vpop.xlane.xlu0 %2104
        %v2106 = vsub.f32 %v2102, %v2105
        %v2107 = vmul.f32 %v2106, 1.442695
        %v2108 = vpow.pop %v2107
        %v2109 = vsel %vm800, %v2108, 0.0
        %2110 = vadd.xlane.f32.xlu0 %v2109
        %v2111 = vpop.xlane.xlu0 %2110
        %v2112 = vrcp.pop %v2111
        %v2113 = vmul.f32 %v2108, %v2112
        %v2115 = vsel %vm800, %v2113, 0
        %2117 = vmatprep.subr.mxu0 0.0
        %2118 = vmatpush1.msra.mxu0 %v2014
        %2119 = vmatprep.subr.mxu0 0.0
        %2120 = vmatpush1.msra.mxu0 0.0
        %2121 = vmatprep.subr.mxu0 0.0
        %2122 = vmatpush1.msra.mxu0 0.0
        %2123 = vmatprep.subr.mxu0 0.0
        %2124 = vmatpush1.msra.mxu0 0.0
        %2125 = vmatprep.subr.mxu0 0.0
        %2126 = vmatpush1.msra.mxu0 0.0
        %2127 = vmatprep.subr.mxu0 0.0
        %2128 = vmatpush1.msra.mxu0 0.0
        %2129 = vmatprep.subr.mxu0 0.0
        %2130 = vmatpush1.msra.mxu0 0.0
        %2131 = vmatprep.subr.mxu0 0.0
        %2132 = vmatpush1.msra.mxu0 0.0
        %2133 = vmatprep.subr.mxu0 0.0
        %2134 = vmatpush1.msra.mxu0 0.0
        %2135 = vmatprep.subr.mxu0 0.0
        %2136 = vmatpush1.msra.mxu0 0.0
        %2137 = vmatprep.subr.mxu0 0.0
        %2138 = vmatpush1.msra.mxu0 0.0
        %2139 = vmatprep.subr.mxu0 0.0
        %2140 = vmatpush1.msra.mxu0 0.0
        %2141 = vmatprep.subr.mxu0 0.0
        %2142 = vmatpush1.msra.mxu0 0.0
        %2143 = vmatprep.subr.mxu0 0.0
        %2144 = vmatpush1.msra.mxu0 0.0
        %2145 = vmatprep.subr.mxu0 0.0
        %2146 = vmatpush1.msra.mxu0 0.0
        %2147 = vmatprep.subr.mxu0 0.0
        %2148 = vmatpush1.msra.mxu0 0.0
        %2149 = vmatprep.subr.mxu0 0.0
        %2150 = vmatpush1.msra.mxu0 0.0
        %2151 = vmatprep.subr.mxu0 0.0
        %2152 = vmatpush1.msra.mxu0 0.0
        %2153 = vmatprep.subr.mxu0 0.0
        %2154 = vmatpush1.msra.mxu0 0.0
        %2155 = vmatprep.subr.mxu0 0.0
        %2156 = vmatpush1.msra.mxu0 0.0
        %2157 = vmatprep.subr.mxu0 0.0
        %2158 = vmatpush1.msra.mxu0 0.0
        %2159 = vmatprep.subr.mxu0 0.0
        %2160 = vmatpush1.msra.mxu0 0.0
        %2161 = vmatprep.subr.mxu0 0.0
        %2162 = vmatpush1.msra.mxu0 0.0
        %2163 = vmatprep.subr.mxu0 0.0
        %2164 = vmatpush1.msra.mxu0 0.0
        %2165 = vmatprep.subr.mxu0 0.0
        %2166 = vmatpush1.msra.mxu0 0.0
        %2167 = vmatprep.subr.mxu0 0.0
        %2168 = vmatpush1.msra.mxu0 0.0
        %2169 = vmatprep.subr.mxu0 0.0
        %2170 = vmatpush1.msra.mxu0 0.0
        %2171 = vmatprep.subr.mxu0 0.0
        %2172 = vmatpush1.msra.mxu0 0.0
        %2173 = vmatprep.subr.mxu0 0.0
        %2174 = vmatpush1.msra.mxu0 0.0
        %2175 = vmatprep.subr.mxu0 0.0
        %2176 = vmatpush1.msra.mxu0 0.0
        %2177 = vmatprep.subr.mxu0 0.0
        %2178 = vmatpush1.msra.mxu0 0.0
        %2179 = vmatprep.subr.mxu0 0.0
        %2180 = vmatpush1.msra.mxu0 0.0
        %2181 = vmatprep.mubr.f32.mxu0 0.0
        %2182 = vmatmul.mubr.f32.gmra.mrb[0].mxu0 %v2115
        %v2183 = vpop.f32.mrb[0].mxu0
        %v2184 = vadd.f32 0.0, %v2183
        %v2185 = vpop.f32.mrb[0].mxu0
        %2186 = vdwg.mxu0
        %2187 = vrot.lane.b32.xlu0 %v2012, 112
        %v2188 = vpop.permute.xlu0 %2187
        %2189 = vrot.lane.b32.xlu0 %v2012, 48
        %v2190 = vpop.permute.xlu0 %2189
        %v2191 = vsel %vm724, %v2188, 0
        %v2193 = vsel %vm724, %v2190, 0
        %2195 = vmatprep.subr.mxu0 0.0
        %2196 = vmatpush1.xpose.msra.mxu0 %v2193
        %2197 = vmatprep.subr.mxu0 0.0
        %2198 = vmatpush1.xpose.msra.mxu0 0.0
        %2199 = vmatprep.subr.mxu0 0.0
        %2200 = vmatpush1.xpose.msra.mxu0 0.0
        %2201 = vmatprep.subr.mxu0 0.0
        %2202 = vmatpush1.xpose.msra.mxu0 0.0
        %2203 = vmatprep.subr.mxu0 0.0
        %2204 = vmatpush1.xpose.msra.mxu0 0.0
        %2205 = vmatprep.subr.mxu0 0.0
        %2206 = vmatpush1.xpose.msra.mxu0 0.0
        %2207 = vmatprep.subr.mxu0 0.0
        %2208 = vmatpush1.xpose.msra.mxu0 0.0
        %2209 = vmatprep.subr.mxu0 0.0
        %2210 = vmatpush1.xpose.msra.mxu0 0.0
        %2211 = vmatprep.subr.mxu0 0.0
        %2212 = vmatpush1.xpose.msra.mxu0 0.0
        %2213 = vmatprep.subr.mxu0 0.0
        %2214 = vmatpush1.xpose.msra.mxu0 0.0
        %2215 = vmatprep.subr.mxu0 0.0
        %2216 = vmatpush1.xpose.msra.mxu0 0.0
        %2217 = vmatprep.subr.mxu0 0.0
        %2218 = vmatpush1.xpose.msra.mxu0 0.0
        %2219 = vmatprep.subr.mxu0 0.0
        %2220 = vmatpush1.xpose.msra.mxu0 0.0
        %2221 = vmatprep.subr.mxu0 0.0
        %2222 = vmatpush1.xpose.msra.mxu0 0.0
        %2223 = vmatprep.subr.mxu0 0.0
        %2224 = vmatpush1.xpose.msra.mxu0 0.0
        %2225 = vmatprep.subr.mxu0 0.0
        %2226 = vmatpush1.xpose.msra.mxu0 0.0
        %2227 = vmatprep.subr.mxu0 0.0
        %2228 = vmatpush1.xpose.msra.mxu0 0.0
        %2229 = vmatprep.subr.mxu0 0.0
        %2230 = vmatpush1.xpose.msra.mxu0 0.0
        %2231 = vmatprep.subr.mxu0 0.0
        %2232 = vmatpush1.xpose.msra.mxu0 0.0
        %2233 = vmatprep.subr.mxu0 0.0
        %2234 = vmatpush1.xpose.msra.mxu0 0.0
        %2235 = vmatprep.subr.mxu0 0.0
        %2236 = vmatpush1.xpose.msra.mxu0 0.0
        %2237 = vmatprep.subr.mxu0 0.0
        %2238 = vmatpush1.xpose.msra.mxu0 0.0
        %2239 = vmatprep.subr.mxu0 0.0
        %2240 = vmatpush1.xpose.msra.mxu0 0.0
        %2241 = vmatprep.subr.mxu0 0.0
        %2242 = vmatpush1.xpose.msra.mxu0 0.0
        %2243 = vmatprep.subr.mxu0 0.0
        %2244 = vmatpush1.xpose.msra.mxu0 0.0
        %2245 = vmatprep.subr.mxu0 0.0
        %2246 = vmatpush1.xpose.msra.mxu0 0.0
        %2247 = vmatprep.subr.mxu0 0.0
        %2248 = vmatpush1.xpose.msra.mxu0 0.0
        %2249 = vmatprep.subr.mxu0 0.0
        %2250 = vmatpush1.xpose.msra.mxu0 0.0
        %2251 = vmatprep.subr.mxu0 0.0
        %2252 = vmatpush1.xpose.msra.mxu0 0.0
        %2253 = vmatprep.subr.mxu0 0.0
        %2254 = vmatpush1.xpose.msra.mxu0 0.0
        %2255 = vmatprep.subr.mxu0 0.0
        %2256 = vmatpush1.xpose.msra.mxu0 0.0
        %2257 = vmatprep.subr.mxu0 0.0
        %2258 = vmatpush1.xpose.msra.mxu0 0.0
        %2259 = vmatprep.mubr.f32.mxu0 0.0
        %2260 = vmatmul.mubr.f32.gmra.mrb[0].mxu0 %v2191
        %v2261 = vpop.f32.mrb[0].mxu0
        %v2262 = vadd.f32 0.0, %v2261
        %v2263 = vpop.f32.mrb[0].mxu0
        %2264 = vdwg.mxu0
        %v2265 = vmul.f32 %v2262, 0.25
        %v2266 = vsel %vm800, %v2265, -inf
        %2267 = vmax.xlane.f32.xlu0 %v2266
        %v2268 = vpop.xlane.xlu0 %2267
        %v2269 = vsub.f32 %v2265, %v2268
        %v2270 = vmul.f32 %v2269, 1.442695
        %v2271 = vpow.pop %v2270
        %v2272 = vsel %vm800, %v2271, 0.0
        %2273 = vadd.xlane.f32.xlu0 %v2272
        %v2274 = vpop.xlane.xlu0 %2273
        %v2275 = vrcp.pop %v2274
        %v2276 = vmul.f32 %v2271, %v2275
        %2278 = vrot.lane.b32.xlu0 %v2014, 112
        %v2279 = vpop.permute.xlu0 %2278
        %v2282 = vsel %vm800, %v2276, 0
        %2284 = vmatprep.subr.mxu0 0.0
        %2285 = vmatpush1.msra.mxu0 %v2279
        %2286 = vmatprep.subr.mxu0 0.0
        %2287 = vmatpush1.msra.mxu0 0.0
        %2288 = vmatprep.subr.mxu0 0.0
        %2289 = vmatpush1.msra.mxu0 0.0
        %2290 = vmatprep.subr.mxu0 0.0
        %2291 = vmatpush1.msra.mxu0 0.0
        %2292 = vmatprep.subr.mxu0 0.0
        %2293 = vmatpush1.msra.mxu0 0.0
        %2294 = vmatprep.subr.mxu0 0.0
        %2295 = vmatpush1.msra.mxu0 0.0
        %2296 = vmatprep.subr.mxu0 0.0
        %2297 = vmatpush1.msra.mxu0 0.0
        %2298 = vmatprep.subr.mxu0 0.0
        %2299 = vmatpush1.msra.mxu0 0.0
        %2300 = vmatprep.subr.mxu0 0.0
        %2301 = vmatpush1.msra.mxu0 0.0
        %2302 = vmatprep.subr.mxu0 0.0
        %2303 = vmatpush1.msra.mxu0 0.0
        %2304 = vmatprep.subr.mxu0 0.0
        %2305 = vmatpush1.msra.mxu0 0.0
        %2306 = vmatprep.subr.mxu0 0.0
        %2307 = vmatpush1.msra.mxu0 0.0
        %2308 = vmatprep.subr.mxu0 0.0
        %2309 = vmatpush1.msra.mxu0 0.0
        %2310 = vmatprep.subr.mxu0 0.0
        %2311 = vmatpush1.msra.mxu0 0.0
        %2312 = vmatprep.subr.mxu0 0.0
        %2313 = vmatpush1.msra.mxu0 0.0
        %2314 = vmatprep.subr.mxu0 0.0
        %2315 = vmatpush1.msra.mxu0 0.0
        %2316 = vmatprep.subr.mxu0 0.0
        %2317 = vmatpush1.msra.mxu0 0.0
        %2318 = vmatprep.subr.mxu0 0.0
        %2319 = vmatpush1.msra.mxu0 0.0
        %2320 = vmatprep.subr.mxu0 0.0
        %2321 = vmatpush1.msra.mxu0 0.0
        %2322 = vmatprep.subr.mxu0 0.0
        %2323 = vmatpush1.msra.mxu0 0.0
        %2324 = vmatprep.subr.mxu0 0.0
        %2325 = vmatpush1.msra.mxu0 0.0
        %2326 = vmatprep.subr.mxu0 0.0
        %2327 = vmatpush1.msra.mxu0 0.0
        %2328 = vmatprep.subr.mxu0 0.0
        %2329 = vmatpush1.msra.mxu0 0.0
        %2330 = vmatprep.subr.mxu0 0.0
        %2331 = vmatpush1.msra.mxu0 0.0
        %2332 = vmatprep.subr.mxu0 0.0
        %2333 = vmatpush1.msra.mxu0 0.0
        %2334 = vmatprep.subr.mxu0 0.0
        %2335 = vmatpush1.msra.mxu0 0.0
        %2336 = vmatprep.subr.mxu0 0.0
        %2337 = vmatpush1.msra.mxu0 0.0
        %2338 = vmatprep.subr.mxu0 0.0
        %2339 = vmatpush1.msra.mxu0 0.0
        %2340 = vmatprep.subr.mxu0 0.0
        %2341 = vmatpush1.msra.mxu0 0.0
        %2342 = vmatprep.subr.mxu0 0.0
        %2343 = vmatpush1.msra.mxu0 0.0
        %2344 = vmatprep.subr.mxu0 0.0
        %2345 = vmatpush1.msra.mxu0 0.0
        %2346 = vmatprep.subr.mxu0 0.0
        %2347 = vmatpush1.msra.mxu0 0.0
        %2348 = vmatprep.mubr.f32.mxu0 0.0
        %2349 = vmatmul.mubr.f32.gmra.mrb[0].mxu0 %v2282
        %v2350 = vpop.f32.mrb[0].mxu0
        %v2351 = vadd.f32 0.0, %v2350
        %v2352 = vpop.f32.mrb[0].mxu0
        %2353 = vdwg.mxu0
        %v2355 = vsel %vm724, %v2351, 0
        %2357 = vmatprep.subr.mxu0 0.0
        %2358 = vmatpush1.msra.mxu0 %v2019
        %2359 = vmatprep.subr.mxu0 0.0
        %2360 = vmatpush1.msra.mxu0 %v2020
        %2361 = vmatprep.subr.mxu0 0.0
        %2362 = vmatpush1.msra.mxu0 0.0
        %2363 = vmatprep.subr.mxu0 0.0
        %2364 = vmatpush1.msra.mxu0 0.0
        %2365 = vmatprep.subr.mxu0 0.0
        %2366 = vmatpush1.msra.mxu0 0.0
        %2367 = vmatprep.subr.mxu0 0.0
        %2368 = vmatpush1.msra.mxu0 0.0
        %2369 = vmatprep.subr.mxu0 0.0
        %2370 = vmatpush1.msra.mxu0 0.0
        %2371 = vmatprep.subr.mxu0 0.0
        %2372 = vmatpush1.msra.mxu0 0.0
        %2373 = vmatprep.subr.mxu0 0.0
        %2374 = vmatpush1.msra.mxu0 0.0
        %2375 = vmatprep.subr.mxu0 0.0
        %2376 = vmatpush1.msra.mxu0 0.0
        %2377 = vmatprep.subr.mxu0 0.0
        %2378 = vmatpush1.msra.mxu0 0.0
        %2379 = vmatprep.subr.mxu0 0.0
        %2380 = vmatpush1.msra.mxu0 0.0
        %2381 = vmatprep.subr.mxu0 0.0
        %2382 = vmatpush1.msra.mxu0 0.0
        %2383 = vmatprep.subr.mxu0 0.0
        %2384 = vmatpush1.msra.mxu0 0.0
        %2385 = vmatprep.subr.mxu0 0.0
        %2386 = vmatpush1.msra.mxu0 0.0
        %2387 = vmatprep.subr.mxu0 0.0
        %2388 = vmatpush1.msra.mxu0 0.0
        %2389 = vmatprep.subr.mxu0 0.0
        %2390 = vmatpush1.msra.mxu0 0.0
        %2391 = vmatprep.subr.mxu0 0.0
        %2392 = vmatpush1.msra.mxu0 0.0
        %2393 = vmatprep.subr.mxu0 0.0
        %2394 = vmatpush1.msra.mxu0 0.0
        %2395 = vmatprep.subr.mxu0 0.0
        %2396 = vmatpush1.msra.mxu0 0.0
        %2397 = vmatprep.subr.mxu0 0.0
        %2398 = vmatpush1.msra.mxu0 0.0
        %2399 = vmatprep.subr.mxu0 0.0
        %2400 = vmatpush1.msra.mxu0 0.0
        %2401 = vmatprep.subr.mxu0 0.0
        %2402 = vmatpush1.msra.mxu0 0.0
        %2403 = vmatprep.subr.mxu0 0.0
        %2404 = vmatpush1.msra.mxu0 0.0
        %2405 = vmatprep.subr.mxu0 0.0
        %2406 = vmatpush1.msra.mxu0 0.0
        %2407 = vmatprep.subr.mxu0 0.0
        %2408 = vmatpush1.msra.mxu0 0.0
        %2409 = vmatprep.subr.mxu0 0.0
        %2410 = vmatpush1.msra.mxu0 0.0
        %2411 = vmatprep.subr.mxu0 0.0
        %2412 = vmatpush1.msra.mxu0 0.0
        %2413 = vmatprep.subr.mxu0 0.0
        %2414 = vmatpush1.msra.mxu0 0.0
        %2415 = vmatprep.subr.mxu0 0.0
        %2416 = vmatpush1.msra.mxu0 0.0
        %2417 = vmatprep.subr.mxu0 0.0
        %2418 = vmatpush1.msra.mxu0 0.0
        %2419 = vmatprep.subr.mxu0 0.0
        %2420 = vmatpush1.msra.mxu0 0.0
        %2421 = vmatprep.mubr.f32.mxu0 0.0
        %2422 = vmatmul.mubr.f32.gmra.mrb[0].mxu0 %v2355
        %v2423 = vpop.f32.mrb[0].mxu0
        %v2424 = vadd.f32 0.0, %v2423
        %v2425 = vpop.f32.mrb[0].mxu0
        %2426 = vdwg.mxu0
        %v2428 = vsel %vm724, %v2184, 0
        %2430 = vmatprep.subr.mxu0 0.0
        %2431 = vmatpush1.msra.mxu0 %v2017
        %2432 = vmatprep.subr.mxu0 0.0
        %2433 = vmatpush1.msra.mxu0 %v2018
        %2434 = vmatprep.subr.mxu0 0.0
        %2435 = vmatpush1.msra.mxu0 0.0
        %2436 = vmatprep.subr.mxu0 0.0
        %2437 = vmatpush1.msra.mxu0 0.0
        %2438 = vmatprep.subr.mxu0 0.0
        %2439 = vmatpush1.msra.mxu0 0.0
        %2440 = vmatprep.subr.mxu0 0.0
        %2441 = vmatpush1.msra.mxu0 0.0
        %2442 = vmatprep.subr.mxu0 0.0
        %2443 = vmatpush1.msra.mxu0 0.0
        %2444 = vmatprep.subr.mxu0 0.0
        %2445 = vmatpush1.msra.mxu0 0.0
        %2446 = vmatprep.subr.mxu0 0.0
        %2447 = vmatpush1.msra.mxu0 0.0
        %2448 = vmatprep.subr.mxu0 0.0
        %2449 = vmatpush1.msra.mxu0 0.0
        %2450 = vmatprep.subr.mxu0 0.0
        %2451 = vmatpush1.msra.mxu0 0.0
        %2452 = vmatprep.subr.mxu0 0.0
        %2453 = vmatpush1.msra.mxu0 0.0
        %2454 = vmatprep.subr.mxu0 0.0
        %2455 = vmatpush1.msra.mxu0 0.0
        %2456 = vmatprep.subr.mxu0 0.0
        %2457 = vmatpush1.msra.mxu0 0.0
        %2458 = vmatprep.subr.mxu0 0.0
        %2459 = vmatpush1.msra.mxu0 0.0
        %2460 = vmatprep.subr.mxu0 0.0
        %2461 = vmatpush1.msra.mxu0 0.0
        %2462 = vmatprep.subr.mxu0 0.0
        %2463 = vmatpush1.msra.mxu0 0.0
        %2464 = vmatprep.subr.mxu0 0.0
        %2465 = vmatpush1.msra.mxu0 0.0
        %2466 = vmatprep.subr.mxu0 0.0
        %2467 = vmatpush1.msra.mxu0 0.0
        %2468 = vmatprep.subr.mxu0 0.0
        %2469 = vmatpush1.msra.mxu0 0.0
        %2470 = vmatprep.subr.mxu0 0.0
        %2471 = vmatpush1.msra.mxu0 0.0
        %2472 = vmatprep.subr.mxu0 0.0
        %2473 = vmatpush1.msra.mxu0 0.0
        %2474 = vmatprep.subr.mxu0 0.0
        %2475 = vmatpush1.msra.mxu0 0.0
        %2476 = vmatprep.subr.mxu0 0.0
        %2477 = vmatpush1.msra.mxu0 0.0
        %2478 = vmatprep.subr.mxu0 0.0
        %2479 = vmatpush1.msra.mxu0 0.0
        %2480 = vmatprep.subr.mxu0 0.0
        %2481 = vmatpush1.msra.mxu0 0.0
        %2482 = vmatprep.subr.mxu0 0.0
        %2483 = vmatpush1.msra.mxu0 0.0
        %2484 = vmatprep.subr.mxu0 0.0
        %2485 = vmatpush1.msra.mxu0 0.0
        %2486 = vmatprep.subr.mxu0 0.0
        %2487 = vmatpush1.msra.mxu0 0.0
        %2488 = vmatprep.subr.mxu0 0.0
        %2489 = vmatpush1.msra.mxu0 0.0
        %2490 = vmatprep.subr.mxu0 0.0
        %2491 = vmatpush1.msra.mxu0 0.0
        %2492 = vmatprep.subr.mxu0 0.0
        %2493 = vmatpush1.msra.mxu0 0.0
        %2494 = vmatprep.mubr.f32.mxu0 0.0
        %2495 = vmatmul.mubr.f32.gmra.mrb[0].mxu0 %v2428
        %v2496 = vpop.f32.mrb[0].mxu0
        %v2497 = vadd.f32 %v2424, %v2496
        %v2498 = vpop.f32.mrb[0].mxu0
        %2499 = vdwg.mxu0
        %2500 = vrot.lane.b32.xlu0 %v2012, 96
        %v2501 = vpop.permute.xlu0 %2500
        %2502 = vrot.lane.b32.xlu0 %v2012, 32
        %v2503 = vpop.permute.xlu0 %2502
        %v2504 = vsel %vm724, %v2501, 0
        %v2506 = vsel %vm724, %v2503, 0
        %2508 = vmatprep.subr.mxu0 0.0
        %2509 = vmatpush1.xpose.msra.mxu0 %v2506
        %2510 = vmatprep.subr.mxu0 0.0
        %2511 = vmatpush1.xpose.msra.mxu0 0.0
        %2512 = vmatprep.subr.mxu0 0.0
        %2513 = vmatpush1.xpose.msra.mxu0 0.0
        %2514 = vmatprep.subr.mxu0 0.0
        %2515 = vmatpush1.xpose.msra.mxu0 0.0
        %2516 = vmatprep.subr.mxu0 0.0
        %2517 = vmatpush1.xpose.msra.mxu0 0.0
        %2518 = vmatprep.subr.mxu0 0.0
        %2519 = vmatpush1.xpose.msra.mxu0 0.0
        %2520 = vmatprep.subr.mxu0 0.0
        %2521 = vmatpush1.xpose.msra.mxu0 0.0
        %2522 = vmatprep.subr.mxu0 0.0
        %2523 = vmatpush1.xpose.msra.mxu0 0.0
        %2524 = vmatprep.subr.mxu0 0.0
        %2525 = vmatpush1.xpose.msra.mxu0 0.0
        %2526 = vmatprep.subr.mxu0 0.0
        %2527 = vmatpush1.xpose.msra.mxu0 0.0
        %2528 = vmatprep.subr.mxu0 0.0
        %2529 = vmatpush1.xpose.msra.mxu0 0.0
        %2530 = vmatprep.subr.mxu0 0.0
        %2531 = vmatpush1.xpose.msra.mxu0 0.0
        %2532 = vmatprep.subr.mxu0 0.0
        %2533 = vmatpush1.xpose.msra.mxu0 0.0
        %2534 = vmatprep.subr.mxu0 0.0
        %2535 = vmatpush1.xpose.msra.mxu0 0.0
        %2536 = vmatprep.subr.mxu0 0.0
        %2537 = vmatpush1.xpose.msra.mxu0 0.0
        %2538 = vmatprep.subr.mxu0 0.0
        %2539 = vmatpush1.xpose.msra.mxu0 0.0
        %2540 = vmatprep.subr.mxu0 0.0
        %2541 = vmatpush1.xpose.msra.mxu0 0.0
        %2542 = vmatprep.subr.mxu0 0.0
        %2543 = vmatpush1.xpose.msra.mxu0 0.0
        %2544 = vmatprep.subr.mxu0 0.0
        %2545 = vmatpush1.xpose.msra.mxu0 0.0
        %2546 = vmatprep.subr.mxu0 0.0
        %2547 = vmatpush1.xpose.msra.mxu0 0.0
        %2548 = vmatprep.subr.mxu0 0.0
        %2549 = vmatpush1.xpose.msra.mxu0 0.0
        %2550 = vmatprep.subr.mxu0 0.0
        %2551 = vmatpush1.xpose.msra.mxu0 0.0
        %2552 = vmatprep.subr.mxu0 0.0
        %2553 = vmatpush1.xpose.msra.mxu0 0.0
        %2554 = vmatprep.subr.mxu0 0.0
        %2555 = vmatpush1.xpose.msra.mxu0 0.0
        %2556 = vmatprep.subr.mxu0 0.0
        %2557 = vmatpush1.xpose.msra.mxu0 0.0
        %2558 = vmatprep.subr.mxu0 0.0
        %2559 = vmatpush1.xpose.msra.mxu0 0.0
        %2560 = vmatprep.subr.mxu0 0.0
        %2561 = vmatpush1.xpose.msra.mxu0 0.0
        %2562 = vmatprep.subr.mxu0 0.0
        %2563 = vmatpush1.xpose.msra.mxu0 0.0
        %2564 = vmatprep.subr.mxu0 0.0
        %2565 = vmatpush1.xpose.msra.mxu0 0.0
        %2566 = vmatprep.subr.mxu0 0.0
        %2567 = vmatpush1.xpose.msra.mxu0 0.0
        %2568 = vmatprep.subr.mxu0 0.0
        %2569 = vmatpush1.xpose.msra.mxu0 0.0
        %2570 = vmatprep.subr.mxu0 0.0
        %2571 = vmatpush1.xpose.msra.mxu0 0.0
        %2572 = vmatprep.mubr.f32.mxu0 0.0
        %2573 = vmatmul.mubr.f32.gmra.mrb[0].mxu0 %v2504
        %v2574 = vpop.f32.mrb[0].mxu0
        %v2575 = vadd.f32 0.0, %v2574
        %v2576 = vpop.f32.mrb[0].mxu0
        %2577 = vdwg.mxu0
        %v2578 = vmul.f32 %v2575, 0.25
        %v2579 = vsel %vm800, %v2578, -inf
        %2580 = vmax.xlane.f32.xlu0 %v2579
        %v2581 = vpop.xlane.xlu0 %2580
        %v2582 = vsub.f32 %v2578, %v2581
        %v2583 = vmul.f32 %v2582, 1.442695
        %v2584 = vpow.pop %v2583
        %v2585 = vsel %vm800, %v2584, 0.0
        %2586 = vadd.xlane.f32.xlu0 %v2585
        %v2587 = vpop.xlane.xlu0 %2586
        %v2588 = vrcp.pop %v2587
        %v2589 = vmul.f32 %v2584, %v2588
        %2590 = vrot.lane.b32.xlu0 %v2014, 96
        %v2591 = vpop.permute.xlu0 %2590
        %v2594 = vsel %vm800, %v2589, 0
        %2596 = vmatprep.subr.mxu0 0.0
        %2597 = vmatpush1.msra.mxu0 %v2591
        %2598 = vmatprep.subr.mxu0 0.0
        %2599 = vmatpush1.msra.mxu0 0.0
        %2600 = vmatprep.subr.mxu0 0.0
        %2601 = vmatpush1.msra.mxu0 0.0
        %2602 = vmatprep.subr.mxu0 0.0
        %2603 = vmatpush1.msra.mxu0 0.0
        %2604 = vmatprep.subr.mxu0 0.0
        %2605 = vmatpush1.msra.mxu0 0.0
        %2606 = vmatprep.subr.mxu0 0.0
        %2607 = vmatpush1.msra.mxu0 0.0
        %2608 = vmatprep.subr.mxu0 0.0
        %2609 = vmatpush1.msra.mxu0 0.0
        %2610 = vmatprep.subr.mxu0 0.0
        %2611 = vmatpush1.msra.mxu0 0.0
        %2612 = vmatprep.subr.mxu0 0.0
        %2613 = vmatpush1.msra.mxu0 0.0
        %2614 = vmatprep.subr.mxu0 0.0
        %2615 = vmatpush1.msra.mxu0 0.0
        %2616 = vmatprep.subr.mxu0 0.0
        %2617 = vmatpush1.msra.mxu0 0.0
        %2618 = vmatprep.subr.mxu0 0.0
        %2619 = vmatpush1.msra.mxu0 0.0
        %2620 = vmatprep.subr.mxu0 0.0
        %2621 = vmatpush1.msra.mxu0 0.0
        %2622 = vmatprep.subr.mxu0 0.0
        %2623 = vmatpush1.msra.mxu0 0.0
        %2624 = vmatprep.subr.mxu0 0.0
        %2625 = vmatpush1.msra.mxu0 0.0
        %2626 = vmatprep.subr.mxu0 0.0
        %2627 = vmatpush1.msra.mxu0 0.0
        %2628 = vmatprep.subr.mxu0 0.0
        %2629 = vmatpush1.msra.mxu0 0.0
        %2630 = vmatprep.subr.mxu0 0.0
        %2631 = vmatpush1.msra.mxu0 0.0
        %2632 = vmatprep.subr.mxu0 0.0
        %2633 = vmatpush1.msra.mxu0 0.0
        %2634 = vmatprep.subr.mxu0 0.0
        %2635 = vmatpush1.msra.mxu0 0.0
        %2636 = vmatprep.subr.mxu0 0.0
        %2637 = vmatpush1.msra.mxu0 0.0
        %2638 = vmatprep.subr.mxu0 0.0
        %2639 = vmatpush1.msra.mxu0 0.0
        %2640 = vmatprep.subr.mxu0 0.0
        %2641 = vmatpush1.msra.mxu0 0.0
        %2642 = vmatprep.subr.mxu0 0.0
        %2643 = vmatpush1.msra.mxu0 0.0
        %2644 = vmatprep.subr.mxu0 0.0
        %2645 = vmatpush1.msra.mxu0 0.0
        %2646 = vmatprep.subr.mxu0 0.0
        %2647 = vmatpush1.msra.mxu0 0.0
        %2648 = vmatprep.subr.mxu0 0.0
        %2649 = vmatpush1.msra.mxu0 0.0
        %2650 = vmatprep.subr.mxu0 0.0
        %2651 = vmatpush1.msra.mxu0 0.0
        %2652 = vmatprep.subr.mxu0 0.0
        %2653 = vmatpush1.msra.mxu0 0.0
        %2654 = vmatprep.subr.mxu0 0.0
        %2655 = vmatpush1.msra.mxu0 0.0
        %2656 = vmatprep.subr.mxu0 0.0
        %2657 = vmatpush1.msra.mxu0 0.0
        %2658 = vmatprep.subr.mxu0 0.0
        %2659 = vmatpush1.msra.mxu0 0.0
        %2660 = vmatprep.mubr.f32.mxu0 0.0
        %2661 = vmatmul.mubr.f32.gmra.mrb[0].mxu0 %v2594
        %v2662 = vpop.f32.mrb[0].mxu0
        %v2663 = vadd.f32 0.0, %v2662
        %v2664 = vpop.f32.mrb[0].mxu0
        %2665 = vdwg.mxu0
        %v2667 = vsel %vm724, %v2663, 0
        %2669 = vmatprep.subr.mxu0 0.0
        %2670 = vmatpush1.msra.mxu0 %v2021
        %2671 = vmatprep.subr.mxu0 0.0
        %2672 = vmatpush1.msra.mxu0 %v2022
        %2673 = vmatprep.subr.mxu0 0.0
        %2674 = vmatpush1.msra.mxu0 0.0
        %2675 = vmatprep.subr.mxu0 0.0
        %2676 = vmatpush1.msra.mxu0 0.0
        %2677 = vmatprep.subr.mxu0 0.0
        %2678 = vmatpush1.msra.mxu0 0.0
        %2679 = vmatprep.subr.mxu0 0.0
        %2680 = vmatpush1.msra.mxu0 0.0
        %2681 = vmatprep.subr.mxu0 0.0
        %2682 = vmatpush1.msra.mxu0 0.0
        %2683 = vmatprep.subr.mxu0 0.0
        %2684 = vmatpush1.msra.mxu0 0.0
        %2685 = vmatprep.subr.mxu0 0.0
        %2686 = vmatpush1.msra.mxu0 0.0
        %2687 = vmatprep.subr.mxu0 0.0
        %2688 = vmatpush1.msra.mxu0 0.0
        %2689 = vmatprep.subr.mxu0 0.0
        %2690 = vmatpush1.msra.mxu0 0.0
        %2691 = vmatprep.subr.mxu0 0.0
        %2692 = vmatpush1.msra.mxu0 0.0
        %2693 = vmatprep.subr.mxu0 0.0
        %2694 = vmatpush1.msra.mxu0 0.0
        %2695 = vmatprep.subr.mxu0 0.0
        %2696 = vmatpush1.msra.mxu0 0.0
        %2697 = vmatprep.subr.mxu0 0.0
        %2698 = vmatpush1.msra.mxu0 0.0
        %2699 = vmatprep.subr.mxu0 0.0
        %2700 = vmatpush1.msra.mxu0 0.0
        %2701 = vmatprep.subr.mxu0 0.0
        %2702 = vmatpush1.msra.mxu0 0.0
        %2703 = vmatprep.subr.mxu0 0.0
        %2704 = vmatpush1.msra.mxu0 0.0
        %2705 = vmatprep.subr.mxu0 0.0
        %2706 = vmatpush1.msra.mxu0 0.0
        %2707 = vmatprep.subr.mxu0 0.0
        %2708 = vmatpush1.msra.mxu0 0.0
        %2709 = vmatprep.subr.mxu0 0.0
        %2710 = vmatpush1.msra.mxu0 0.0
        %2711 = vmatprep.subr.mxu0 0.0
        %2712 = vmatpush1.msra.mxu0 0.0
        %2713 = vmatprep.subr.mxu0 0.0
        %2714 = vmatpush1.msra.mxu0 0.0
        %2715 = vmatprep.subr.mxu0 0.0
        %2716 = vmatpush1.msra.mxu0 0.0
        %2717 = vmatprep.subr.mxu0 0.0
        %2718 = vmatpush1.msra.mxu0 0.0
        %2719 = vmatprep.subr.mxu0 0.0
        %2720 = vmatpush1.msra.mxu0 0.0
        %2721 = vmatprep.subr.mxu0 0.0
        %2722 = vmatpush1.msra.mxu0 0.0
        %2723 = vmatprep.subr.mxu0 0.0
        %2724 = vmatpush1.msra.mxu0 0.0
        %2725 = vmatprep.subr.mxu0 0.0
        %2726 = vmatpush1.msra.mxu0 0.0
        %2727 = vmatprep.subr.mxu0 0.0
        %2728 = vmatpush1.msra.mxu0 0.0
        %2729 = vmatprep.subr.mxu0 0.0
        %2730 = vmatpush1.msra.mxu0 0.0
        %2731 = vmatprep.subr.mxu0 0.0
        %2732 = vmatpush1.msra.mxu0 0.0
        %2733 = vmatprep.mubr.f32.mxu0 0.0
        %2734 = vmatmul.mubr.f32.gmra.mrb[0].mxu0 %v2667
        %v2735 = vpop.f32.mrb[0].mxu0
        %v2736 = vadd.f32 0.0, %v2735
        %v2737 = vpop.f32.mrb[0].mxu0
        %2738 = vdwg.mxu0
        %v2739 = vadd.f32 %v2497, %v2736
        %2740 = vrot.lane.b32.xlu0 %v2012, 80
        %v2741 = vpop.permute.xlu0 %2740
        %2742 = vrot.lane.b32.xlu0 %v2012, 16
        %v2743 = vpop.permute.xlu0 %2742
        %v2744 = vsel %vm724, %v2741, 0
        %v2746 = vsel %vm724, %v2743, 0
        %2748 = vmatprep.subr.mxu0 0.0
        %2749 = vmatpush1.xpose.msra.mxu0 %v2746
        %2750 = vmatprep.subr.mxu0 0.0
        %2751 = vmatpush1.xpose.msra.mxu0 0.0
        %2752 = vmatprep.subr.mxu0 0.0
        %2753 = vmatpush1.xpose.msra.mxu0 0.0
        %2754 = vmatprep.subr.mxu0 0.0
        %2755 = vmatpush1.xpose.msra.mxu0 0.0
        %2756 = vmatprep.subr.mxu0 0.0
        %2757 = vmatpush1.xpose.msra.mxu0 0.0
        %2758 = vmatprep.subr.mxu0 0.0
        %2759 = vmatpush1.xpose.msra.mxu0 0.0
        %2760 = vmatprep.subr.mxu0 0.0
        %2761 = vmatpush1.xpose.msra.mxu0 0.0
        %2762 = vmatprep.subr.mxu0 0.0
        %2763 = vmatpush1.xpose.msra.mxu0 0.0
        %2764 = vmatprep.subr.mxu0 0.0
        %2765 = vmatpush1.xpose.msra.mxu0 0.0
        %2766 = vmatprep.subr.mxu0 0.0
        %2767 = vmatpush1.xpose.msra.mxu0 0.0
        %2768 = vmatprep.subr.mxu0 0.0
        %2769 = vmatpush1.xpose.msra.mxu0 0.0
        %2770 = vmatprep.subr.mxu0 0.0
        %2771 = vmatpush1.xpose.msra.mxu0 0.0
        %2772 = vmatprep.subr.mxu0 0.0
        %2773 = vmatpush1.xpose.msra.mxu0 0.0
        %2774 = vmatprep.subr.mxu0 0.0
        %2775 = vmatpush1.xpose.msra.mxu0 0.0
        %2776 = vmatprep.subr.mxu0 0.0
        %2777 = vmatpush1.xpose.msra.mxu0 0.0
        %2778 = vmatprep.subr.mxu0 0.0
        %2779 = vmatpush1.xpose.msra.mxu0 0.0
        %2780 = vmatprep.subr.mxu0 0.0
        %2781 = vmatpush1.xpose.msra.mxu0 0.0
        %2782 = vmatprep.subr.mxu0 0.0
        %2783 = vmatpush1.xpose.msra.mxu0 0.0
        %2784 = vmatprep.subr.mxu0 0.0
        %2785 = vmatpush1.xpose.msra.mxu0 0.0
        %2786 = vmatprep.subr.mxu0 0.0
        %2787 = vmatpush1.xpose.msra.mxu0 0.0
        %2788 = vmatprep.subr.mxu0 0.0
        %2789 = vmatpush1.xpose.msra.mxu0 0.0
        %2790 = vmatprep.subr.mxu0 0.0
        %2791 = vmatpush1.xpose.msra.mxu0 0.0
        %2792 = vmatprep.subr.mxu0 0.0
        %2793 = vmatpush1.xpose.msra.mxu0 0.0
        %2794 = vmatprep.subr.mxu0 0.0
        %2795 = vmatpush1.xpose.msra.mxu0 0.0
        %2796 = vmatprep.subr.mxu0 0.0
        %2797 = vmatpush1.xpose.msra.mxu0 0.0
        %2798 = vmatprep.subr.mxu0 0.0
        %2799 = vmatpush1.xpose.msra.mxu0 0.0
        %2800 = vmatprep.subr.mxu0 0.0
        %2801 = vmatpush1.xpose.msra.mxu0 0.0
        %2802 = vmatprep.subr.mxu0 0.0
        %2803 = vmatpush1.xpose.msra.mxu0 0.0
        %2804 = vmatprep.subr.mxu0 0.0
        %2805 = vmatpush1.xpose.msra.mxu0 0.0
        %2806 = vmatprep.subr.mxu0 0.0
        %2807 = vmatpush1.xpose.msra.mxu0 0.0
        %2808 = vmatprep.subr.mxu0 0.0
        %2809 = vmatpush1.xpose.msra.mxu0 0.0
        %2810 = vmatprep.subr.mxu0 0.0
        %2811 = vmatpush1.xpose.msra.mxu0 0.0
        %2812 = vmatprep.mubr.f32.mxu0 0.0
        %2813 = vmatmul.mubr.f32.gmra.mrb[0].mxu0 %v2744
        %v2814 = vpop.f32.mrb[0].mxu0
        %v2815 = vadd.f32 0.0, %v2814
        %v2816 = vpop.f32.mrb[0].mxu0
        %2817 = vdwg.mxu0
        %v2818 = vmul.f32 %v2815, 0.25
        %v2819 = vsel %vm800, %v2818, -inf
        %2820 = vmax.xlane.f32.xlu0 %v2819
        %v2821 = vpop.xlane.xlu0 %2820
        %v2822 = vsub.f32 %v2818, %v2821
        %v2823 = vmul.f32 %v2822, 1.442695
        %v2824 = vpow.pop %v2823
        %v2825 = vsel %vm800, %v2824, 0.0
        %2826 = vadd.xlane.f32.xlu0 %v2825
        %v2827 = vpop.xlane.xlu0 %2826
        %v2828 = vrcp.pop %v2827
        %v2829 = vmul.f32 %v2824, %v2828
        %2830 = vrot.lane.b32.xlu0 %v2014, 80
        %v2831 = vpop.permute.xlu0 %2830
        %v2834 = vsel %vm800, %v2829, 0
        %2836 = vmatprep.subr.mxu0 0.0
        %2837 = vmatpush1.msra.mxu0 %v2831
        %2838 = vmatprep.subr.mxu0 0.0
        %2839 = vmatpush1.msra.mxu0 0.0
        %2840 = vmatprep.subr.mxu0 0.0
        %2841 = vmatpush1.msra.mxu0 0.0
        %2842 = vmatprep.subr.mxu0 0.0
        %2843 = vmatpush1.msra.mxu0 0.0
        %2844 = vmatprep.subr.mxu0 0.0
        %2845 = vmatpush1.msra.mxu0 0.0
        %2846 = vmatprep.subr.mxu0 0.0
        %2847 = vmatpush1.msra.mxu0 0.0
        %2848 = vmatprep.subr.mxu0 0.0
        %2849 = vmatpush1.msra.mxu0 0.0
        %2850 = vmatprep.subr.mxu0 0.0
        %2851 = vmatpush1.msra.mxu0 0.0
        %2852 = vmatprep.subr.mxu0 0.0
        %2853 = vmatpush1.msra.mxu0 0.0
        %2854 = vmatprep.subr.mxu0 0.0
        %2855 = vmatpush1.msra.mxu0 0.0
        %2856 = vmatprep.subr.mxu0 0.0
        %2857 = vmatpush1.msra.mxu0 0.0
        %2858 = vmatprep.subr.mxu0 0.0
        %2859 = vmatpush1.msra.mxu0 0.0
        %2860 = vmatprep.subr.mxu0 0.0
        %2861 = vmatpush1.msra.mxu0 0.0
        %2862 = vmatprep.subr.mxu0 0.0
        %2863 = vmatpush1.msra.mxu0 0.0
        %2864 = vmatprep.subr.mxu0 0.0
        %2865 = vmatpush1.msra.mxu0 0.0
        %2866 = vmatprep.subr.mxu0 0.0
        %2867 = vmatpush1.msra.mxu0 0.0
        %2868 = vmatprep.subr.mxu0 0.0
        %2869 = vmatpush1.msra.mxu0 0.0
        %2870 = vmatprep.subr.mxu0 0.0
        %2871 = vmatpush1.msra.mxu0 0.0
        %2872 = vmatprep.subr.mxu0 0.0
        %2873 = vmatpush1.msra.mxu0 0.0
        %2874 = vmatprep.subr.mxu0 0.0
        %2875 = vmatpush1.msra.mxu0 0.0
        %2876 = vmatprep.subr.mxu0 0.0
        %2877 = vmatpush1.msra.mxu0 0.0
        %2878 = vmatprep.subr.mxu0 0.0
        %2879 = vmatpush1.msra.mxu0 0.0
        %2880 = vmatprep.subr.mxu0 0.0
        %2881 = vmatpush1.msra.mxu0 0.0
        %2882 = vmatprep.subr.mxu0 0.0
        %2883 = vmatpush1.msra.mxu0 0.0
        %2884 = vmatprep.subr.mxu0 0.0
        %2885 = vmatpush1.msra.mxu0 0.0
        %2886 = vmatprep.subr.mxu0 0.0
        %2887 = vmatpush1.msra.mxu0 0.0
        %2888 = vmatprep.subr.mxu0 0.0
        %2889 = vmatpush1.msra.mxu0 0.0
        %2890 = vmatprep.subr.mxu0 0.0
        %2891 = vmatpush1.msra.mxu0 0.0
        %2892 = vmatprep.subr.mxu0 0.0
        %2893 = vmatpush1.msra.mxu0 0.0
        %2894 = vmatprep.subr.mxu0 0.0
        %2895 = vmatpush1.msra.mxu0 0.0
        %2896 = vmatprep.subr.mxu0 0.0
        %2897 = vmatpush1.msra.mxu0 0.0
        %2898 = vmatprep.subr.mxu0 0.0
        %2899 = vmatpush1.msra.mxu0 0.0
        %2900 = vmatprep.mubr.f32.mxu0 0.0
        %2901 = vmatmul.mubr.f32.gmra.mrb[0].mxu0 %v2834
        %v2902 = vpop.f32.mrb[0].mxu0
        %v2903 = vadd.f32 0.0, %v2902
        %v2904 = vpop.f32.mrb[0].mxu0
        %2905 = vdwg.mxu0
        %v2907 = vsel %vm724, %v2903, 0
        %2909 = vmatprep.subr.mxu0 0.0
        %2910 = vmatpush1.msra.mxu0 %v2023
        %2911 = vmatprep.subr.mxu0 0.0
        %2912 = vmatpush1.msra.mxu0 %v2024
        %2913 = vmatprep.subr.mxu0 0.0
        %2914 = vmatpush1.msra.mxu0 0.0
        %2915 = vmatprep.subr.mxu0 0.0
        %2916 = vmatpush1.msra.mxu0 0.0
        %2917 = vmatprep.subr.mxu0 0.0
        %2918 = vmatpush1.msra.mxu0 0.0
        %2919 = vmatprep.subr.mxu0 0.0
        %2920 = vmatpush1.msra.mxu0 0.0
        %2921 = vmatprep.subr.mxu0 0.0
        %2922 = vmatpush1.msra.mxu0 0.0
        %2923 = vmatprep.subr.mxu0 0.0
        %2924 = vmatpush1.msra.mxu0 0.0
        %2925 = vmatprep.subr.mxu0 0.0
        %2926 = vmatpush1.msra.mxu0 0.0
        %2927 = vmatprep.subr.mxu0 0.0
        %2928 = vmatpush1.msra.mxu0 0.0
        %2929 = vmatprep.subr.mxu0 0.0
        %2930 = vmatpush1.msra.mxu0 0.0
        %2931 = vmatprep.subr.mxu0 0.0
        %2932 = vmatpush1.msra.mxu0 0.0
        %2933 = vmatprep.subr.mxu0 0.0
        %2934 = vmatpush1.msra.mxu0 0.0
        %2935 = vmatprep.subr.mxu0 0.0
        %2936 = vmatpush1.msra.mxu0 0.0
        %2937 = vmatprep.subr.mxu0 0.0
        %2938 = vmatpush1.msra.mxu0 0.0
        %2939 = vmatprep.subr.mxu0 0.0
        %2940 = vmatpush1.msra.mxu0 0.0
        %2941 = vmatprep.subr.mxu0 0.0
        %2942 = vmatpush1.msra.mxu0 0.0
        %2943 = vmatprep.subr.mxu0 0.0
        %2944 = vmatpush1.msra.mxu0 0.0
        %2945 = vmatprep.subr.mxu0 0.0
        %2946 = vmatpush1.msra.mxu0 0.0
        %2947 = vmatprep.subr.mxu0 0.0
        %2948 = vmatpush1.msra.mxu0 0.0
        %2949 = vmatprep.subr.mxu0 0.0
        %2950 = vmatpush1.msra.mxu0 0.0
        %2951 = vmatprep.subr.mxu0 0.0
        %2952 = vmatpush1.msra.mxu0 0.0
        %2953 = vmatprep.subr.mxu0 0.0
        %2954 = vmatpush1.msra.mxu0 0.0
        %2955 = vmatprep.subr.mxu0 0.0
        %2956 = vmatpush1.msra.mxu0 0.0
        %2957 = vmatprep.subr.mxu0 0.0
        %2958 = vmatpush1.msra.mxu0 0.0
        %2959 = vmatprep.subr.mxu0 0.0
        %2960 = vmatpush1.msra.mxu0 0.0
        %2961 = vmatprep.subr.mxu0 0.0
        %2962 = vmatpush1.msra.mxu0 0.0
        %2963 = vmatprep.subr.mxu0 0.0
        %2964 = vmatpush1.msra.mxu0 0.0
        %2965 = vmatprep.subr.mxu0 0.0
        %2966 = vmatpush1.msra.mxu0 0.0
        %2967 = vmatprep.subr.mxu0 0.0
        %2968 = vmatpush1.msra.mxu0 0.0
        %2969 = vmatprep.subr.mxu0 0.0
        %2970 = vmatpush1.msra.mxu0 0.0
        %2971 = vmatprep.subr.mxu0 0.0
        %2972 = vmatpush1.msra.mxu0 0.0
        %2973 = vmatprep.mubr.f32.mxu0 0.0
        %2974 = vmatmul.mubr.f32.gmra.mrb[0].mxu0 %v2907
        %v2975 = vpop.f32.mrb[0].mxu0
        %v2976 = vadd.f32 0.0, %v2975
        %v2977 = vpop.f32.mrb[0].mxu0
        %2978 = vdwg.mxu0
        %v2979 = vadd.f32 %v2739, %v2976
        %v2980 = vadd.f32 %v1907, %v2979
        %v2981 = vld [vmem:[%s7 + $0x1] sm:$0x1]
        %v2982 = vlaneseq
        %v2983 = vshrl.u32 %v2982, 7
        %v2984 = vsub.s32 0, %v2983
        %v2985 = vrot.slane %v2981, %v2984
        %v2986 = vadd.f32 %v2980, %v2985
        %v2987 = vld [vmem:[%s8 + $0x1] sm:$0x1]
        %v2988 = vld [vmem:[%s9 + $0x1] sm:$0x1]
        %v2989 = vsel %vm606, %v2986, 0.0
        %2990 = vadd.xlane.f32.xlu0 %v2989
        %v2991 = vpop.xlane.xlu0 %2990
        %v2992 = vmul.f32 %v2991, %v610
        %v2993 = vsub.f32 %v2986, %v2992
        %v2994 = vmul.f32 %v2993, %v2993
        %v2995 = vsel %vm606, %v2994, 0.0
        %2996 = vadd.xlane.f32.xlu0 %v2995
        %v2997 = vpop.xlane.xlu0 %2996
        %v2998 = vmul.f32 %v2997, %v610
        %v2999 = vadd.f32 %v2998, 1e-05
        %v3000 = vrsqrt.pop %v2999
        %v3001 = vmul.f32 %v2993, %v3000
        %v3002 = vlaneseq
        %v3003 = vshrl.u32 %v3002, 7
        %v3004 = vsub.s32 0, %v3003
        %v3005 = vrot.slane %v2987, %v3004
        %v3006 = vmul.f32 %v3001, %v3005
        %v3007 = vlaneseq
        %v3008 = vshrl.u32 %v3007, 7
        %v3009 = vsub.s32 0, %v3008
        %v3010 = vrot.slane %v2988, %v3009
        %v3011 = vadd.f32 %v3006, %v3010
        %s3012 = scalar_lea.vmem %s10, 32
        %v3013 = vld [vmem:[%s3012] sm:$0xff]
        %v3014 = vld [vmem:[%s3012 + $0x8] sm:$0xff]
        %v3015 = vld [vmem:[%s3012 + $0x10] sm:$0xff]
        %v3016 = vld [vmem:[%s3012 + $0x18] sm:$0xff]
        %v3017 = vld [vmem:[%s11 + $0x1] sm:$0x1]
        %v3018 = vlaneseq
        %v3019 = vshrl.u32 %v3018, 7
        %v3020 = vsub.s32 0, %v3019
        %v3021 = vrot.slane %v3017, %v3020
        %v3023 = vsel %vm606, %v3011, 0
        %3025 = vmatprep.subr.mxu0 0.0
        %3026 = vmatpush1.msra.mxu0 %v3013
        %3027 = vmatprep.subr.mxu0 0.0
        %3028 = vmatpush1.msra.mxu0 %v3014
        %3029 = vmatprep.subr.mxu0 0.0
        %3030 = vmatpush1.msra.mxu0 %v3015
        %3031 = vmatprep.subr.mxu0 0.0
        %3032 = vmatpush1.msra.mxu0 %v3016
        %3033 = vmatprep.subr.mxu0 0.0
        %3034 = vmatpush1.msra.mxu0 0.0
        %3035 = vmatprep.subr.mxu0 0.0
        %3036 = vmatpush1.msra.mxu0 0.0
        %3037 = vmatprep.subr.mxu0 0.0
        %3038 = vmatpush1.msra.mxu0 0.0
        %3039 = vmatprep.subr.mxu0 0.0
        %3040 = vmatpush1.msra.mxu0 0.0
        %3041 = vmatprep.subr.mxu0 0.0
        %3042 = vmatpush1.msra.mxu0 0.0
        %3043 = vmatprep.subr.mxu0 0.0
        %3044 = vmatpush1.msra.mxu0 0.0
        %3045 = vmatprep.subr.mxu0 0.0
        %3046 = vmatpush1.msra.mxu0 0.0
        %3047 = vmatprep.subr.mxu0 0.0
        %3048 = vmatpush1.msra.mxu0 0.0
        %3049 = vmatprep.subr.mxu0 0.0
        %3050 = vmatpush1.msra.mxu0 0.0
        %3051 = vmatprep.subr.mxu0 0.0
        %3052 = vmatpush1.msra.mxu0 0.0
        %3053 = vmatprep.subr.mxu0 0.0
        %3054 = vmatpush1.msra.mxu0 0.0
        %3055 = vmatprep.subr.mxu0 0.0
        %3056 = vmatpush1.msra.mxu0 0.0
        %3057 = vmatprep.subr.mxu0 0.0
        %3058 = vmatpush1.msra.mxu0 0.0
        %3059 = vmatprep.subr.mxu0 0.0
        %3060 = vmatpush1.msra.mxu0 0.0
        %3061 = vmatprep.subr.mxu0 0.0
        %3062 = vmatpush1.msra.mxu0 0.0
        %3063 = vmatprep.subr.mxu0 0.0
        %3064 = vmatpush1.msra.mxu0 0.0
        %3065 = vmatprep.subr.mxu0 0.0
        %3066 = vmatpush1.msra.mxu0 0.0
        %3067 = vmatprep.subr.mxu0 0.0
        %3068 = vmatpush1.msra.mxu0 0.0
        %3069 = vmatprep.subr.mxu0 0.0
        %3070 = vmatpush1.msra.mxu0 0.0
        %3071 = vmatprep.subr.mxu0 0.0
        %3072 = vmatpush1.msra.mxu0 0.0
        %3073 = vmatprep.subr.mxu0 0.0
        %3074 = vmatpush1.msra.mxu0 0.0
        %3075 = vmatprep.subr.mxu0 0.0
        %3076 = vmatpush1.msra.mxu0 0.0
        %3077 = vmatprep.subr.mxu0 0.0
        %3078 = vmatpush1.msra.mxu0 0.0
        %3079 = vmatprep.subr.mxu0 0.0
        %3080 = vmatpush1.msra.mxu0 0.0
        %3081 = vmatprep.subr.mxu0 0.0
        %3082 = vmatpush1.msra.mxu0 0.0
        %3083 = vmatprep.subr.mxu0 0.0
        %3084 = vmatpush1.msra.mxu0 0.0
        %3085 = vmatprep.subr.mxu0 0.0
        %3086 = vmatpush1.msra.mxu0 0.0
        %3087 = vmatprep.subr.mxu0 0.0
        %3088 = vmatpush1.msra.mxu0 0.0
        %3089 = vmatprep.mubr.f32.mxu0 0.0
        %3090 = vmatmul.mubr.f32.gmra.mrb[0].mxu0 %v3023
        %v3091 = vpop.f32.mrb[0].mxu0
        %v3092 = vadd.f32 %v3021, %v3091
        %v3093 = vpop.f32.mrb[0].mxu0
        %3094 = vdwg.mxu0
        %v3095 = vmul.f32 %v3092, 0.5
        %v3096 = vmul.f32 %v3092, 0.70710677
        %v3097 = vand.u32 2147483647, %v3096
        %v3098 = vmul.f32 %v3097, 0.3275911
        %v3099 = vadd.f32 %v3098, 1.0
        %v3100 = vrcp.pop %v3099
        %v3101 = vmul.f32 1.0, %v3100
        %v3102 = vmul.f32 %v3101, 1.0614054
        %v3103 = vsub.f32 %v3102, 1.4531521
        %v3104 = vmul.f32 %v3103, %v3101
        %v3105 = vadd.f32 %v3104, 1.4214138
        %v3106 = vmul.f32 %v3105, %v3101
        %v3107 = vsub.f32 %v3106, 0.28449672
        %v3108 = vmul.f32 %v3107, %v3101
        %v3109 = vadd.f32 %v3108, 0.2548296
        %v3110 = vmul.f32 %v3109, %v3101
        %v3111 = vsub.f32 0.0, %v3096
        %v3112 = vmul.f32 %v3111, %v3096
        %v3113 = vmul.f32 %v3112, 1.442695
        %v3114 = vpow.pop %v3113
        %v3115 = vmul.f32 %v3110, %v3114
        %v3116 = vsub.f32 1.0, %v3115
        %vm3117 = vcmp.ge.f32.partialorder %v3096, 0.0
        %v3118 = vsub.f32 0.0, %v3116
        %v3119 = vsel %vm3117, %v3116, %v3118
        %v3120 = vadd.f32 %v3119, 1.0
        %v3121 = vmul.f32 %v3095, %v3120
        %s3122 = scalar_lea.vmem %s12, 64
        %v3123 = vld [vmem:[%s3122] sm:$0xff]
        %v3124 = vld [vmem:[%s3122 + $0x8] sm:$0xff]
        %v3125 = vld [vmem:[%s3122 + $0x10] sm:$0xff]
        %v3126 = vld [vmem:[%s3122 + $0x18] sm:$0xff]
        %v3127 = vld [vmem:[%s3122 + $0x20] sm:$0xff]
        %v3128 = vld [vmem:[%s3122 + $0x28] sm:$0xff]
        %v3129 = vld [vmem:[%s3122 + $0x30] sm:$0xff]
        %v3130 = vld [vmem:[%s3122 + $0x38] sm:$0xff]
        %v3132 = vsel %vm1827, %v3121, 0
        %3134 = vmatprep.subr.mxu0 0.0
        %3135 = vmatpush1.msra.mxu0 %v3123
        %3136 = vmatprep.subr.mxu0 0.0
        %3137 = vmatpush1.msra.mxu0 %v3124
        %3138 = vmatprep.subr.mxu0 0.0
        %3139 = vmatpush1.msra.mxu0 %v3125
        %3140 = vmatprep.subr.mxu0 0.0
        %3141 = vmatpush1.msra.mxu0 %v3126
        %3142 = vmatprep.subr.mxu0 0.0
        %3143 = vmatpush1.msra.mxu0 %v3127
        %3144 = vmatprep.subr.mxu0 0.0
        %3145 = vmatpush1.msra.mxu0 %v3128
        %3146 = vmatprep.subr.mxu0 0.0
        %3147 = vmatpush1.msra.mxu0 %v3129
        %3148 = vmatprep.subr.mxu0 0.0
        %3149 = vmatpush1.msra.mxu0 %v3130
        %3150 = vmatprep.subr.mxu0 0.0
        %3151 = vmatpush1.msra.mxu0 0.0
        %3152 = vmatprep.subr.mxu0 0.0
        %3153 = vmatpush1.msra.mxu0 0.0
        %3154 = vmatprep.subr.mxu0 0.0
        %3155 = vmatpush1.msra.mxu0 0.0
        %3156 = vmatprep.subr.mxu0 0.0
        %3157 = vmatpush1.msra.mxu0 0.0
        %3158 = vmatprep.subr.mxu0 0.0
        %3159 = vmatpush1.msra.mxu0 0.0
        %3160 = vmatprep.subr.mxu0 0.0
        %3161 = vmatpush1.msra.mxu0 0.0
        %3162 = vmatprep.subr.mxu0 0.0
        %3163 = vmatpush1.msra.mxu0 0.0
        %3164 = vmatprep.subr.mxu0 0.0
        %3165 = vmatpush1.msra.mxu0 0.0
        %3166 = vmatprep.subr.mxu0 0.0
        %3167 = vmatpush1.msra.mxu0 0.0
        %3168 = vmatprep.subr.mxu0 0.0
        %3169 = vmatpush1.msra.mxu0 0.0
        %3170 = vmatprep.subr.mxu0 0.0
        %3171 = vmatpush1.msra.mxu0 0.0
        %3172 = vmatprep.subr.mxu0 0.0
        %3173 = vmatpush1.msra.mxu0 0.0
        %3174 = vmatprep.subr.mxu0 0.0
        %3175 = vmatpush1.msra.mxu0 0.0
        %3176 = vmatprep.subr.mxu0 0.0
        %3177 = vmatpush1.msra.mxu0 0.0
        %3178 = vmatprep.subr.mxu0 0.0
        %3179 = vmatpush1.msra.mxu0 0.0
        %3180 = vmatprep.subr.mxu0 0.0
        %3181 = vmatpush1.msra.mxu0 0.0
        %3182 = vmatprep.subr.mxu0 0.0
        %3183 = vmatpush1.msra.mxu0 0.0
        %3184 = vmatprep.subr.mxu0 0.0
        %3185 = vmatpush1.msra.mxu0 0.0
        %3186 = vmatprep.subr.mxu0 0.0
        %3187 = vmatpush1.msra.mxu0 0.0
        %3188 = vmatprep.subr.mxu0 0.0
        %3189 = vmatpush1.msra.mxu0 0.0
        %3190 = vmatprep.subr.mxu0 0.0
        %3191 = vmatpush1.msra.mxu0 0.0
        %3192 = vmatprep.subr.mxu0 0.0
        %3193 = vmatpush1.msra.mxu0 0.0
        %3194 = vmatprep.subr.mxu0 0.0
        %3195 = vmatpush1.msra.mxu0 0.0
        %3196 = vmatprep.subr.mxu0 0.0
        %3197 = vmatpush1.msra.mxu0 0.0
        %3198 = vmatprep.mubr.f32.mxu0 0.0
        %3199 = vmatmul.mubr.f32.gmra.mrb[0].mxu0 %v3132
        %v3200 = vpop.f32.mrb[0].mxu0
        %v3201 = vadd.f32 0.0, %v3200
        %v3202 = vpop.f32.mrb[0].mxu0
        %3203 = vdwg.mxu0
        %v3204 = vadd.f32 %v2986, %v3201
        %v3205 = vld [vmem:[%s13 + $0x1] sm:$0x1]
        %v3206 = vlaneseq
        %v3207 = vshrl.u32 %v3206, 7
        %v3208 = vsub.s32 0, %v3207
        %v3209 = vrot.slane %v3205, %v3208
        %v3210 = vadd.f32 %v3204, %v3209
        %v3211 = vsel %vm606, %v3210, 0.0
        %v3212 = vrot.slane %v3211, 4
        %v3213 = vadd.f32 %v3211, %v3212
        %v3214 = vrot.slane %v3213, 2
        %v3215 = vadd.f32 %v3213, %v3214
        %v3216 = vrot.slane %v3215, 1
        %v3217 = vadd.f32 %v3215, %v3216
        %v3218 = vrcp.pop 8.0
        %v3219 = vmul.f32 %v3217, %v3218
        %v3220 = vld [vmem:[%s14] sm:$0xff]
        %v3221 = vld [vmem:[%s14 + $0x8] sm:$0xff]
        %v3222 = vld [vmem:[%s14 + $0x10] sm:$0xff]
        %v3223 = vld [vmem:[%s14 + $0x18] sm:$0xff]
        %v3224 = vld [vmem:[%s15] sm:$0x1]
        %v3226 = vsel %vm606, %v3219, 0
        %3228 = vmatprep.subr.mxu0 0.0
        %3229 = vmatpush1.msra.mxu0 %v3220
        %3230 = vmatprep.subr.mxu0 0.0
        %3231 = vmatpush1.msra.mxu0 %v3221
        %3232 = vmatprep.subr.mxu0 0.0
        %3233 = vmatpush1.msra.mxu0 %v3222
        %3234 = vmatprep.subr.mxu0 0.0
        %3235 = vmatpush1.msra.mxu0 %v3223
        %3236 = vmatprep.subr.mxu0 0.0
        %3237 = vmatpush1.msra.mxu0 0.0
        %3238 = vmatprep.subr.mxu0 0.0
        %3239 = vmatpush1.msra.mxu0 0.0
        %3240 = vmatprep.subr.mxu0 0.0
        %3241 = vmatpush1.msra.mxu0 0.0
        %3242 = vmatprep.subr.mxu0 0.0
        %3243 = vmatpush1.msra.mxu0 0.0
        %3244 = vmatprep.subr.mxu0 0.0
        %3245 = vmatpush1.msra.mxu0 0.0
        %3246 = vmatprep.subr.mxu0 0.0
        %3247 = vmatpush1.msra.mxu0 0.0
        %3248 = vmatprep.subr.mxu0 0.0
        %3249 = vmatpush1.msra.mxu0 0.0
        %3250 = vmatprep.subr.mxu0 0.0
        %3251 = vmatpush1.msra.mxu0 0.0
        %3252 = vmatprep.subr.mxu0 0.0
        %3253 = vmatpush1.msra.mxu0 0.0
        %3254 = vmatprep.subr.mxu0 0.0
        %3255 = vmatpush1.msra.mxu0 0.0
        %3256 = vmatprep.subr.mxu0 0.0
        %3257 = vmatpush1.msra.mxu0 0.0
        %3258 = vmatprep.subr.mxu0 0.0
        %3259 = vmatpush1.msra.mxu0 0.0
        %3260 = vmatprep.subr.mxu0 0.0
        %3261 = vmatpush1.msra.mxu0 0.0
        %3262 = vmatprep.subr.mxu0 0.0
        %3263 = vmatpush1.msra.mxu0 0.0
        %3264 = vmatprep.subr.mxu0 0.0
        %3265 = vmatpush1.msra.mxu0 0.0
        %3266 = vmatprep.subr.mxu0 0.0
        %3267 = vmatpush1.msra.mxu0 0.0
        %3268 = vmatprep.subr.mxu0 0.0
        %3269 = vmatpush1.msra.mxu0 0.0
        %3270 = vmatprep.subr.mxu0 0.0
        %3271 = vmatpush1.msra.mxu0 0.0
        %3272 = vmatprep.subr.mxu0 0.0
        %3273 = vmatpush1.msra.mxu0 0.0
        %3274 = vmatprep.subr.mxu0 0.0
        %3275 = vmatpush1.msra.mxu0 0.0
        %3276 = vmatprep.subr.mxu0 0.0
        %3277 = vmatpush1.msra.mxu0 0.0
        %3278 = vmatprep.subr.mxu0 0.0
        %3279 = vmatpush1.msra.mxu0 0.0
        %3280 = vmatprep.subr.mxu0 0.0
        %3281 = vmatpush1.msra.mxu0 0.0
        %3282 = vmatprep.subr.mxu0 0.0
        %3283 = vmatpush1.msra.mxu0 0.0
        %3284 = vmatprep.subr.mxu0 0.0
        %3285 = vmatpush1.msra.mxu0 0.0
        %3286 = vmatprep.subr.mxu0 0.0
        %3287 = vmatpush1.msra.mxu0 0.0
        %3288 = vmatprep.subr.mxu0 0.0
        %3289 = vmatpush1.msra.mxu0 0.0
        %3290 = vmatprep.subr.mxu0 0.0
        %3291 = vmatpush1.msra.mxu0 0.0
        %3292 = vmatprep.mubr.f32.mxu0 0.0
        %3293 = vmatmul.mubr.f32.gmra.mrb[0].mxu0 %v3226
        %v3294 = vpop.f32.mrb[0].mxu0
        %v3295 = vadd.f32 %v3224, %v3294
        %v3296 = vpop.f32.mrb[0].mxu0
        %3297 = vdwg.mxu0
        %vm3298 = vcmask 8192
        %3299 = vst.msk [vmem:[%s511] sm:$0x1] %vm3298, %v3295
        %s3300 = sand.u32 %s379, 1
        %s3301 = scalar_lea.sflag [#allocation3], %s3300
        %s3302 = sand.u32 %s379, 1
        %s3303 = scalar_lea.vmem [#allocation2], %s3302
        // Predicated region
        $region85: #{mymodel_forward.1} parent=83 // pred_check
          %p3304 = pneg %p389
        $region86: #{mymodel_forward.1} parent=83 // pred_check_branch
          %3306 = sbr.rel (%p3304) target = $region88
        $region87: #{mymodel_forward.1} parent=83 // pred_region
          %s3308 = ssub.s32 16, 16
          %3309 = vsyncadd %s3301, %s3308
          %s3310 = smul.addr %s30, 16
          %s3311 = scalar_lea.hbm %s16, %s3310
          %s3313 = sshll.u32 %s3303, 4
          %s3314 = int_to_ptr.vmem [resolvable:$true] %s3313
          %3316 = dma.vmem_to_hbm [thread:$0]  %s3314, 16, %s3311, %s3301
        $region88: #{mymodel_forward.1} parent=83 // pred_fallthru
          _
      $region84: #{mymodel_forward.1} parent=5 // pred_fallthru
        _
      %p3317 = scmp.le.s32.totalorder 2, %s25
      // Predicated region
      $region89: #{mymodel_forward.1} parent=5 // pred_check
        %p3318 = pneg %p3317
      $region90: #{mymodel_forward.1} parent=5 // pred_check_branch
        %3320 = sbr.rel (%p3318) target = $region92
      $region91: #{mymodel_forward.1} parent=5 // pred_region
        %s3321 = ssub.s32 %s25, 2
        // Predicated region
        $region93: #{mymodel_forward.1} parent=91 // pred_check
          %p3322 = pneg %p395
        $region94: #{mymodel_forward.1} parent=91 // pred_check_branch
          %3324 = sbr.rel (%p3322) target = $region96
        $region95: #{mymodel_forward.1} parent=91 // pred_region
          %s3325 = sand.u32 %s380, 1
          %s3326 = scalar_lea.sflag [#allocation3], %s3325
          %s3327 = sand.u32 %s380, 1
          %s3328 = scalar_lea.vmem [#allocation2], %s3327
          %3329 = dma.done %s3326, 16
        $region96: #{mymodel_forward.1} parent=91 // pred_fallthru
          _
      $region92: #{mymodel_forward.1} parent=5 // pred_fallthru
        _
    $region6: #{mymodel_forward.1} parent=1 // loop_footer
      %s29 = sadd.s32 1, %s25
    $region7: #{mymodel_forward.1} parent=1 // loop_footer_branch
      %24 = sbr.rel target = $region3
    $region8: #{mymodel_forward.1} parent=1 // loop_exit
      _
    %3330 = vsyncpa [#allocation3], 1
    %s3331 = scalar_lea.sflag [#allocation3], 1
    %3332 = vsyncpa %s3331, 1

</llo_original>
